<compile_context>
chip_gen: v7x
topology: tpu7x:2x2x1
jax: 0.10.0
libtpu: 0.0.40
codegen_flags: <defaults>
</compile_context>

<pallas_src>
import functools
import math

import jax
import jax.numpy as jnp
from jax.experimental import pallas as pl
from jax.experimental.pallas import tpu as pltpu


# ---------------------------------------------------------------------------
# Config
# ---------------------------------------------------------------------------
CONFIG = dict(
    d_hidden=512,
    brnn=True,
    use_addn=True,
    addn_dim=10,
    num_classes=3,
    down_projection=False,   # shape-inconsistent in the source module; kept off
    init_scalar=0.1,         # unused by xavier_uniform, kept for parity
)

ADDN_PAD = 128    # zero-pad the additional-feature dim (10) to a full lane width
LOGIT_PAD = 128   # lane-dense classifier output (num_classes=3 padded to 128)


# ---------------------------------------------------------------------------
# Fused Pallas kernel: attention_net + addn MLPs + classifier
# ---------------------------------------------------------------------------
def _classifier_kernel(x_ref, key_ref, y_ref,
                       w1_ref, b1_ref,            # addn_model1: Linear(addn,64)
                       w2_ref, b2_ref,            # addn_model1: Linear(64,256)
                       w3_ref, b3_ref,            # addn_model2: Linear(1024,1024)
                       w4_ref, b4_ref,            # addn_model3: Linear(256,256)
                       w5_ref, b5_ref,            # addn_model3: Linear(256,512)
                       wcs_ref, wca_ref, bc_ref,  # clf split: (1024,C),(512,C),bias
                       out_ref):
    """Whole Classifier.forward in one kernel; all weights VMEM-resident."""
    # ---- attention_net: fully batched, VPU/XLU only (tiny: B*L*D2 elems) ---
    xf = x_ref[...].astype(jnp.float32)                     # (B, L, D2)
    kf = key_ref[...].astype(jnp.float32)                   # (B, D2)
    # scores[b, l] = sum_d x[b, l, d] * key[b, d]           (lane reduce)
    scores = jnp.sum(xf * kf[:, None, :], axis=-1)          # (B, L)
    scores = scores - jnp.max(scores, axis=-1, keepdims=True)
    p = jnp.exp(scores)
    p = p * pl.reciprocal(jnp.sum(p, axis=-1, keepdims=True), approx=True)
    # weighted sum over tokens                              (sublane reduce)
    sent = jnp.sum(p[:, :, None] * xf, axis=1)              # (B, D2) f32

    # ---- fused MLP chain: bf16 weights, f32 accumulation -------------------
    def dense(act, w_ref, b_ref):
        o = jnp.dot(act.astype(jnp.bfloat16), w_ref[...],
                    preferred_element_type=jnp.float32) + b_ref[...]
        return jnp.maximum(o, 0.0)

    # addn_model2: Linear(1024,1024) + ReLU   (Dropout = eval-mode identity)
    sent = dense(sent, w3_ref, b3_ref)                      # (B, 1024)
    # addn_model1 + addn_model3 on the additional features
    u = dense(y_ref[...], w1_ref, b1_ref)                   # (B, 64)
    u = dense(u, w2_ref, b2_ref)                            # (B, 256)
    u = dense(u, w4_ref, b4_ref)                            # (B, 256)
    u = dense(u, w5_ref, b5_ref)                            # (B, 512)

    # clf on cat([sent, u], dim=1) done concat-free with a split weight;
    # output kept lane-dense (B, LOGIT_PAD) and sliced in the wrapper.
    logits = (jnp.dot(sent.astype(jnp.bfloat16), wcs_ref[...],
                      preferred_element_type=jnp.float32)
              + jnp.dot(u.astype(jnp.bfloat16), wca_ref[...],
                        preferred_element_type=jnp.float32)
              + bc_ref[...])
    out_ref[...] = logits


# ---------------------------------------------------------------------------
# Parameter init (mirrors nn.Linear + xavier_uniform; stored (din, dout), bf16)
# ---------------------------------------------------------------------------
def _init_linear_t(key, din, dout, w_dtype=jnp.bfloat16):
    kw, kb = jax.random.split(key)
    bound_w = math.sqrt(6.0 / (din + dout))            # xavier_uniform
    w = jax.random.uniform(kw, (din, dout), jnp.float32, -bound_w, bound_w)
    bound_b = 1.0 / math.sqrt(din)                     # default nn.Linear bias init
    b = jax.random.uniform(kb, (1, dout), jnp.float32, -bound_b, bound_b)
    return w.astype(w_dtype), b


def init_params(key, cfg):
    H = cfg["d_hidden"]
    D2 = 2 * H if cfg["brnn"] else H
    seq_in = D2 + (512 if cfg["use_addn"] else 0)
    C = cfg["num_classes"]
    keys = jax.random.split(key, 8)
    p = {}
    # addn_model1: Linear(addn_dim, 64) -- input (K) dim zero-padded to ADDN_PAD
    w1, b1 = _init_linear_t(keys[0], cfg["addn_dim"], 64)
    p["addn1_0"] = (jnp.pad(w1, ((0, ADDN_PAD - cfg["addn_dim"]), (0, 0))), b1)
    p["addn1_1"] = _init_linear_t(keys[1], 64, 256)
    # addn_model2: Linear(1024, 1024)
    p["addn2_0"] = _init_linear_t(keys[2], D2, D2)
    # addn_model3: Linear(256,256), Linear(256,512)
    p["addn3_0"] = _init_linear_t(keys[3], 256, 256)
    p["addn3_1"] = _init_linear_t(keys[4], 256, 512)
    # classifier Linear(seq_in, C): split into sent/addn halves, lane-padded
    wc, bc = _init_linear_t(keys[5], seq_in, C, w_dtype=jnp.float32)
    p["clf_sent"] = jnp.pad(wc[:D2].astype(jnp.bfloat16), ((0, 0), (0, LOGIT_PAD - C)))
    p["clf_addn"] = jnp.pad(wc[D2:].astype(jnp.bfloat16), ((0, 0), (0, LOGIT_PAD - C)))
    p["clf_b"] = jnp.pad(bc, ((0, 0), (0, LOGIT_PAD - C)))
    # TODO(synk): down_projection branch in the source module is shape-inconsistent
    # (surviving layer is Linear(256, d_down_proj) applied to a 1536-dim vector), so
    # it is left disabled here rather than faked.
    return p


# ---------------------------------------------------------------------------
# Forward pass: one fused pallas_call (no grid; weights VMEM-resident)
# ---------------------------------------------------------------------------
def classifier_forward(params, x, y, final_state, cfg):
    assert cfg["brnn"] and cfg["use_addn"] and not cfg["down_projection"]
    h, _c = final_state
    B, L, D2 = x.shape
    # Faithful to PyTorch: final_state[0].reshape(1, -1, 2H).squeeze(0) -> (B, 2H)
    key = h.reshape(-1, D2).astype(jnp.bfloat16)
    xb = x.astype(jnp.bfloat16)          # halve x DMA; attention math is f32 in-kernel
    # Zero-pad additional features to a lane-aligned width (matching padded W1 rows)
    yf = jnp.pad(y.astype(jnp.float32), ((0, 0), (0, ADDN_PAD - y.shape[1])))

    flat_weights = (
        params["addn1_0"] + params["addn1_1"] + params["addn2_0"]
        + params["addn3_0"] + params["addn3_1"]
        + (params["clf_sent"], params["clf_addn"], params["clf_b"])
    )
    args = (xb, key, yf, *flat_weights)

    vmem_spec = pl.BlockSpec(memory_space=pltpu.MemorySpace.VMEM)
    out = pl.pallas_call(
        _classifier_kernel,
        out_shape=jax.ShapeDtypeStruct((B, LOGIT_PAD), jnp.float32),
        in_specs=[vmem_spec] * len(args),
        out_specs=vmem_spec,
        compiler_params=pltpu.CompilerParams(vmem_limit_bytes=16 * 1024 * 1024),
    )(*args)

    return out[:, : cfg["num_classes"]]


# ---------------------------------------------------------------------------
# Main
# ---------------------------------------------------------------------------
if __name__ == "__main__":
    cfg = CONFIG
    B, L = 2, 8
    H = cfg["d_hidden"]
    D2 = 2 * H if cfg["brnn"] else H

    root = jax.random.PRNGKey(0)
    kx, ky, kh, kp = jax.random.split(root, 4)

    x = jax.random.normal(kx, (B, L, D2), jnp.float32)            # (2, 8, 1024)
    y = jax.random.normal(ky, (B, cfg["addn_dim"]), jnp.float32)  # (2, 10)
    h = jax.random.normal(kh, (2, B, H), jnp.float32)             # (2, 2, 512)
    c = jnp.zeros_like(h)
    final_state = (h, c)

    params = init_params(kp, cfg)

    fwd = jax.jit(functools.partial(classifier_forward, cfg=cfg))
    logits = fwd(params, x, y, final_state)
    jax.block_until_ready(logits)

    assert logits.shape == (B, cfg["num_classes"])
    assert bool(jnp.all(jnp.isfinite(logits)))
    print("KERNEL_OK")
</pallas_src>

<mosaic_0001>
module attributes {stable_mosaic.version = 11 : i64} {
  func.func @_classifier_kernel(%arg0: memref<2x8x1024xbf16, #tpu.memory_space<vmem>>, %arg1: memref<2x1024xbf16, #tpu.memory_space<vmem>>, %arg2: memref<2x128xf32, #tpu.memory_space<vmem>>, %arg3: memref<128x64xbf16, #tpu.memory_space<vmem>>, %arg4: memref<1x64xf32, #tpu.memory_space<vmem>>, %arg5: memref<64x256xbf16, #tpu.memory_space<vmem>>, %arg6: memref<1x256xf32, #tpu.memory_space<vmem>>, %arg7: memref<1024x1024xbf16, #tpu.memory_space<vmem>>, %arg8: memref<1x1024xf32, #tpu.memory_space<vmem>>, %arg9: memref<256x256xbf16, #tpu.memory_space<vmem>>, %arg10: memref<1x256xf32, #tpu.memory_space<vmem>>, %arg11: memref<256x512xbf16, #tpu.memory_space<vmem>>, %arg12: memref<1x512xf32, #tpu.memory_space<vmem>>, %arg13: memref<1024x128xbf16, #tpu.memory_space<vmem>>, %arg14: memref<512x128xbf16, #tpu.memory_space<vmem>>, %arg15: memref<1x128xf32, #tpu.memory_space<vmem>>, %arg16: memref<2x128xf32, #tpu.memory_space<vmem>>) attributes {dimension_semantics = [], scalar_prefetch = 0 : i64, scratch_operands = 0 : i64, tpu.core_type = #tpu.core_type<tc>} {
    %c0 = arith.constant 0 : index
    %c0_0 = arith.constant 0 : index
    %c0_1 = arith.constant 0 : index
    %0 = vector.load %arg0[%c0, %c0_0, %c0_1] : memref<2x8x1024xbf16, #tpu.memory_space<vmem>>, vector<2x8x1024xbf16>
    %1 = arith.extf %0 : vector<2x8x1024xbf16> to vector<2x8x1024xf32>
    %c0_2 = arith.constant 0 : index
    %c0_3 = arith.constant 0 : index
    %2 = vector.load %arg1[%c0_2, %c0_3] : memref<2x1024xbf16, #tpu.memory_space<vmem>>, vector<2x1024xbf16>
    %3 = arith.extf %2 : vector<2x1024xbf16> to vector<2x1024xf32>
    %4 = vector.shape_cast %3 : vector<2x1024xf32> to vector<2x1x1024xf32>
    %5 = vector.broadcast %4 : vector<2x1x1024xf32> to vector<2x8x1024xf32>
    %6 = arith.mulf %1, %5 : vector<2x8x1024xf32>
    %cst = arith.constant dense<0.000000e+00> : vector<2x8xf32>
    %7 = vector.multi_reduction <add>, %6, %cst [2] : vector<2x8x1024xf32> to vector<2x8xf32>
    %cst_4 = arith.constant dense<0xFF800000> : vector<2xf32>
    %8 = vector.multi_reduction <maximumf>, %7, %cst_4 [1] : vector<2x8xf32> to vector<2xf32>
    %9 = vector.shape_cast %8 : vector<2xf32> to vector<2x1xf32>
    %10 = vector.broadcast %9 : vector<2x1xf32> to vector<2x8xf32>
    %11 = arith.subf %7, %10 : vector<2x8xf32>
    %12 = math.exp %11 : vector<2x8xf32>
    %cst_5 = arith.constant dense<0.000000e+00> : vector<2xf32>
    %13 = vector.multi_reduction <add>, %12, %cst_5 [1] : vector<2x8xf32> to vector<2xf32>
    %14 = vector.shape_cast %13 : vector<2xf32> to vector<2x1xf32>
    %15 = tpu.reciprocal %14 {approx = true} : vector<2x1xf32> -> vector<2x1xf32>
    %16 = vector.broadcast %15 : vector<2x1xf32> to vector<2x8xf32>
    %17 = arith.mulf %12, %16 : vector<2x8xf32>
    %18 = vector.shape_cast %17 : vector<2x8xf32> to vector<2x8x1xf32>
    %19 = vector.broadcast %18 : vector<2x8x1xf32> to vector<2x8x1024xf32>
    %20 = arith.mulf %19, %1 : vector<2x8x1024xf32>
    %cst_6 = arith.constant dense<0.000000e+00> : vector<2x1024xf32>
    %21 = vector.multi_reduction <add>, %20, %cst_6 [1] : vector<2x8x1024xf32> to vector<2x1024xf32>
    %22 = arith.truncf %21 : vector<2x1024xf32> to vector<2x1024xbf16>
    %c0_7 = arith.constant 0 : index
    %c0_8 = arith.constant 0 : index
    %23 = vector.load %arg7[%c0_7, %c0_8] : memref<1024x1024xbf16, #tpu.memory_space<vmem>>, vector<1024x1024xbf16>
    %cst_9 = arith.constant dense<0.000000e+00> : vector<2x1024xf32>
    %24 = tpu.matmul %22, %23, %cst_9 {dimension_numbers = #tpu.dot_dimension_numbers<[1], [0], [0], [1], [0, 0, 1, 1], [], []>} : vector<2x1024xbf16>, vector<1024x1024xbf16>, vector<2x1024xf32> -> vector<2x1024xf32>
    %c0_10 = arith.constant 0 : index
    %c0_11 = arith.constant 0 : index
    %25 = vector.load %arg8[%c0_10, %c0_11] : memref<1x1024xf32, #tpu.memory_space<vmem>>, vector<1x1024xf32>
    %26 = vector.broadcast %25 : vector<1x1024xf32> to vector<2x1024xf32>
    %27 = arith.addf %24, %26 : vector<2x1024xf32>
    %cst_12 = arith.constant 0.000000e+00 : f32
    %28 = vector.broadcast %cst_12 : f32 to vector<2x1024xf32>
    %29 = arith.maximumf %27, %28 : vector<2x1024xf32>
    %c0_13 = arith.constant 0 : index
    %c0_14 = arith.constant 0 : index
    %30 = vector.load %arg2[%c0_13, %c0_14] : memref<2x128xf32, #tpu.memory_space<vmem>>, vector<2x128xf32>
    %31 = arith.truncf %30 : vector<2x128xf32> to vector<2x128xbf16>
    %c0_15 = arith.constant 0 : index
    %c0_16 = arith.constant 0 : index
    %32 = vector.load %arg3[%c0_15, %c0_16] : memref<128x64xbf16, #tpu.memory_space<vmem>>, vector<128x64xbf16>
    %cst_17 = arith.constant dense<0.000000e+00> : vector<2x64xf32>
    %33 = tpu.matmul %31, %32, %cst_17 {dimension_numbers = #tpu.dot_dimension_numbers<[1], [0], [0], [1], [0, 0, 1, 1], [], []>} : vector<2x128xbf16>, vector<128x64xbf16>, vector<2x64xf32> -> vector<2x64xf32>
    %c0_18 = arith.constant 0 : index
    %c0_19 = arith.constant 0 : index
    %34 = vector.load %arg4[%c0_18, %c0_19] : memref<1x64xf32, #tpu.memory_space<vmem>>, vector<1x64xf32>
    %35 = vector.broadcast %34 : vector<1x64xf32> to vector<2x64xf32>
    %36 = arith.addf %33, %35 : vector<2x64xf32>
    %cst_20 = arith.constant 0.000000e+00 : f32
    %37 = vector.broadcast %cst_20 : f32 to vector<2x64xf32>
    %38 = arith.maximumf %36, %37 : vector<2x64xf32>
    %39 = arith.truncf %38 : vector<2x64xf32> to vector<2x64xbf16>
    %c0_21 = arith.constant 0 : index
    %c0_22 = arith.constant 0 : index
    %40 = vector.load %arg5[%c0_21, %c0_22] : memref<64x256xbf16, #tpu.memory_space<vmem>>, vector<64x256xbf16>
    %cst_23 = arith.constant dense<0.000000e+00> : vector<2x256xf32>
    %41 = tpu.matmul %39, %40, %cst_23 {dimension_numbers = #tpu.dot_dimension_numbers<[1], [0], [0], [1], [0, 0, 1, 1], [], []>} : vector<2x64xbf16>, vector<64x256xbf16>, vector<2x256xf32> -> vector<2x256xf32>
    %c0_24 = arith.constant 0 : index
    %c0_25 = arith.constant 0 : index
    %42 = vector.load %arg6[%c0_24, %c0_25] : memref<1x256xf32, #tpu.memory_space<vmem>>, vector<1x256xf32>
    %43 = vector.broadcast %42 : vector<1x256xf32> to vector<2x256xf32>
    %44 = arith.addf %41, %43 : vector<2x256xf32>
    %cst_26 = arith.constant 0.000000e+00 : f32
    %45 = vector.broadcast %cst_26 : f32 to vector<2x256xf32>
    %46 = arith.maximumf %44, %45 : vector<2x256xf32>
    %47 = arith.truncf %46 : vector<2x256xf32> to vector<2x256xbf16>
    %c0_27 = arith.constant 0 : index
    %c0_28 = arith.constant 0 : index
    %48 = vector.load %arg9[%c0_27, %c0_28] : memref<256x256xbf16, #tpu.memory_space<vmem>>, vector<256x256xbf16>
    %cst_29 = arith.constant dense<0.000000e+00> : vector<2x256xf32>
    %49 = tpu.matmul %47, %48, %cst_29 {dimension_numbers = #tpu.dot_dimension_numbers<[1], [0], [0], [1], [0, 0, 1, 1], [], []>} : vector<2x256xbf16>, vector<256x256xbf16>, vector<2x256xf32> -> vector<2x256xf32>
    %c0_30 = arith.constant 0 : index
    %c0_31 = arith.constant 0 : index
    %50 = vector.load %arg10[%c0_30, %c0_31] : memref<1x256xf32, #tpu.memory_space<vmem>>, vector<1x256xf32>
    %51 = vector.broadcast %50 : vector<1x256xf32> to vector<2x256xf32>
    %52 = arith.addf %49, %51 : vector<2x256xf32>
    %cst_32 = arith.constant 0.000000e+00 : f32
    %53 = vector.broadcast %cst_32 : f32 to vector<2x256xf32>
    %54 = arith.maximumf %52, %53 : vector<2x256xf32>
    %55 = arith.truncf %54 : vector<2x256xf32> to vector<2x256xbf16>
    %c0_33 = arith.constant 0 : index
    %c0_34 = arith.constant 0 : index
    %56 = vector.load %arg11[%c0_33, %c0_34] : memref<256x512xbf16, #tpu.memory_space<vmem>>, vector<256x512xbf16>
    %cst_35 = arith.constant dense<0.000000e+00> : vector<2x512xf32>
    %57 = tpu.matmul %55, %56, %cst_35 {dimension_numbers = #tpu.dot_dimension_numbers<[1], [0], [0], [1], [0, 0, 1, 1], [], []>} : vector<2x256xbf16>, vector<256x512xbf16>, vector<2x512xf32> -> vector<2x512xf32>
    %c0_36 = arith.constant 0 : index
    %c0_37 = arith.constant 0 : index
    %58 = vector.load %arg12[%c0_36, %c0_37] : memref<1x512xf32, #tpu.memory_space<vmem>>, vector<1x512xf32>
    %59 = vector.broadcast %58 : vector<1x512xf32> to vector<2x512xf32>
    %60 = arith.addf %57, %59 : vector<2x512xf32>
    %cst_38 = arith.constant 0.000000e+00 : f32
    %61 = vector.broadcast %cst_38 : f32 to vector<2x512xf32>
    %62 = arith.maximumf %60, %61 : vector<2x512xf32>
    %63 = arith.truncf %29 : vector<2x1024xf32> to vector<2x1024xbf16>
    %c0_39 = arith.constant 0 : index
    %c0_40 = arith.constant 0 : index
    %64 = vector.load %arg13[%c0_39, %c0_40] : memref<1024x128xbf16, #tpu.memory_space<vmem>>, vector<1024x128xbf16>
    %cst_41 = arith.constant dense<0.000000e+00> : vector<2x128xf32>
    %65 = tpu.matmul %63, %64, %cst_41 {dimension_numbers = #tpu.dot_dimension_numbers<[1], [0], [0], [1], [0, 0, 1, 1], [], []>} : vector<2x1024xbf16>, vector<1024x128xbf16>, vector<2x128xf32> -> vector<2x128xf32>
    %66 = arith.truncf %62 : vector<2x512xf32> to vector<2x512xbf16>
    %c0_42 = arith.constant 0 : index
    %c0_43 = arith.constant 0 : index
    %67 = vector.load %arg14[%c0_42, %c0_43] : memref<512x128xbf16, #tpu.memory_space<vmem>>, vector<512x128xbf16>
    %cst_44 = arith.constant dense<0.000000e+00> : vector<2x128xf32>
    %68 = tpu.matmul %66, %67, %cst_44 {dimension_numbers = #tpu.dot_dimension_numbers<[1], [0], [0], [1], [0, 0, 1, 1], [], []>} : vector<2x512xbf16>, vector<512x128xbf16>, vector<2x128xf32> -> vector<2x128xf32>
    %69 = arith.addf %65, %68 : vector<2x128xf32>
    %c0_45 = arith.constant 0 : index
    %c0_46 = arith.constant 0 : index
    %70 = vector.load %arg15[%c0_45, %c0_46] : memref<1x128xf32, #tpu.memory_space<vmem>>, vector<1x128xf32>
    %71 = vector.broadcast %70 : vector<1x128xf32> to vector<2x128xf32>
    %72 = arith.addf %69, %71 : vector<2x128xf32>
    %c0_47 = arith.constant 0 : index
    %c0_48 = arith.constant 0 : index
    %73 = vector.load %arg16[%c0_47, %c0_48] : memref<2x128xf32, #tpu.memory_space<vmem>>, vector<2x128xf32>
    tpu.vector_store %arg16[%c0_47, %c0_48], %72 {strides = array<i32>} : memref<2x128xf32, #tpu.memory_space<vmem>>, vector<2x128xf32>,
    return
  }
}

</mosaic_0001>

<llo_original>
// kernel: classifier_forward.1
$region0: #{classifier_forward.1}
  #allocation0 [shape = 'u32[]', space=smem, size = 0x4, offset = 0x4, fixed_abs, tag = 'smem constant byte address 0x4 - core index']
  #allocation1 [shape = 'u32[144,128]{1,0:T(1,128)}', space=vmem, size = 0x12000, scoped, tag = 'internal scratch']
  %s0 = inlined_call_operand.vmem [shape: bf16[2,8,1024], index: 0, kind: input, shape index: {}]
  %s1 = inlined_call_operand.vmem [shape: bf16[2,1024], index: 1, kind: input, shape index: {}]
  %s2 = inlined_call_operand.vmem [shape: f32[2,128], index: 2, kind: input, shape index: {}]
  %s3 = inlined_call_operand.vmem [shape: bf16[128,64], index: 3, kind: input, shape index: {}]
  %s4 = inlined_call_operand.hbm [shape: f32[1,64], index: 4, kind: input, shape index: {}]
  %s5 = inlined_call_operand.hbm [shape: bf16[64,256], index: 5, kind: input, shape index: {}]
  %s6 = inlined_call_operand.hbm [shape: f32[1,256], index: 6, kind: input, shape index: {}]
  %s7 = inlined_call_operand.hbm [shape: bf16[1024,1024], index: 7, kind: input, shape index: {}]
  %s8 = inlined_call_operand.hbm [shape: f32[1,1024], index: 8, kind: input, shape index: {}]
  %s9 = inlined_call_operand.hbm [shape: bf16[256,256], index: 9, kind: input, shape index: {}]
  %s10 = inlined_call_operand.hbm [shape: f32[1,256], index: 10, kind: input, shape index: {}]
  %s11 = inlined_call_operand.hbm [shape: bf16[256,512], index: 11, kind: input, shape index: {}]
  %s12 = inlined_call_operand.hbm [shape: f32[1,512], index: 12, kind: input, shape index: {}]
  %s13 = inlined_call_operand.hbm [shape: bf16[1024,128], index: 13, kind: input, shape index: {}]
  %s14 = inlined_call_operand.hbm [shape: bf16[512,128], index: 14, kind: input, shape index: {}]
  %s15 = inlined_call_operand.hbm [shape: f32[1,128], index: 15, kind: input, shape index: {}]
  %s16 = inlined_call_operand.hbm [shape: f32[2,128], index: 16, kind: output, shape index: {}]
  %s17 = sld [smem:[#allocation0]]
  $region122: #{classifier_forward.1} parent=0
    _
  %s19 = ssub.s32 1, %s17
  %s20 = scalar_select 0, %s19, %s17
  $region1: #{classifier_forward.1} parent=0
    #allocation2 [shape = 'u8[512]{0}', space=vmem, size = 0x400, scoped, tag = 'input window, operand 4, single buffered']
    #allocation3 [shape = 's32[1]{0}', space=sflag, size = 0x4, scoped, tag = 'scoped memory for classifier_forward.1']
    #allocation4 [shape = 's32[1]{0}', space=sflag, size = 0x4, scoped, tag = 'scoped memory for classifier_forward.1']
    #allocation5 [shape = 'u8[32768]{0}', space=vmem, size = 0x8000, scoped, tag = 'input window, operand 5, single buffered']
    #allocation6 [shape = 's32[1]{0}', space=sflag, size = 0x4, scoped, tag = 'scoped memory for classifier_forward.1']
    #allocation7 [shape = 'u8[1024]{0}', space=vmem, size = 0x400, scoped, tag = 'input window, operand 6, single buffered']
    #allocation8 [shape = 'u8[2097152]{0}', space=vmem, size = 0x200000, scoped, tag = 'input window, operand 7, single buffered']
    #allocation9 [shape = 's32[1]{0}', space=sflag, size = 0x4, scoped, tag = 'scoped memory for classifier_forward.1']
    #allocation10 [shape = 'u8[4096]{0}', space=vmem, size = 0x1000, scoped, tag = 'input window, operand 8, single buffered']
    #allocation11 [shape = 'u8[131072]{0}', space=vmem, size = 0x20000, scoped, tag = 'input window, operand 9, single buffered']
    #allocation12 [shape = 's32[1]{0}', space=sflag, size = 0x4, scoped, tag = 'scoped memory for classifier_forward.1']
    #allocation13 [shape = 'u8[1024]{0}', space=vmem, size = 0x400, scoped, tag = 'input window, operand 10, single buffered']
    #allocation14 [shape = 'u8[262144]{0}', space=vmem, size = 0x40000, scoped, tag = 'input window, operand 11, single buffered']
    #allocation15 [shape = 's32[1]{0}', space=sflag, size = 0x4, scoped, tag = 'scoped memory for classifier_forward.1']
    #allocation16 [shape = 'u8[2048]{0}', space=vmem, size = 0x800, scoped, tag = 'input window, operand 12, single buffered']
    #allocation17 [shape = 'u8[262144]{0}', space=vmem, size = 0x40000, scoped, tag = 'input window, operand 13, single buffered']
    #allocation18 [shape = 's32[1]{0}', space=sflag, size = 0x4, scoped, tag = 'scoped memory for classifier_forward.1']
    #allocation19 [shape = 'u8[131072]{0}', space=vmem, size = 0x20000, scoped, tag = 'input window, operand 14, single buffered']
    #allocation20 [shape = 'u8[512]{0}', space=vmem, size = 0x400, scoped, tag = 'input window, operand 15, single buffered']
    #allocation21 [shape = 's32[1]{0}', space=sflag, size = 0x4, scoped, tag = 'scoped memory for classifier_forward.1']
    #allocation22 [shape = 'u8[1024]{0}', space=vmem, size = 0x400, scoped, tag = 'output window, operand 0, single buffered']
    %21 = vsyncpa [#allocation3], 0
    %22 = vsyncpa [#allocation6], 0
    %23 = vsyncpa [#allocation9], 0
    %24 = vsyncpa [#allocation12], 0
    %25 = vsyncpa [#allocation15], 0
    %26 = vsyncpa [#allocation18], 0
    %27 = vsyncpa [#allocation21], 0
    %28 = vsyncpa [#allocation4], 0
    // Predicated region
    $region2: #{classifier_forward.1} parent=1 // pred_check
      _
    $region3: #{classifier_forward.1} parent=1 // pred_check_branch
      %30 = sbr.rel (0) target = $region5
    $region4: #{classifier_forward.1} parent=1 // pred_region
      _
    $region5: #{classifier_forward.1} parent=1 // pred_fallthru
      _
    // Predicated region
    $region6: #{classifier_forward.1} parent=1 // pred_check
      _
    $region7: #{classifier_forward.1} parent=1 // pred_check_branch
      %32 = sbr.rel (0) target = $region9
    $region8: #{classifier_forward.1} parent=1 // pred_region
      _
    $region9: #{classifier_forward.1} parent=1 // pred_fallthru
      _
    // Predicated region
    $region10: #{classifier_forward.1} parent=1 // pred_check
      _
    $region11: #{classifier_forward.1} parent=1 // pred_check_branch
      %34 = sbr.rel (0) target = $region13
    $region12: #{classifier_forward.1} parent=1 // pred_region
      _
    $region13: #{classifier_forward.1} parent=1 // pred_fallthru
      _
    // Predicated region
    $region14: #{classifier_forward.1} parent=1 // pred_check
      _
    $region15: #{classifier_forward.1} parent=1 // pred_check_branch
      %36 = sbr.rel (0) target = $region17
    $region16: #{classifier_forward.1} parent=1 // pred_region
      _
    $region17: #{classifier_forward.1} parent=1 // pred_fallthru
      _
    // Predicated region
    $region18: #{classifier_forward.1} parent=1 // pred_check
      _
    $region19: #{classifier_forward.1} parent=1 // pred_check_branch
      %38 = sbr.rel (0) target = $region21
    $region20: #{classifier_forward.1} parent=1 // pred_region
      %s40 = ssub.s32 16, 16
      %41 = vsyncadd [#allocation3], %s40
      %s43 = sshll.u32 [#allocation2], 4
      %s44 = int_to_ptr.vmem [resolvable:$true] %s43
      %46 = dma.hbm_to_vmem [thread:$0]  %s4, 16, %s44, [#allocation3]
    $region21: #{classifier_forward.1} parent=1 // pred_fallthru
      _
    // Predicated region
    $region22: #{classifier_forward.1} parent=1 // pred_check
      _
    $region23: #{classifier_forward.1} parent=1 // pred_check_branch
      %48 = sbr.rel (0) target = $region25
    $region24: #{classifier_forward.1} parent=1 // pred_region
      %s50 = ssub.s32 1024, 1024
      %51 = vsyncadd [#allocation6], %s50
      %s52 = sshll.u32 [#allocation5], 4
      %s53 = int_to_ptr.vmem [resolvable:$true] %s52
      %58 = dma.hbm_to_vmem [thread:$0]  %s5, 1024, %s53, [#allocation6], 128, 128, 8
    $region25: #{classifier_forward.1} parent=1 // pred_fallthru
      _
    // Predicated region
    $region26: #{classifier_forward.1} parent=1 // pred_check
      _
    $region27: #{classifier_forward.1} parent=1 // pred_check_branch
      %60 = sbr.rel (0) target = $region29
    $region28: #{classifier_forward.1} parent=1 // pred_region
      %s62 = ssub.s32 32, 32
      %63 = vsyncadd [#allocation6], %s62
      %s65 = sshll.u32 [#allocation7], 4
      %s66 = int_to_ptr.vmem [resolvable:$true] %s65
      %68 = dma.hbm_to_vmem [thread:$0]  %s6, 32, %s66, [#allocation6]
    $region29: #{classifier_forward.1} parent=1 // pred_fallthru
      _
    // Predicated region
    $region30: #{classifier_forward.1} parent=1 // pred_check
      _
    $region31: #{classifier_forward.1} parent=1 // pred_check_branch
      %70 = sbr.rel (0) target = $region33
    $region32: #{classifier_forward.1} parent=1 // pred_region
      %s72 = ssub.s32 65536, 65536
      %73 = vsyncadd [#allocation9], %s72
      %s74 = sshll.u32 [#allocation8], 4
      %s75 = int_to_ptr.vmem [resolvable:$true] %s74
      %80 = dma.hbm_to_vmem [thread:$0]  %s7, 65536, %s75, [#allocation9], 512, 512, 32
    $region33: #{classifier_forward.1} parent=1 // pred_fallthru
      _
    // Predicated region
    $region34: #{classifier_forward.1} parent=1 // pred_check
      _
    $region35: #{classifier_forward.1} parent=1 // pred_check_branch
      %82 = sbr.rel (0) target = $region37
    $region36: #{classifier_forward.1} parent=1 // pred_region
      %s84 = ssub.s32 128, 128
      %85 = vsyncadd [#allocation9], %s84
      %s87 = sshll.u32 [#allocation10], 4
      %s88 = int_to_ptr.vmem [resolvable:$true] %s87
      %90 = dma.hbm_to_vmem [thread:$0]  %s8, 128, %s88, [#allocation9]
    $region37: #{classifier_forward.1} parent=1 // pred_fallthru
      _
    // Predicated region
    $region38: #{classifier_forward.1} parent=1 // pred_check
      _
    $region39: #{classifier_forward.1} parent=1 // pred_check_branch
      %92 = sbr.rel (0) target = $region41
    $region40: #{classifier_forward.1} parent=1 // pred_region
      %s94 = ssub.s32 4096, 4096
      %95 = vsyncadd [#allocation12], %s94
      %s96 = sshll.u32 [#allocation11], 4
      %s97 = int_to_ptr.vmem [resolvable:$true] %s96
      %102 = dma.hbm_to_vmem [thread:$0]  %s9, 4096, %s97, [#allocation12], 128, 128, 8
    $region41: #{classifier_forward.1} parent=1 // pred_fallthru
      _
    // Predicated region
    $region42: #{classifier_forward.1} parent=1 // pred_check
      _
    $region43: #{classifier_forward.1} parent=1 // pred_check_branch
      %104 = sbr.rel (0) target = $region45
    $region44: #{classifier_forward.1} parent=1 // pred_region
      %s106 = ssub.s32 32, 32
      %107 = vsyncadd [#allocation12], %s106
      %s109 = sshll.u32 [#allocation13], 4
      %s110 = int_to_ptr.vmem [resolvable:$true] %s109
      %112 = dma.hbm_to_vmem [thread:$0]  %s10, 32, %s110, [#allocation12]
    $region45: #{classifier_forward.1} parent=1 // pred_fallthru
      _
    // Predicated region
    $region46: #{classifier_forward.1} parent=1 // pred_check
      _
    $region47: #{classifier_forward.1} parent=1 // pred_check_branch
      %114 = sbr.rel (0) target = $region49
    $region48: #{classifier_forward.1} parent=1 // pred_region
      %s116 = ssub.s32 8192, 8192
      %117 = vsyncadd [#allocation15], %s116
      %s118 = sshll.u32 [#allocation14], 4
      %s119 = int_to_ptr.vmem [resolvable:$true] %s118
      %124 = dma.hbm_to_vmem [thread:$0]  %s11, 8192, %s119, [#allocation15], 256, 256, 16
    $region49: #{classifier_forward.1} parent=1 // pred_fallthru
      _
    // Predicated region
    $region50: #{classifier_forward.1} parent=1 // pred_check
      _
    $region51: #{classifier_forward.1} parent=1 // pred_check_branch
      %126 = sbr.rel (0) target = $region53
    $region52: #{classifier_forward.1} parent=1 // pred_region
      %s128 = ssub.s32 64, 64
      %129 = vsyncadd [#allocation15], %s128
      %s131 = sshll.u32 [#allocation16], 4
      %s132 = int_to_ptr.vmem [resolvable:$true] %s131
      %134 = dma.hbm_to_vmem [thread:$0]  %s12, 64, %s132, [#allocation15]
    $region53: #{classifier_forward.1} parent=1 // pred_fallthru
      _
    // Predicated region
    $region54: #{classifier_forward.1} parent=1 // pred_check
      _
    $region55: #{classifier_forward.1} parent=1 // pred_check_branch
      %136 = sbr.rel (0) target = $region57
    $region56: #{classifier_forward.1} parent=1 // pred_region
      %s138 = ssub.s32 8192, 8192
      %139 = vsyncadd [#allocation18], %s138
      %s140 = sshll.u32 [#allocation17], 4
      %s141 = int_to_ptr.vmem [resolvable:$true] %s140
      %146 = dma.hbm_to_vmem [thread:$0]  %s13, 8192, %s141, [#allocation18], 64, 64, 4
    $region57: #{classifier_forward.1} parent=1 // pred_fallthru
      _
    // Predicated region
    $region58: #{classifier_forward.1} parent=1 // pred_check
      _
    $region59: #{classifier_forward.1} parent=1 // pred_check_branch
      %148 = sbr.rel (0) target = $region61
    $region60: #{classifier_forward.1} parent=1 // pred_region
      %s150 = ssub.s32 4096, 4096
      %151 = vsyncadd [#allocation18], %s150
      %s152 = sshll.u32 [#allocation19], 4
      %s153 = int_to_ptr.vmem [resolvable:$true] %s152
      %158 = dma.hbm_to_vmem [thread:$0]  %s14, 4096, %s153, [#allocation18], 64, 64, 4
    $region61: #{classifier_forward.1} parent=1 // pred_fallthru
      _
    // Predicated region
    $region62: #{classifier_forward.1} parent=1 // pred_check
      _
    $region63: #{classifier_forward.1} parent=1 // pred_check_branch
      %160 = sbr.rel (0) target = $region65
    $region64: #{classifier_forward.1} parent=1 // pred_region
      %s162 = ssub.s32 16, 16
      %163 = vsyncadd [#allocation21], %s162
      %s165 = sshll.u32 [#allocation20], 4
      %s166 = int_to_ptr.vmem [resolvable:$true] %s165
      %168 = dma.hbm_to_vmem [thread:$0]  %s15, 16, %s166, [#allocation21]
    $region65: #{classifier_forward.1} parent=1 // pred_fallthru
      _
    // Predicated region
    $region66: #{classifier_forward.1} parent=1 // pred_check
      _
    $region67: #{classifier_forward.1} parent=1 // pred_check_branch
      %170 = sbr.rel (0) target = $region69
    $region68: #{classifier_forward.1} parent=1 // pred_region
      %171 = dma.done [#allocation3], 16
    $region69: #{classifier_forward.1} parent=1 // pred_fallthru
      _
    // Predicated region
    $region70: #{classifier_forward.1} parent=1 // pred_check
      _
    $region71: #{classifier_forward.1} parent=1 // pred_check_branch
      %173 = sbr.rel (0) target = $region73
    $region72: #{classifier_forward.1} parent=1 // pred_region
      %174 = dma.done [#allocation6], 1024
    $region73: #{classifier_forward.1} parent=1 // pred_fallthru
      _
    // Predicated region
    $region74: #{classifier_forward.1} parent=1 // pred_check
      _
    $region75: #{classifier_forward.1} parent=1 // pred_check_branch
      %176 = sbr.rel (0) target = $region77
    $region76: #{classifier_forward.1} parent=1 // pred_region
      %177 = dma.done [#allocation6], 32
    $region77: #{classifier_forward.1} parent=1 // pred_fallthru
      _
    // Predicated region
    $region78: #{classifier_forward.1} parent=1 // pred_check
      _
    $region79: #{classifier_forward.1} parent=1 // pred_check_branch
      %179 = sbr.rel (0) target = $region81
    $region80: #{classifier_forward.1} parent=1 // pred_region
      %180 = dma.done [#allocation9], 65536
    $region81: #{classifier_forward.1} parent=1 // pred_fallthru
      _
    // Predicated region
    $region82: #{classifier_forward.1} parent=1 // pred_check
      _
    $region83: #{classifier_forward.1} parent=1 // pred_check_branch
      %182 = sbr.rel (0) target = $region85
    $region84: #{classifier_forward.1} parent=1 // pred_region
      %183 = dma.done [#allocation9], 128
    $region85: #{classifier_forward.1} parent=1 // pred_fallthru
      _
    // Predicated region
    $region86: #{classifier_forward.1} parent=1 // pred_check
      _
    $region87: #{classifier_forward.1} parent=1 // pred_check_branch
      %185 = sbr.rel (0) target = $region89
    $region88: #{classifier_forward.1} parent=1 // pred_region
      %186 = dma.done [#allocation12], 4096
    $region89: #{classifier_forward.1} parent=1 // pred_fallthru
      _
    // Predicated region
    $region90: #{classifier_forward.1} parent=1 // pred_check
      _
    $region91: #{classifier_forward.1} parent=1 // pred_check_branch
      %188 = sbr.rel (0) target = $region93
    $region92: #{classifier_forward.1} parent=1 // pred_region
      %189 = dma.done [#allocation12], 32
    $region93: #{classifier_forward.1} parent=1 // pred_fallthru
      _
    // Predicated region
    $region94: #{classifier_forward.1} parent=1 // pred_check
      _
    $region95: #{classifier_forward.1} parent=1 // pred_check_branch
      %191 = sbr.rel (0) target = $region97
    $region96: #{classifier_forward.1} parent=1 // pred_region
      %192 = dma.done [#allocation15], 8192
    $region97: #{classifier_forward.1} parent=1 // pred_fallthru
      _
    // Predicated region
    $region98: #{classifier_forward.1} parent=1 // pred_check
      _
    $region99: #{classifier_forward.1} parent=1 // pred_check_branch
      %194 = sbr.rel (0) target = $region101
    $region100: #{classifier_forward.1} parent=1 // pred_region
      %195 = dma.done [#allocation15], 64
    $region101: #{classifier_forward.1} parent=1 // pred_fallthru
      _
    // Predicated region
    $region102: #{classifier_forward.1} parent=1 // pred_check
      _
    $region103: #{classifier_forward.1} parent=1 // pred_check_branch
      %197 = sbr.rel (0) target = $region105
    $region104: #{classifier_forward.1} parent=1 // pred_region
      %198 = dma.done [#allocation18], 8192
    $region105: #{classifier_forward.1} parent=1 // pred_fallthru
      _
    // Predicated region
    $region106: #{classifier_forward.1} parent=1 // pred_check
      _
    $region107: #{classifier_forward.1} parent=1 // pred_check_branch
      %200 = sbr.rel (0) target = $region109
    $region108: #{classifier_forward.1} parent=1 // pred_region
      %201 = dma.done [#allocation18], 4096
    $region109: #{classifier_forward.1} parent=1 // pred_fallthru
      _
    // Predicated region
    $region110: #{classifier_forward.1} parent=1 // pred_check
      _
    $region111: #{classifier_forward.1} parent=1 // pred_check_branch
      %203 = sbr.rel (0) target = $region113
    $region112: #{classifier_forward.1} parent=1 // pred_region
      %204 = dma.done [#allocation21], 16
    $region113: #{classifier_forward.1} parent=1 // pred_fallthru
      _
    %v206 = vld [vmem:[%s0] sm:$0xff]
    %v207 = vld [vmem:[%s0 + $0x8] sm:$0xff]
    %v208 = vld [vmem:[%s0 + $0x10] sm:$0xff]
    %v209 = vld [vmem:[%s0 + $0x18] sm:$0xff]
    %v210 = vld [vmem:[%s0 + $0x20] sm:$0xff]
    %v211 = vld [vmem:[%s0 + $0x28] sm:$0xff]
    %v212 = vld [vmem:[%s0 + $0x30] sm:$0xff]
    %v213 = vld [vmem:[%s0 + $0x38] sm:$0xff]
    %v214 = vunpack.c.l.bf16 %v206
    %v215 = vunpack.c.h.bf16 %v206
    %v216 = vunpack.c.l.bf16 %v207
    %v217 = vunpack.c.h.bf16 %v207
    %v218 = vunpack.c.l.bf16 %v208
    %v219 = vunpack.c.h.bf16 %v208
    %v220 = vunpack.c.l.bf16 %v209
    %v221 = vunpack.c.h.bf16 %v209
    %v222 = vunpack.c.l.bf16 %v210
    %v223 = vunpack.c.h.bf16 %v210
    %v224 = vunpack.c.l.bf16 %v211
    %v225 = vunpack.c.h.bf16 %v211
    %v226 = vunpack.c.l.bf16 %v212
    %v227 = vunpack.c.h.bf16 %v212
    %v228 = vunpack.c.l.bf16 %v213
    %v229 = vunpack.c.h.bf16 %v213
    %v230 = vld [vmem:[%s1] sm:$0xff]
    %v231 = vunpack.c.l.bf16 %v230
    %v232 = vunpack.c.h.bf16 %v230
    %v236 = vunpack.c.l.s4 1966171168
    %v237 = vunpack.c.0.s8 %v236
    %v238 = vlaneseq
    %v239 = vshrl.u32 %v238, 7
    %v240 = vsub.s32 %v237, %v239
    %v241 = vrot.slane %v231, %v240
    %v243 = vunpack.c.l.s4 1966171168
    %v244 = vunpack.c.0.s8 %v243
    %v245 = vlaneseq
    %v246 = vshrl.u32 %v245, 7
    %v247 = vsub.s32 %v244, %v246
    %v248 = vrot.slane %v232, %v247
    %v249 = vcombine.low %v241, %v248
    %v250 = vcombine.high %v241, %v248
    %v251 = vlaneseq
    %v252 = vshrl.u32 %v251, 7
    %v253 = vsub.s32 0, %v252
    %v254 = vrot.slane %v249, %v253
    %v255 = vlaneseq
    %v256 = vshrl.u32 %v255, 7
    %v257 = vsub.s32 1, %v256
    %v258 = vrot.slane %v249, %v257
    %v259 = vlaneseq
    %v260 = vshrl.u32 %v259, 7
    %v261 = vsub.s32 2, %v260
    %v262 = vrot.slane %v249, %v261
    %v263 = vlaneseq
    %v264 = vshrl.u32 %v263, 7
    %v265 = vsub.s32 3, %v264
    %v266 = vrot.slane %v249, %v265
    %v267 = vlaneseq
    %v268 = vshrl.u32 %v267, 7
    %v269 = vsub.s32 4, %v268
    %v270 = vrot.slane %v249, %v269
    %v271 = vlaneseq
    %v272 = vshrl.u32 %v271, 7
    %v273 = vsub.s32 5, %v272
    %v274 = vrot.slane %v249, %v273
    %v275 = vlaneseq
    %v276 = vshrl.u32 %v275, 7
    %v277 = vsub.s32 6, %v276
    %v278 = vrot.slane %v249, %v277
    %v279 = vlaneseq
    %v280 = vshrl.u32 %v279, 7
    %v281 = vsub.s32 7, %v280
    %v282 = vrot.slane %v249, %v281
    %v283 = vlaneseq
    %v284 = vshrl.u32 %v283, 7
    %v285 = vsub.s32 0, %v284
    %v286 = vrot.slane %v250, %v285
    %v287 = vlaneseq
    %v288 = vshrl.u32 %v287, 7
    %v289 = vsub.s32 1, %v288
    %v290 = vrot.slane %v250, %v289
    %v291 = vlaneseq
    %v292 = vshrl.u32 %v291, 7
    %v293 = vsub.s32 2, %v292
    %v294 = vrot.slane %v250, %v293
    %v295 = vlaneseq
    %v296 = vshrl.u32 %v295, 7
    %v297 = vsub.s32 3, %v296
    %v298 = vrot.slane %v250, %v297
    %v299 = vlaneseq
    %v300 = vshrl.u32 %v299, 7
    %v301 = vsub.s32 4, %v300
    %v302 = vrot.slane %v250, %v301
    %v303 = vlaneseq
    %v304 = vshrl.u32 %v303, 7
    %v305 = vsub.s32 5, %v304
    %v306 = vrot.slane %v250, %v305
    %v307 = vlaneseq
    %v308 = vshrl.u32 %v307, 7
    %v309 = vsub.s32 6, %v308
    %v310 = vrot.slane %v250, %v309
    %v311 = vlaneseq
    %v312 = vshrl.u32 %v311, 7
    %v313 = vsub.s32 7, %v312
    %v314 = vrot.slane %v250, %v313
    %v331 = vmul.f32 %v214, %v254
    %v332 = vmul.f32 %v215, %v258
    %v333 = vmul.f32 %v216, %v262
    %v334 = vmul.f32 %v217, %v266
    %v335 = vmul.f32 %v218, %v270
    %v336 = vmul.f32 %v219, %v274
    %v337 = vmul.f32 %v220, %v278
    %v338 = vmul.f32 %v221, %v282
    %v339 = vmul.f32 %v222, %v286
    %v340 = vmul.f32 %v223, %v290
    %v341 = vmul.f32 %v224, %v294
    %v342 = vmul.f32 %v225, %v298
    %v343 = vmul.f32 %v226, %v302
    %v344 = vmul.f32 %v227, %v306
    %v345 = vmul.f32 %v228, %v310
    %v346 = vmul.f32 %v229, %v314
    %v347 = vadd.f32 %v331, %v332
    %v348 = vadd.f32 %v347, %v333
    %v349 = vadd.f32 %v348, %v334
    %v350 = vadd.f32 %v349, %v335
    %v351 = vadd.f32 %v350, %v336
    %v352 = vadd.f32 %v351, %v337
    %v353 = vadd.f32 %v352, %v338
    %354 = vadd.xlane.f32.xlu0 %v353
    %v355 = vpop.xlane.xlu0 %354
    %v356 = vadd.f32 %v339, %v340
    %v357 = vadd.f32 %v356, %v341
    %v358 = vadd.f32 %v357, %v342
    %v359 = vadd.f32 %v358, %v343
    %v360 = vadd.f32 %v359, %v344
    %v361 = vadd.f32 %v360, %v345
    %v362 = vadd.f32 %v361, %v346
    %363 = vadd.xlane.f32.xlu0 %v362
    %v364 = vpop.xlane.xlu0 %363
    %v367 = vlaneseq
    %v368 = vand.u32 %v367, 127
    %v369 = vlaneseq
    %v370 = vshrl.u32 %v369, 7
    %v371 = vsub.s32 %v368, %v370
    %v372 = vrot.slane %v355, %v371
    %v373 = vlaneseq
    %v374 = vshrl.u32 %v373, 7
    %v375 = vsub.s32 %v368, %v374
    %v376 = vrot.slane %v364, %v375
    %vm377 = vcmask 1041409
    %v378 = vsel %vm377, %v376, %v372
    %vm380 = vcmask 58368
    %v381 = vsel %vm380, %v378, -inf
    %382 = vmax.xlane.f32.xlu0 %v381
    %v383 = vpop.xlane.xlu0 %382
    %v385 = vlaneseq
    %v386 = vshrl.u32 %v385, 7
    %v387 = vsub.s32 0, %v386
    %v388 = vrot.slane %v383, %v387
    %v389 = vlaneseq
    %v390 = vshrl.u32 %v389, 7
    %v391 = vsub.s32 1, %v390
    %v392 = vrot.slane %v383, %v391
    %v395 = vsub.f32 %v355, %v388
    %v396 = vsub.f32 %v364, %v392
    %v397 = vmul.f32 %v395, 1.442695
    %v398 = vpow.pop %v397
    %v399 = vmul.f32 %v396, 1.442695
    %v400 = vpow.pop %v399
    %403 = vset.pattern.permute.xlu0 0
    %404 = vperm.xlu0 %403, %v398
    %v405 = vpop.permute.xlu0 %404
    %406 = vset.pattern.permute.xlu0 0
    %407 = vperm.xlu0 %406, %v400
    %v408 = vpop.permute.xlu0 %407
    %v409 = vlaneseq
    %v410 = vshrl.u32 %v409, 7
    %v411 = vsub.s32 %v368, %v410
    %v412 = vrot.slane %v405, %v411
    %v413 = vlaneseq
    %v414 = vshrl.u32 %v413, 7
    %v415 = vsub.s32 %v368, %v414
    %v416 = vrot.slane %v408, %v415
    %v417 = vsel %vm377, %v416, %v412
    %v419 = vsel %vm380, %v417, 0.0
    %420 = vadd.xlane.f32.xlu0 %v419
    %v421 = vpop.xlane.xlu0 %420
    %v422 = vrcp.pop %v421
    %v424 = vlaneseq
    %v425 = vshrl.u32 %v424, 7
    %v426 = vsub.s32 0, %v425
    %v427 = vrot.slane %v422, %v426
    %v428 = vlaneseq
    %v429 = vshrl.u32 %v428, 7
    %v430 = vsub.s32 1, %v429
    %v431 = vrot.slane %v422, %v430
    %v434 = vmul.f32 %v398, %v427
    %v435 = vmul.f32 %v400, %v431
    %437 = vset.pattern.permute.xlu0 0
    %438 = vperm.xlu0 %437, %v434
    %v439 = vpop.permute.xlu0 %438
    %442 = vset.pattern.permute.xlu0 0
    %443 = vperm.xlu0 %442, %v435
    %v444 = vpop.permute.xlu0 %443
    %v446 = vmul.f32 %v439, %v214
    %v447 = vmul.f32 %v439, %v215
    %v448 = vmul.f32 %v439, %v216
    %v449 = vmul.f32 %v439, %v217
    %v450 = vmul.f32 %v439, %v218
    %v451 = vmul.f32 %v439, %v219
    %v452 = vmul.f32 %v439, %v220
    %v453 = vmul.f32 %v439, %v221
    %v454 = vmul.f32 %v444, %v222
    %v455 = vmul.f32 %v444, %v223
    %v456 = vmul.f32 %v444, %v224
    %v457 = vmul.f32 %v444, %v225
    %v458 = vmul.f32 %v444, %v226
    %v459 = vmul.f32 %v444, %v227
    %v460 = vmul.f32 %v444, %v228
    %v461 = vmul.f32 %v444, %v229
    %v462 = vrot.slane %v446, 4
    %v463 = vadd.f32 %v446, %v462
    %v464 = vrot.slane %v463, 2
    %v465 = vadd.f32 %v463, %v464
    %v466 = vrot.slane %v465, 1
    %v467 = vadd.f32 %v465, %v466
    %v468 = vrot.slane %v447, 4
    %v469 = vadd.f32 %v447, %v468
    %v470 = vrot.slane %v469, 2
    %v471 = vadd.f32 %v469, %v470
    %v472 = vrot.slane %v471, 1
    %v473 = vadd.f32 %v471, %v472
    %v474 = vrot.slane %v448, 4
    %v475 = vadd.f32 %v448, %v474
    %v476 = vrot.slane %v475, 2
    %v477 = vadd.f32 %v475, %v476
    %v478 = vrot.slane %v477, 1
    %v479 = vadd.f32 %v477, %v478
    %v480 = vrot.slane %v449, 4
    %v481 = vadd.f32 %v449, %v480
    %v482 = vrot.slane %v481, 2
    %v483 = vadd.f32 %v481, %v482
    %v484 = vrot.slane %v483, 1
    %v485 = vadd.f32 %v483, %v484
    %v486 = vrot.slane %v450, 4
    %v487 = vadd.f32 %v450, %v486
    %v488 = vrot.slane %v487, 2
    %v489 = vadd.f32 %v487, %v488
    %v490 = vrot.slane %v489, 1
    %v491 = vadd.f32 %v489, %v490
    %v492 = vrot.slane %v451, 4
    %v493 = vadd.f32 %v451, %v492
    %v494 = vrot.slane %v493, 2
    %v495 = vadd.f32 %v493, %v494
    %v496 = vrot.slane %v495, 1
    %v497 = vadd.f32 %v495, %v496
    %v498 = vrot.slane %v452, 4
    %v499 = vadd.f32 %v452, %v498
    %v500 = vrot.slane %v499, 2
    %v501 = vadd.f32 %v499, %v500
    %v502 = vrot.slane %v501, 1
    %v503 = vadd.f32 %v501, %v502
    %v504 = vrot.slane %v453, 4
    %v505 = vadd.f32 %v453, %v504
    %v506 = vrot.slane %v505, 2
    %v507 = vadd.f32 %v505, %v506
    %v508 = vrot.slane %v507, 1
    %v509 = vadd.f32 %v507, %v508
    %v510 = vrot.slane %v454, 4
    %v511 = vadd.f32 %v454, %v510
    %v512 = vrot.slane %v511, 2
    %v513 = vadd.f32 %v511, %v512
    %v514 = vrot.slane %v513, 1
    %v515 = vadd.f32 %v513, %v514
    %v516 = vrot.slane %v455, 4
    %v517 = vadd.f32 %v455, %v516
    %v518 = vrot.slane %v517, 2
    %v519 = vadd.f32 %v517, %v518
    %v520 = vrot.slane %v519, 1
    %v521 = vadd.f32 %v519, %v520
    %v522 = vrot.slane %v456, 4
    %v523 = vadd.f32 %v456, %v522
    %v524 = vrot.slane %v523, 2
    %v525 = vadd.f32 %v523, %v524
    %v526 = vrot.slane %v525, 1
    %v527 = vadd.f32 %v525, %v526
    %v528 = vrot.slane %v457, 4
    %v529 = vadd.f32 %v457, %v528
    %v530 = vrot.slane %v529, 2
    %v531 = vadd.f32 %v529, %v530
    %v532 = vrot.slane %v531, 1
    %v533 = vadd.f32 %v531, %v532
    %v534 = vrot.slane %v458, 4
    %v535 = vadd.f32 %v458, %v534
    %v536 = vrot.slane %v535, 2
    %v537 = vadd.f32 %v535, %v536
    %v538 = vrot.slane %v537, 1
    %v539 = vadd.f32 %v537, %v538
    %v540 = vrot.slane %v459, 4
    %v541 = vadd.f32 %v459, %v540
    %v542 = vrot.slane %v541, 2
    %v543 = vadd.f32 %v541, %v542
    %v544 = vrot.slane %v543, 1
    %v545 = vadd.f32 %v543, %v544
    %v546 = vrot.slane %v460, 4
    %v547 = vadd.f32 %v460, %v546
    %v548 = vrot.slane %v547, 2
    %v549 = vadd.f32 %v547, %v548
    %v550 = vrot.slane %v549, 1
    %v551 = vadd.f32 %v549, %v550
    %v552 = vrot.slane %v461, 4
    %v553 = vadd.f32 %v461, %v552
    %v554 = vrot.slane %v553, 2
    %v555 = vadd.f32 %v553, %v554
    %v556 = vrot.slane %v555, 1
    %v557 = vadd.f32 %v555, %v556
    %v558 = vpack.c.bf16 %v467, %v467
    %v559 = vpack.c.bf16 %v473, %v473
    %v560 = vpack.c.bf16 %v479, %v479
    %v561 = vpack.c.bf16 %v485, %v485
    %v562 = vpack.c.bf16 %v491, %v491
    %v563 = vpack.c.bf16 %v497, %v497
    %v564 = vpack.c.bf16 %v503, %v503
    %v565 = vpack.c.bf16 %v509, %v509
    %v566 = vpack.c.bf16 %v515, %v515
    %v567 = vpack.c.bf16 %v521, %v521
    %v568 = vpack.c.bf16 %v527, %v527
    %v569 = vpack.c.bf16 %v533, %v533
    %v570 = vpack.c.bf16 %v539, %v539
    %v571 = vpack.c.bf16 %v545, %v545
    %v572 = vpack.c.bf16 %v551, %v551
    %v573 = vpack.c.bf16 %v557, %v557
    %v574 = vld [vmem:[#allocation8] sm:$0xff]
    %v575 = vld [vmem:[#allocation8 + $0x8] sm:$0xff]
    %v576 = vld [vmem:[#allocation8 + $0x10] sm:$0xff]
    %v577 = vld [vmem:[#allocation8 + $0x18] sm:$0xff]
    %v578 = vld [vmem:[#allocation8 + $0x20] sm:$0xff]
    %v579 = vld [vmem:[#allocation8 + $0x28] sm:$0xff]
    %v580 = vld [vmem:[#allocation8 + $0x30] sm:$0xff]
    %v581 = vld [vmem:[#allocation8 + $0x38] sm:$0xff]
    %v582 = vld [vmem:[#allocation8 + $0x40] sm:$0xff]
    %v583 = vld [vmem:[#allocation8 + $0x48] sm:$0xff]
    %v584 = vld [vmem:[#allocation8 + $0x50] sm:$0xff]
    %v585 = vld [vmem:[#allocation8 + $0x58] sm:$0xff]
    %v586 = vld [vmem:[#allocation8 + $0x60] sm:$0xff]
    %v587 = vld [vmem:[#allocation8 + $0x68] sm:$0xff]
    %v588 = vld [vmem:[#allocation8 + $0x70] sm:$0xff]
    %v589 = vld [vmem:[#allocation8 + $0x78] sm:$0xff]
    %v590 = vld [vmem:[#allocation8 + $0x80] sm:$0xff]
    %v591 = vld [vmem:[#allocation8 + $0x88] sm:$0xff]
    %v592 = vld [vmem:[#allocation8 + $0x90] sm:$0xff]
    %v593 = vld [vmem:[#allocation8 + $0x98] sm:$0xff]
    %v594 = vld [vmem:[#allocation8 + $0xa0] sm:$0xff]
    %v595 = vld [vmem:[#allocation8 + $0xa8] sm:$0xff]
    %v596 = vld [vmem:[#allocation8 + $0xb0] sm:$0xff]
    %v597 = vld [vmem:[#allocation8 + $0xb8] sm:$0xff]
    %v598 = vld [vmem:[#allocation8 + $0xc0] sm:$0xff]
    %v599 = vld [vmem:[#allocation8 + $0xc8] sm:$0xff]
    %v600 = vld [vmem:[#allocation8 + $0xd0] sm:$0xff]
    %v601 = vld [vmem:[#allocation8 + $0xd8] sm:$0xff]
    %v602 = vld [vmem:[#allocation8 + $0xe0] sm:$0xff]
    %v603 = vld [vmem:[#allocation8 + $0xe8] sm:$0xff]
    %v604 = vld [vmem:[#allocation8 + $0xf0] sm:$0xff]
    %v605 = vld [vmem:[#allocation8 + $0xf8] sm:$0xff]
    %v606 = vld [vmem:[#allocation8 + $0x100] sm:$0xff]
    %v607 = vld [vmem:[#allocation8 + $0x108] sm:$0xff]
    %v608 = vld [vmem:[#allocation8 + $0x110] sm:$0xff]
    %v609 = vld [vmem:[#allocation8 + $0x118] sm:$0xff]
    %v610 = vld [vmem:[#allocation8 + $0x120] sm:$0xff]
    %v611 = vld [vmem:[#allocation8 + $0x128] sm:$0xff]
    %v612 = vld [vmem:[#allocation8 + $0x130] sm:$0xff]
    %v613 = vld [vmem:[#allocation8 + $0x138] sm:$0xff]
    %v614 = vld [vmem:[#allocation8 + $0x140] sm:$0xff]
    %v615 = vld [vmem:[#allocation8 + $0x148] sm:$0xff]
    %v616 = vld [vmem:[#allocation8 + $0x150] sm:$0xff]
    %v617 = vld [vmem:[#allocation8 + $0x158] sm:$0xff]
    %v618 = vld [vmem:[#allocation8 + $0x160] sm:$0xff]
    %v619 = vld [vmem:[#allocation8 + $0x168] sm:$0xff]
    %v620 = vld [vmem:[#allocation8 + $0x170] sm:$0xff]
    %v621 = vld [vmem:[#allocation8 + $0x178] sm:$0xff]
    %v622 = vld [vmem:[#allocation8 + $0x180] sm:$0xff]
    %v623 = vld [vmem:[#allocation8 + $0x188] sm:$0xff]
    %v624 = vld [vmem:[#allocation8 + $0x190] sm:$0xff]
    %v625 = vld [vmem:[#allocation8 + $0x198] sm:$0xff]
    %v626 = vld [vmem:[#allocation8 + $0x1a0] sm:$0xff]
    %v627 = vld [vmem:[#allocation8 + $0x1a8] sm:$0xff]
    %v628 = vld [vmem:[#allocation8 + $0x1b0] sm:$0xff]
    %v629 = vld [vmem:[#allocation8 + $0x1b8] sm:$0xff]
    %v630 = vld [vmem:[#allocation8 + $0x1c0] sm:$0xff]
    %v631 = vld [vmem:[#allocation8 + $0x1c8] sm:$0xff]
    %v632 = vld [vmem:[#allocation8 + $0x1d0] sm:$0xff]
    %v633 = vld [vmem:[#allocation8 + $0x1d8] sm:$0xff]
    %v634 = vld [vmem:[#allocation8 + $0x1e0] sm:$0xff]
    %v635 = vld [vmem:[#allocation8 + $0x1e8] sm:$0xff]
    %v636 = vld [vmem:[#allocation8 + $0x1f0] sm:$0xff]
    %v637 = vld [vmem:[#allocation8 + $0x1f8] sm:$0xff]
    %v638 = vld [vmem:[#allocation8 + $0x200] sm:$0xff]
    %v639 = vld [vmem:[#allocation8 + $0x208] sm:$0xff]
    %v640 = vld [vmem:[#allocation8 + $0x210] sm:$0xff]
    %v641 = vld [vmem:[#allocation8 + $0x218] sm:$0xff]
    %v642 = vld [vmem:[#allocation8 + $0x220] sm:$0xff]
    %v643 = vld [vmem:[#allocation8 + $0x228] sm:$0xff]
    %v644 = vld [vmem:[#allocation8 + $0x230] sm:$0xff]
    %v645 = vld [vmem:[#allocation8 + $0x238] sm:$0xff]
    %v646 = vld [vmem:[#allocation8 + $0x240] sm:$0xff]
    %v647 = vld [vmem:[#allocation8 + $0x248] sm:$0xff]
    %v648 = vld [vmem:[#allocation8 + $0x250] sm:$0xff]
    %v649 = vld [vmem:[#allocation8 + $0x258] sm:$0xff]
    %v650 = vld [vmem:[#allocation8 + $0x260] sm:$0xff]
    %v651 = vld [vmem:[#allocation8 + $0x268] sm:$0xff]
    %v652 = vld [vmem:[#allocation8 + $0x270] sm:$0xff]
    %v653 = vld [vmem:[#allocation8 + $0x278] sm:$0xff]
    %v654 = vld [vmem:[#allocation8 + $0x280] sm:$0xff]
    %v655 = vld [vmem:[#allocation8 + $0x288] sm:$0xff]
    %v656 = vld [vmem:[#allocation8 + $0x290] sm:$0xff]
    %v657 = vld [vmem:[#allocation8 + $0x298] sm:$0xff]
    %v658 = vld [vmem:[#allocation8 + $0x2a0] sm:$0xff]
    %v659 = vld [vmem:[#allocation8 + $0x2a8] sm:$0xff]
    %v660 = vld [vmem:[#allocation8 + $0x2b0] sm:$0xff]
    %v661 = vld [vmem:[#allocation8 + $0x2b8] sm:$0xff]
    %v662 = vld [vmem:[#allocation8 + $0x2c0] sm:$0xff]
    %v663 = vld [vmem:[#allocation8 + $0x2c8] sm:$0xff]
    %v664 = vld [vmem:[#allocation8 + $0x2d0] sm:$0xff]
    %v665 = vld [vmem:[#allocation8 + $0x2d8] sm:$0xff]
    %v666 = vld [vmem:[#allocation8 + $0x2e0] sm:$0xff]
    %v667 = vld [vmem:[#allocation8 + $0x2e8] sm:$0xff]
    %v668 = vld [vmem:[#allocation8 + $0x2f0] sm:$0xff]
    %v669 = vld [vmem:[#allocation8 + $0x2f8] sm:$0xff]
    %v670 = vld [vmem:[#allocation8 + $0x300] sm:$0xff]
    %v671 = vld [vmem:[#allocation8 + $0x308] sm:$0xff]
    %v672 = vld [vmem:[#allocation8 + $0x310] sm:$0xff]
    %v673 = vld [vmem:[#allocation8 + $0x318] sm:$0xff]
    %v674 = vld [vmem:[#allocation8 + $0x320] sm:$0xff]
    %v675 = vld [vmem:[#allocation8 + $0x328] sm:$0xff]
    %v676 = vld [vmem:[#allocation8 + $0x330] sm:$0xff]
    %v677 = vld [vmem:[#allocation8 + $0x338] sm:$0xff]
    %v678 = vld [vmem:[#allocation8 + $0x340] sm:$0xff]
    %v679 = vld [vmem:[#allocation8 + $0x348] sm:$0xff]
    %v680 = vld [vmem:[#allocation8 + $0x350] sm:$0xff]
    %v681 = vld [vmem:[#allocation8 + $0x358] sm:$0xff]
    %v682 = vld [vmem:[#allocation8 + $0x360] sm:$0xff]
    %v683 = vld [vmem:[#allocation8 + $0x368] sm:$0xff]
    %v684 = vld [vmem:[#allocation8 + $0x370] sm:$0xff]
    %v685 = vld [vmem:[#allocation8 + $0x378] sm:$0xff]
    %v686 = vld [vmem:[#allocation8 + $0x380] sm:$0xff]
    %v687 = vld [vmem:[#allocation8 + $0x388] sm:$0xff]
    %v688 = vld [vmem:[#allocation8 + $0x390] sm:$0xff]
    %v689 = vld [vmem:[#allocation8 + $0x398] sm:$0xff]
    %v690 = vld [vmem:[#allocation8 + $0x3a0] sm:$0xff]
    %v691 = vld [vmem:[#allocation8 + $0x3a8] sm:$0xff]
    %v692 = vld [vmem:[#allocation8 + $0x3b0] sm:$0xff]
    %v693 = vld [vmem:[#allocation8 + $0x3b8] sm:$0xff]
    %v694 = vld [vmem:[#allocation8 + $0x3c0] sm:$0xff]
    %v695 = vld [vmem:[#allocation8 + $0x3c8] sm:$0xff]
    %v696 = vld [vmem:[#allocation8 + $0x3d0] sm:$0xff]
    %v697 = vld [vmem:[#allocation8 + $0x3d8] sm:$0xff]
    %v698 = vld [vmem:[#allocation8 + $0x3e0] sm:$0xff]
    %v699 = vld [vmem:[#allocation8 + $0x3e8] sm:$0xff]
    %v700 = vld [vmem:[#allocation8 + $0x3f0] sm:$0xff]
    %v701 = vld [vmem:[#allocation8 + $0x3f8] sm:$0xff]
    %v702 = vld [vmem:[#allocation8 + $0x400] sm:$0xff]
    %v703 = vld [vmem:[#allocation8 + $0x408] sm:$0xff]
    %v704 = vld [vmem:[#allocation8 + $0x410] sm:$0xff]
    %v705 = vld [vmem:[#allocation8 + $0x418] sm:$0xff]
    %v706 = vld [vmem:[#allocation8 + $0x420] sm:$0xff]
    %v707 = vld [vmem:[#allocation8 + $0x428] sm:$0xff]
    %v708 = vld [vmem:[#allocation8 + $0x430] sm:$0xff]
    %v709 = vld [vmem:[#allocation8 + $0x438] sm:$0xff]
    %v710 = vld [vmem:[#allocation8 + $0x440] sm:$0xff]
    %v711 = vld [vmem:[#allocation8 + $0x448] sm:$0xff]
    %v712 = vld [vmem:[#allocation8 + $0x450] sm:$0xff]
    %v713 = vld [vmem:[#allocation8 + $0x458] sm:$0xff]
    %v714 = vld [vmem:[#allocation8 + $0x460] sm:$0xff]
    %v715 = vld [vmem:[#allocation8 + $0x468] sm:$0xff]
    %v716 = vld [vmem:[#allocation8 + $0x470] sm:$0xff]
    %v717 = vld [vmem:[#allocation8 + $0x478] sm:$0xff]
    %v718 = vld [vmem:[#allocation8 + $0x480] sm:$0xff]
    %v719 = vld [vmem:[#allocation8 + $0x488] sm:$0xff]
    %v720 = vld [vmem:[#allocation8 + $0x490] sm:$0xff]
    %v721 = vld [vmem:[#allocation8 + $0x498] sm:$0xff]
    %v722 = vld [vmem:[#allocation8 + $0x4a0] sm:$0xff]
    %v723 = vld [vmem:[#allocation8 + $0x4a8] sm:$0xff]
    %v724 = vld [vmem:[#allocation8 + $0x4b0] sm:$0xff]
    %v725 = vld [vmem:[#allocation8 + $0x4b8] sm:$0xff]
    %v726 = vld [vmem:[#allocation8 + $0x4c0] sm:$0xff]
    %v727 = vld [vmem:[#allocation8 + $0x4c8] sm:$0xff]
    %v728 = vld [vmem:[#allocation8 + $0x4d0] sm:$0xff]
    %v729 = vld [vmem:[#allocation8 + $0x4d8] sm:$0xff]
    %v730 = vld [vmem:[#allocation8 + $0x4e0] sm:$0xff]
    %v731 = vld [vmem:[#allocation8 + $0x4e8] sm:$0xff]
    %v732 = vld [vmem:[#allocation8 + $0x4f0] sm:$0xff]
    %v733 = vld [vmem:[#allocation8 + $0x4f8] sm:$0xff]
    %v734 = vld [vmem:[#allocation8 + $0x500] sm:$0xff]
    %v735 = vld [vmem:[#allocation8 + $0x508] sm:$0xff]
    %v736 = vld [vmem:[#allocation8 + $0x510] sm:$0xff]
    %v737 = vld [vmem:[#allocation8 + $0x518] sm:$0xff]
    %v738 = vld [vmem:[#allocation8 + $0x520] sm:$0xff]
    %v739 = vld [vmem:[#allocation8 + $0x528] sm:$0xff]
    %v740 = vld [vmem:[#allocation8 + $0x530] sm:$0xff]
    %v741 = vld [vmem:[#allocation8 + $0x538] sm:$0xff]
    %v742 = vld [vmem:[#allocation8 + $0x540] sm:$0xff]
    %v743 = vld [vmem:[#allocation8 + $0x548] sm:$0xff]
    %v744 = vld [vmem:[#allocation8 + $0x550] sm:$0xff]
    %v745 = vld [vmem:[#allocation8 + $0x558] sm:$0xff]
    %v746 = vld [vmem:[#allocation8 + $0x560] sm:$0xff]
    %v747 = vld [vmem:[#allocation8 + $0x568] sm:$0xff]
    %v748 = vld [vmem:[#allocation8 + $0x570] sm:$0xff]
    %v749 = vld [vmem:[#allocation8 + $0x578] sm:$0xff]
    %v750 = vld [vmem:[#allocation8 + $0x580] sm:$0xff]
    %v751 = vld [vmem:[#allocation8 + $0x588] sm:$0xff]
    %v752 = vld [vmem:[#allocation8 + $0x590] sm:$0xff]
    %v753 = vld [vmem:[#allocation8 + $0x598] sm:$0xff]
    %v754 = vld [vmem:[#allocation8 + $0x5a0] sm:$0xff]
    %v755 = vld [vmem:[#allocation8 + $0x5a8] sm:$0xff]
    %v756 = vld [vmem:[#allocation8 + $0x5b0] sm:$0xff]
    %v757 = vld [vmem:[#allocation8 + $0x5b8] sm:$0xff]
    %v758 = vld [vmem:[#allocation8 + $0x5c0] sm:$0xff]
    %v759 = vld [vmem:[#allocation8 + $0x5c8] sm:$0xff]
    %v760 = vld [vmem:[#allocation8 + $0x5d0] sm:$0xff]
    %v761 = vld [vmem:[#allocation8 + $0x5d8] sm:$0xff]
    %v762 = vld [vmem:[#allocation8 + $0x5e0] sm:$0xff]
    %v763 = vld [vmem:[#allocation8 + $0x5e8] sm:$0xff]
    %v764 = vld [vmem:[#allocation8 + $0x5f0] sm:$0xff]
    %v765 = vld [vmem:[#allocation8 + $0x5f8] sm:$0xff]
    %v766 = vld [vmem:[#allocation8 + $0x600] sm:$0xff]
    %v767 = vld [vmem:[#allocation8 + $0x608] sm:$0xff]
    %v768 = vld [vmem:[#allocation8 + $0x610] sm:$0xff]
    %v769 = vld [vmem:[#allocation8 + $0x618] sm:$0xff]
    %v770 = vld [vmem:[#allocation8 + $0x620] sm:$0xff]
    %v771 = vld [vmem:[#allocation8 + $0x628] sm:$0xff]
    %v772 = vld [vmem:[#allocation8 + $0x630] sm:$0xff]
    %v773 = vld [vmem:[#allocation8 + $0x638] sm:$0xff]
    %v774 = vld [vmem:[#allocation8 + $0x640] sm:$0xff]
    %v775 = vld [vmem:[#allocation8 + $0x648] sm:$0xff]
    %v776 = vld [vmem:[#allocation8 + $0x650] sm:$0xff]
    %v777 = vld [vmem:[#allocation8 + $0x658] sm:$0xff]
    %v778 = vld [vmem:[#allocation8 + $0x660] sm:$0xff]
    %v779 = vld [vmem:[#allocation8 + $0x668] sm:$0xff]
    %v780 = vld [vmem:[#allocation8 + $0x670] sm:$0xff]
    %v781 = vld [vmem:[#allocation8 + $0x678] sm:$0xff]
    %v782 = vld [vmem:[#allocation8 + $0x680] sm:$0xff]
    %v783 = vld [vmem:[#allocation8 + $0x688] sm:$0xff]
    %v784 = vld [vmem:[#allocation8 + $0x690] sm:$0xff]
    %v785 = vld [vmem:[#allocation8 + $0x698] sm:$0xff]
    %v786 = vld [vmem:[#allocation8 + $0x6a0] sm:$0xff]
    %v787 = vld [vmem:[#allocation8 + $0x6a8] sm:$0xff]
    %v788 = vld [vmem:[#allocation8 + $0x6b0] sm:$0xff]
    %v789 = vld [vmem:[#allocation8 + $0x6b8] sm:$0xff]
    %v790 = vld [vmem:[#allocation8 + $0x6c0] sm:$0xff]
    %v791 = vld [vmem:[#allocation8 + $0x6c8] sm:$0xff]
    %v792 = vld [vmem:[#allocation8 + $0x6d0] sm:$0xff]
    %v793 = vld [vmem:[#allocation8 + $0x6d8] sm:$0xff]
    %v794 = vld [vmem:[#allocation8 + $0x6e0] sm:$0xff]
    %v795 = vld [vmem:[#allocation8 + $0x6e8] sm:$0xff]
    %v796 = vld [vmem:[#allocation8 + $0x6f0] sm:$0xff]
    %v797 = vld [vmem:[#allocation8 + $0x6f8] sm:$0xff]
    %v798 = vld [vmem:[#allocation8 + $0x700] sm:$0xff]
    %v799 = vld [vmem:[#allocation8 + $0x708] sm:$0xff]
    %v800 = vld [vmem:[#allocation8 + $0x710] sm:$0xff]
    %v801 = vld [vmem:[#allocation8 + $0x718] sm:$0xff]
    %v802 = vld [vmem:[#allocation8 + $0x720] sm:$0xff]
    %v803 = vld [vmem:[#allocation8 + $0x728] sm:$0xff]
    %v804 = vld [vmem:[#allocation8 + $0x730] sm:$0xff]
    %v805 = vld [vmem:[#allocation8 + $0x738] sm:$0xff]
    %v806 = vld [vmem:[#allocation8 + $0x740] sm:$0xff]
    %v807 = vld [vmem:[#allocation8 + $0x748] sm:$0xff]
    %v808 = vld [vmem:[#allocation8 + $0x750] sm:$0xff]
    %v809 = vld [vmem:[#allocation8 + $0x758] sm:$0xff]
    %v810 = vld [vmem:[#allocation8 + $0x760] sm:$0xff]
    %v811 = vld [vmem:[#allocation8 + $0x768] sm:$0xff]
    %v812 = vld [vmem:[#allocation8 + $0x770] sm:$0xff]
    %v813 = vld [vmem:[#allocation8 + $0x778] sm:$0xff]
    %v814 = vld [vmem:[#allocation8 + $0x780] sm:$0xff]
    %v815 = vld [vmem:[#allocation8 + $0x788] sm:$0xff]
    %v816 = vld [vmem:[#allocation8 + $0x790] sm:$0xff]
    %v817 = vld [vmem:[#allocation8 + $0x798] sm:$0xff]
    %v818 = vld [vmem:[#allocation8 + $0x7a0] sm:$0xff]
    %v819 = vld [vmem:[#allocation8 + $0x7a8] sm:$0xff]
    %v820 = vld [vmem:[#allocation8 + $0x7b0] sm:$0xff]
    %v821 = vld [vmem:[#allocation8 + $0x7b8] sm:$0xff]
    %v822 = vld [vmem:[#allocation8 + $0x7c0] sm:$0xff]
    %v823 = vld [vmem:[#allocation8 + $0x7c8] sm:$0xff]
    %v824 = vld [vmem:[#allocation8 + $0x7d0] sm:$0xff]
    %v825 = vld [vmem:[#allocation8 + $0x7d8] sm:$0xff]
    %v826 = vld [vmem:[#allocation8 + $0x7e0] sm:$0xff]
    %v827 = vld [vmem:[#allocation8 + $0x7e8] sm:$0xff]
    %v828 = vld [vmem:[#allocation8 + $0x7f0] sm:$0xff]
    %v829 = vld [vmem:[#allocation8 + $0x7f8] sm:$0xff]
    %v830 = vld [vmem:[#allocation8 + $0x800] sm:$0xff]
    %v831 = vld [vmem:[#allocation8 + $0x808] sm:$0xff]
    %v832 = vld [vmem:[#allocation8 + $0x810] sm:$0xff]
    %v833 = vld [vmem:[#allocation8 + $0x818] sm:$0xff]
    %v834 = vld [vmem:[#allocation8 + $0x820] sm:$0xff]
    %v835 = vld [vmem:[#allocation8 + $0x828] sm:$0xff]
    %v836 = vld [vmem:[#allocation8 + $0x830] sm:$0xff]
    %v837 = vld [vmem:[#allocation8 + $0x838] sm:$0xff]
    %v838 = vld [vmem:[#allocation8 + $0x840] sm:$0xff]
    %v839 = vld [vmem:[#allocation8 + $0x848] sm:$0xff]
    %v840 = vld [vmem:[#allocation8 + $0x850] sm:$0xff]
    %v841 = vld [vmem:[#allocation8 + $0x858] sm:$0xff]
    %v842 = vld [vmem:[#allocation8 + $0x860] sm:$0xff]
    %v843 = vld [vmem:[#allocation8 + $0x868] sm:$0xff]
    %v844 = vld [vmem:[#allocation8 + $0x870] sm:$0xff]
    %v845 = vld [vmem:[#allocation8 + $0x878] sm:$0xff]
    %v846 = vld [vmem:[#allocation8 + $0x880] sm:$0xff]
    %v847 = vld [vmem:[#allocation8 + $0x888] sm:$0xff]
    %v848 = vld [vmem:[#allocation8 + $0x890] sm:$0xff]
    %v849 = vld [vmem:[#allocation8 + $0x898] sm:$0xff]
    %v850 = vld [vmem:[#allocation8 + $0x8a0] sm:$0xff]
    %v851 = vld [vmem:[#allocation8 + $0x8a8] sm:$0xff]
    %v852 = vld [vmem:[#allocation8 + $0x8b0] sm:$0xff]
    %v853 = vld [vmem:[#allocation8 + $0x8b8] sm:$0xff]
    %v854 = vld [vmem:[#allocation8 + $0x8c0] sm:$0xff]
    %v855 = vld [vmem:[#allocation8 + $0x8c8] sm:$0xff]
    %v856 = vld [vmem:[#allocation8 + $0x8d0] sm:$0xff]
    %v857 = vld [vmem:[#allocation8 + $0x8d8] sm:$0xff]
    %v858 = vld [vmem:[#allocation8 + $0x8e0] sm:$0xff]
    %v859 = vld [vmem:[#allocation8 + $0x8e8] sm:$0xff]
    %v860 = vld [vmem:[#allocation8 + $0x8f0] sm:$0xff]
    %v861 = vld [vmem:[#allocation8 + $0x8f8] sm:$0xff]
    %v862 = vld [vmem:[#allocation8 + $0x900] sm:$0xff]
    %v863 = vld [vmem:[#allocation8 + $0x908] sm:$0xff]
    %v864 = vld [vmem:[#allocation8 + $0x910] sm:$0xff]
    %v865 = vld [vmem:[#allocation8 + $0x918] sm:$0xff]
    %v866 = vld [vmem:[#allocation8 + $0x920] sm:$0xff]
    %v867 = vld [vmem:[#allocation8 + $0x928] sm:$0xff]
    %v868 = vld [vmem:[#allocation8 + $0x930] sm:$0xff]
    %v869 = vld [vmem:[#allocation8 + $0x938] sm:$0xff]
    %v870 = vld [vmem:[#allocation8 + $0x940] sm:$0xff]
    %v871 = vld [vmem:[#allocation8 + $0x948] sm:$0xff]
    %v872 = vld [vmem:[#allocation8 + $0x950] sm:$0xff]
    %v873 = vld [vmem:[#allocation8 + $0x958] sm:$0xff]
    %v874 = vld [vmem:[#allocation8 + $0x960] sm:$0xff]
    %v875 = vld [vmem:[#allocation8 + $0x968] sm:$0xff]
    %v876 = vld [vmem:[#allocation8 + $0x970] sm:$0xff]
    %v877 = vld [vmem:[#allocation8 + $0x978] sm:$0xff]
    %v878 = vld [vmem:[#allocation8 + $0x980] sm:$0xff]
    %v879 = vld [vmem:[#allocation8 + $0x988] sm:$0xff]
    %v880 = vld [vmem:[#allocation8 + $0x990] sm:$0xff]
    %v881 = vld [vmem:[#allocation8 + $0x998] sm:$0xff]
    %v882 = vld [vmem:[#allocation8 + $0x9a0] sm:$0xff]
    %v883 = vld [vmem:[#allocation8 + $0x9a8] sm:$0xff]
    %v884 = vld [vmem:[#allocation8 + $0x9b0] sm:$0xff]
    %v885 = vld [vmem:[#allocation8 + $0x9b8] sm:$0xff]
    %v886 = vld [vmem:[#allocation8 + $0x9c0] sm:$0xff]
    %v887 = vld [vmem:[#allocation8 + $0x9c8] sm:$0xff]
    %v888 = vld [vmem:[#allocation8 + $0x9d0] sm:$0xff]
    %v889 = vld [vmem:[#allocation8 + $0x9d8] sm:$0xff]
    %v890 = vld [vmem:[#allocation8 + $0x9e0] sm:$0xff]
    %v891 = vld [vmem:[#allocation8 + $0x9e8] sm:$0xff]
    %v892 = vld [vmem:[#allocation8 + $0x9f0] sm:$0xff]
    %v893 = vld [vmem:[#allocation8 + $0x9f8] sm:$0xff]
    %v894 = vld [vmem:[#allocation8 + $0xa00] sm:$0xff]
    %v895 = vld [vmem:[#allocation8 + $0xa08] sm:$0xff]
    %v896 = vld [vmem:[#allocation8 + $0xa10] sm:$0xff]
    %v897 = vld [vmem:[#allocation8 + $0xa18] sm:$0xff]
    %v898 = vld [vmem:[#allocation8 + $0xa20] sm:$0xff]
    %v899 = vld [vmem:[#allocation8 + $0xa28] sm:$0xff]
    %v900 = vld [vmem:[#allocation8 + $0xa30] sm:$0xff]
    %v901 = vld [vmem:[#allocation8 + $0xa38] sm:$0xff]
    %v902 = vld [vmem:[#allocation8 + $0xa40] sm:$0xff]
    %v903 = vld [vmem:[#allocation8 + $0xa48] sm:$0xff]
    %v904 = vld [vmem:[#allocation8 + $0xa50] sm:$0xff]
    %v905 = vld [vmem:[#allocation8 + $0xa58] sm:$0xff]
    %v906 = vld [vmem:[#allocation8 + $0xa60] sm:$0xff]
    %v907 = vld [vmem:[#allocation8 + $0xa68] sm:$0xff]
    %v908 = vld [vmem:[#allocation8 + $0xa70] sm:$0xff]
    %v909 = vld [vmem:[#allocation8 + $0xa78] sm:$0xff]
    %v910 = vld [vmem:[#allocation8 + $0xa80] sm:$0xff]
    %v911 = vld [vmem:[#allocation8 + $0xa88] sm:$0xff]
    %v912 = vld [vmem:[#allocation8 + $0xa90] sm:$0xff]
    %v913 = vld [vmem:[#allocation8 + $0xa98] sm:$0xff]
    %v914 = vld [vmem:[#allocation8 + $0xaa0] sm:$0xff]
    %v915 = vld [vmem:[#allocation8 + $0xaa8] sm:$0xff]
    %v916 = vld [vmem:[#allocation8 + $0xab0] sm:$0xff]
    %v917 = vld [vmem:[#allocation8 + $0xab8] sm:$0xff]
    %v918 = vld [vmem:[#allocation8 + $0xac0] sm:$0xff]
    %v919 = vld [vmem:[#allocation8 + $0xac8] sm:$0xff]
    %v920 = vld [vmem:[#allocation8 + $0xad0] sm:$0xff]
    %v921 = vld [vmem:[#allocation8 + $0xad8] sm:$0xff]
    %v922 = vld [vmem:[#allocation8 + $0xae0] sm:$0xff]
    %v923 = vld [vmem:[#allocation8 + $0xae8] sm:$0xff]
    %v924 = vld [vmem:[#allocation8 + $0xaf0] sm:$0xff]
    %v925 = vld [vmem:[#allocation8 + $0xaf8] sm:$0xff]
    %v926 = vld [vmem:[#allocation8 + $0xb00] sm:$0xff]
    %v927 = vld [vmem:[#allocation8 + $0xb08] sm:$0xff]
    %v928 = vld [vmem:[#allocation8 + $0xb10] sm:$0xff]
    %v929 = vld [vmem:[#allocation8 + $0xb18] sm:$0xff]
    %v930 = vld [vmem:[#allocation8 + $0xb20] sm:$0xff]
    %v931 = vld [vmem:[#allocation8 + $0xb28] sm:$0xff]
    %v932 = vld [vmem:[#allocation8 + $0xb30] sm:$0xff]
    %v933 = vld [vmem:[#allocation8 + $0xb38] sm:$0xff]
    %v934 = vld [vmem:[#allocation8 + $0xb40] sm:$0xff]
    %v935 = vld [vmem:[#allocation8 + $0xb48] sm:$0xff]
    %v936 = vld [vmem:[#allocation8 + $0xb50] sm:$0xff]
    %v937 = vld [vmem:[#allocation8 + $0xb58] sm:$0xff]
    %v938 = vld [vmem:[#allocation8 + $0xb60] sm:$0xff]
    %v939 = vld [vmem:[#allocation8 + $0xb68] sm:$0xff]
    %v940 = vld [vmem:[#allocation8 + $0xb70] sm:$0xff]
    %v941 = vld [vmem:[#allocation8 + $0xb78] sm:$0xff]
    %v942 = vld [vmem:[#allocation8 + $0xb80] sm:$0xff]
    %v943 = vld [vmem:[#allocation8 + $0xb88] sm:$0xff]
    %v944 = vld [vmem:[#allocation8 + $0xb90] sm:$0xff]
    %v945 = vld [vmem:[#allocation8 + $0xb98] sm:$0xff]
    %v946 = vld [vmem:[#allocation8 + $0xba0] sm:$0xff]
    %v947 = vld [vmem:[#allocation8 + $0xba8] sm:$0xff]
    %v948 = vld [vmem:[#allocation8 + $0xbb0] sm:$0xff]
    %v949 = vld [vmem:[#allocation8 + $0xbb8] sm:$0xff]
    %v950 = vld [vmem:[#allocation8 + $0xbc0] sm:$0xff]
    %v951 = vld [vmem:[#allocation8 + $0xbc8] sm:$0xff]
    %v952 = vld [vmem:[#allocation8 + $0xbd0] sm:$0xff]
    %v953 = vld [vmem:[#allocation8 + $0xbd8] sm:$0xff]
    %v954 = vld [vmem:[#allocation8 + $0xbe0] sm:$0xff]
    %v955 = vld [vmem:[#allocation8 + $0xbe8] sm:$0xff]
    %v956 = vld [vmem:[#allocation8 + $0xbf0] sm:$0xff]
    %v957 = vld [vmem:[#allocation8 + $0xbf8] sm:$0xff]
    %v958 = vld [vmem:[#allocation8 + $0xc00] sm:$0xff]
    %v959 = vld [vmem:[#allocation8 + $0xc08] sm:$0xff]
    %v960 = vld [vmem:[#allocation8 + $0xc10] sm:$0xff]
    %v961 = vld [vmem:[#allocation8 + $0xc18] sm:$0xff]
    %v962 = vld [vmem:[#allocation8 + $0xc20] sm:$0xff]
    %v963 = vld [vmem:[#allocation8 + $0xc28] sm:$0xff]
    %v964 = vld [vmem:[#allocation8 + $0xc30] sm:$0xff]
    %v965 = vld [vmem:[#allocation8 + $0xc38] sm:$0xff]
    %v966 = vld [vmem:[#allocation8 + $0xc40] sm:$0xff]
    %v967 = vld [vmem:[#allocation8 + $0xc48] sm:$0xff]
    %v968 = vld [vmem:[#allocation8 + $0xc50] sm:$0xff]
    %v969 = vld [vmem:[#allocation8 + $0xc58] sm:$0xff]
    %v970 = vld [vmem:[#allocation8 + $0xc60] sm:$0xff]
    %v971 = vld [vmem:[#allocation8 + $0xc68] sm:$0xff]
    %v972 = vld [vmem:[#allocation8 + $0xc70] sm:$0xff]
    %v973 = vld [vmem:[#allocation8 + $0xc78] sm:$0xff]
    %v974 = vld [vmem:[#allocation8 + $0xc80] sm:$0xff]
    %v975 = vld [vmem:[#allocation8 + $0xc88] sm:$0xff]
    %v976 = vld [vmem:[#allocation8 + $0xc90] sm:$0xff]
    %v977 = vld [vmem:[#allocation8 + $0xc98] sm:$0xff]
    %v978 = vld [vmem:[#allocation8 + $0xca0] sm:$0xff]
    %v979 = vld [vmem:[#allocation8 + $0xca8] sm:$0xff]
    %v980 = vld [vmem:[#allocation8 + $0xcb0] sm:$0xff]
    %v981 = vld [vmem:[#allocation8 + $0xcb8] sm:$0xff]
    %v982 = vld [vmem:[#allocation8 + $0xcc0] sm:$0xff]
    %v983 = vld [vmem:[#allocation8 + $0xcc8] sm:$0xff]
    %v984 = vld [vmem:[#allocation8 + $0xcd0] sm:$0xff]
    %v985 = vld [vmem:[#allocation8 + $0xcd8] sm:$0xff]
    %v986 = vld [vmem:[#allocation8 + $0xce0] sm:$0xff]
    %v987 = vld [vmem:[#allocation8 + $0xce8] sm:$0xff]
    %v988 = vld [vmem:[#allocation8 + $0xcf0] sm:$0xff]
    %v989 = vld [vmem:[#allocation8 + $0xcf8] sm:$0xff]
    %v990 = vld [vmem:[#allocation8 + $0xd00] sm:$0xff]
    %v991 = vld [vmem:[#allocation8 + $0xd08] sm:$0xff]
    %v992 = vld [vmem:[#allocation8 + $0xd10] sm:$0xff]
    %v993 = vld [vmem:[#allocation8 + $0xd18] sm:$0xff]
    %v994 = vld [vmem:[#allocation8 + $0xd20] sm:$0xff]
    %v995 = vld [vmem:[#allocation8 + $0xd28] sm:$0xff]
    %v996 = vld [vmem:[#allocation8 + $0xd30] sm:$0xff]
    %v997 = vld [vmem:[#allocation8 + $0xd38] sm:$0xff]
    %v998 = vld [vmem:[#allocation8 + $0xd40] sm:$0xff]
    %v999 = vld [vmem:[#allocation8 + $0xd48] sm:$0xff]
    %v1000 = vld [vmem:[#allocation8 + $0xd50] sm:$0xff]
    %v1001 = vld [vmem:[#allocation8 + $0xd58] sm:$0xff]
    %v1002 = vld [vmem:[#allocation8 + $0xd60] sm:$0xff]
    %v1003 = vld [vmem:[#allocation8 + $0xd68] sm:$0xff]
    %v1004 = vld [vmem:[#allocation8 + $0xd70] sm:$0xff]
    %v1005 = vld [vmem:[#allocation8 + $0xd78] sm:$0xff]
    %v1006 = vld [vmem:[#allocation8 + $0xd80] sm:$0xff]
    %v1007 = vld [vmem:[#allocation8 + $0xd88] sm:$0xff]
    %v1008 = vld [vmem:[#allocation8 + $0xd90] sm:$0xff]
    %v1009 = vld [vmem:[#allocation8 + $0xd98] sm:$0xff]
    %v1010 = vld [vmem:[#allocation8 + $0xda0] sm:$0xff]
    %v1011 = vld [vmem:[#allocation8 + $0xda8] sm:$0xff]
    %v1012 = vld [vmem:[#allocation8 + $0xdb0] sm:$0xff]
    %v1013 = vld [vmem:[#allocation8 + $0xdb8] sm:$0xff]
    %v1014 = vld [vmem:[#allocation8 + $0xdc0] sm:$0xff]
    %v1015 = vld [vmem:[#allocation8 + $0xdc8] sm:$0xff]
    %v1016 = vld [vmem:[#allocation8 + $0xdd0] sm:$0xff]
    %v1017 = vld [vmem:[#allocation8 + $0xdd8] sm:$0xff]
    %v1018 = vld [vmem:[#allocation8 + $0xde0] sm:$0xff]
    %v1019 = vld [vmem:[#allocation8 + $0xde8] sm:$0xff]
    %v1020 = vld [vmem:[#allocation8 + $0xdf0] sm:$0xff]
    %v1021 = vld [vmem:[#allocation8 + $0xdf8] sm:$0xff]
    %v1022 = vld [vmem:[#allocation8 + $0xe00] sm:$0xff]
    %v1023 = vld [vmem:[#allocation8 + $0xe08] sm:$0xff]
    %v1024 = vld [vmem:[#allocation8 + $0xe10] sm:$0xff]
    %v1025 = vld [vmem:[#allocation8 + $0xe18] sm:$0xff]
    %v1026 = vld [vmem:[#allocation8 + $0xe20] sm:$0xff]
    %v1027 = vld [vmem:[#allocation8 + $0xe28] sm:$0xff]
    %v1028 = vld [vmem:[#allocation8 + $0xe30] sm:$0xff]
    %v1029 = vld [vmem:[#allocation8 + $0xe38] sm:$0xff]
    %v1030 = vld [vmem:[#allocation8 + $0xe40] sm:$0xff]
    %v1031 = vld [vmem:[#allocation8 + $0xe48] sm:$0xff]
    %v1032 = vld [vmem:[#allocation8 + $0xe50] sm:$0xff]
    %v1033 = vld [vmem:[#allocation8 + $0xe58] sm:$0xff]
    %v1034 = vld [vmem:[#allocation8 + $0xe60] sm:$0xff]
    %v1035 = vld [vmem:[#allocation8 + $0xe68] sm:$0xff]
    %v1036 = vld [vmem:[#allocation8 + $0xe70] sm:$0xff]
    %v1037 = vld [vmem:[#allocation8 + $0xe78] sm:$0xff]
    %v1038 = vld [vmem:[#allocation8 + $0xe80] sm:$0xff]
    %v1039 = vld [vmem:[#allocation8 + $0xe88] sm:$0xff]
    %v1040 = vld [vmem:[#allocation8 + $0xe90] sm:$0xff]
    %v1041 = vld [vmem:[#allocation8 + $0xe98] sm:$0xff]
    %v1042 = vld [vmem:[#allocation8 + $0xea0] sm:$0xff]
    %v1043 = vld [vmem:[#allocation8 + $0xea8] sm:$0xff]
    %v1044 = vld [vmem:[#allocation8 + $0xeb0] sm:$0xff]
    %v1045 = vld [vmem:[#allocation8 + $0xeb8] sm:$0xff]
    %v1046 = vld [vmem:[#allocation8 + $0xec0] sm:$0xff]
    %v1047 = vld [vmem:[#allocation8 + $0xec8] sm:$0xff]
    %v1048 = vld [vmem:[#allocation8 + $0xed0] sm:$0xff]
    %v1049 = vld [vmem:[#allocation8 + $0xed8] sm:$0xff]
    %v1050 = vld [vmem:[#allocation8 + $0xee0] sm:$0xff]
    %v1051 = vld [vmem:[#allocation8 + $0xee8] sm:$0xff]
    %v1052 = vld [vmem:[#allocation8 + $0xef0] sm:$0xff]
    %v1053 = vld [vmem:[#allocation8 + $0xef8] sm:$0xff]
    %v1054 = vld [vmem:[#allocation8 + $0xf00] sm:$0xff]
    %v1055 = vld [vmem:[#allocation8 + $0xf08] sm:$0xff]
    %v1056 = vld [vmem:[#allocation8 + $0xf10] sm:$0xff]
    %v1057 = vld [vmem:[#allocation8 + $0xf18] sm:$0xff]
    %v1058 = vld [vmem:[#allocation8 + $0xf20] sm:$0xff]
    %v1059 = vld [vmem:[#allocation8 + $0xf28] sm:$0xff]
    %v1060 = vld [vmem:[#allocation8 + $0xf30] sm:$0xff]
    %v1061 = vld [vmem:[#allocation8 + $0xf38] sm:$0xff]
    %v1062 = vld [vmem:[#allocation8 + $0xf40] sm:$0xff]
    %v1063 = vld [vmem:[#allocation8 + $0xf48] sm:$0xff]
    %v1064 = vld [vmem:[#allocation8 + $0xf50] sm:$0xff]
    %v1065 = vld [vmem:[#allocation8 + $0xf58] sm:$0xff]
    %v1066 = vld [vmem:[#allocation8 + $0xf60] sm:$0xff]
    %v1067 = vld [vmem:[#allocation8 + $0xf68] sm:$0xff]
    %v1068 = vld [vmem:[#allocation8 + $0xf70] sm:$0xff]
    %v1069 = vld [vmem:[#allocation8 + $0xf78] sm:$0xff]
    %v1070 = vld [vmem:[#allocation8 + $0xf80] sm:$0xff]
    %v1071 = vld [vmem:[#allocation8 + $0xf88] sm:$0xff]
    %v1072 = vld [vmem:[#allocation8 + $0xf90] sm:$0xff]
    %v1073 = vld [vmem:[#allocation8 + $0xf98] sm:$0xff]
    %v1074 = vld [vmem:[#allocation8 + $0xfa0] sm:$0xff]
    %v1075 = vld [vmem:[#allocation8 + $0xfa8] sm:$0xff]
    %v1076 = vld [vmem:[#allocation8 + $0xfb0] sm:$0xff]
    %v1077 = vld [vmem:[#allocation8 + $0xfb8] sm:$0xff]
    %v1078 = vld [vmem:[#allocation8 + $0xfc0] sm:$0xff]
    %v1079 = vld [vmem:[#allocation8 + $0xfc8] sm:$0xff]
    %v1080 = vld [vmem:[#allocation8 + $0xfd0] sm:$0xff]
    %v1081 = vld [vmem:[#allocation8 + $0xfd8] sm:$0xff]
    %v1082 = vld [vmem:[#allocation8 + $0xfe0] sm:$0xff]
    %v1083 = vld [vmem:[#allocation8 + $0xfe8] sm:$0xff]
    %v1084 = vld [vmem:[#allocation8 + $0xff0] sm:$0xff]
    %v1085 = vld [vmem:[#allocation8 + $0xff8] sm:$0xff]
    %v1086 = vld [vmem:[#allocation10] sm:$0xff]
    %v1088 = vlaneseq
    %v1089 = vshrl.u32 %v1088, 7
    %v1090 = vsub.s32 0, %v1089
    %v1091 = vrot.slane %v1086, %v1090
    %v1092 = vlaneseq
    %v1093 = vshrl.u32 %v1092, 7
    %v1094 = vsub.s32 1, %v1093
    %v1095 = vrot.slane %v1086, %v1094
    %v1096 = vlaneseq
    %v1097 = vshrl.u32 %v1096, 7
    %v1098 = vsub.s32 2, %v1097
    %v1099 = vrot.slane %v1086, %v1098
    %v1100 = vlaneseq
    %v1101 = vshrl.u32 %v1100, 7
    %v1102 = vsub.s32 3, %v1101
    %v1103 = vrot.slane %v1086, %v1102
    %v1104 = vlaneseq
    %v1105 = vshrl.u32 %v1104, 7
    %v1106 = vsub.s32 4, %v1105
    %v1107 = vrot.slane %v1086, %v1106
    %v1108 = vlaneseq
    %v1109 = vshrl.u32 %v1108, 7
    %v1110 = vsub.s32 5, %v1109
    %v1111 = vrot.slane %v1086, %v1110
    %v1112 = vlaneseq
    %v1113 = vshrl.u32 %v1112, 7
    %v1114 = vsub.s32 6, %v1113
    %v1115 = vrot.slane %v1086, %v1114
    %v1116 = vlaneseq
    %v1117 = vshrl.u32 %v1116, 7
    %v1118 = vsub.s32 7, %v1117
    %v1119 = vrot.slane %v1086, %v1118
    %v1144 = vunpack.c.l.b16 %v558
    %v1145 = vunpack.c.l.b16 %v559
    %v1146 = vunpack.c.l.b16 %v560
    %v1147 = vunpack.c.l.b16 %v561
    %v1148 = vunpack.c.l.b16 %v562
    %v1149 = vunpack.c.l.b16 %v563
    %v1150 = vunpack.c.l.b16 %v564
    %v1151 = vunpack.c.l.b16 %v565
    %v1152 = vunpack.c.l.b16 %v566
    %v1153 = vunpack.c.l.b16 %v567
    %v1154 = vunpack.c.l.b16 %v568
    %v1155 = vunpack.c.l.b16 %v569
    %v1156 = vunpack.c.l.b16 %v570
    %v1157 = vunpack.c.l.b16 %v571
    %v1158 = vunpack.c.l.b16 %v572
    %v1159 = vunpack.c.l.b16 %v573
    %v1160 = vsel %vm377, %v1152, %v1144
    %v1161 = vsel %vm377, %v1153, %v1145
    %v1162 = vsel %vm377, %v1154, %v1146
    %v1163 = vsel %vm377, %v1155, %v1147
    %v1164 = vsel %vm377, %v1156, %v1148
    %v1165 = vsel %vm377, %v1157, %v1149
    %v1166 = vsel %vm377, %v1158, %v1150
    %v1167 = vsel %vm377, %v1159, %v1151
    %v1168 = vpack.c.b16 %v1160, %v1160
    %v1169 = vpack.c.b16 %v1161, %v1161
    %v1170 = vpack.c.b16 %v1162, %v1162
    %v1171 = vpack.c.b16 %v1163, %v1163
    %v1172 = vpack.c.b16 %v1164, %v1164
    %v1173 = vpack.c.b16 %v1165, %v1165
    %v1174 = vpack.c.b16 %v1166, %v1166
    %v1175 = vpack.c.b16 %v1167, %v1167
    %v1696 = vunpack.c.l.b16 %v574
    %v1697 = vunpack.c.h.b16 %v574
    %v1698 = vunpack.c.l.b16 %v575
    %v1699 = vunpack.c.h.b16 %v575
    %v1700 = vunpack.c.l.b16 %v576
    %v1701 = vunpack.c.h.b16 %v576
    %v1702 = vunpack.c.l.b16 %v577
    %v1703 = vunpack.c.h.b16 %v577
    %v1704 = vunpack.c.l.b16 %v578
    %v1705 = vunpack.c.h.b16 %v578
    %v1706 = vunpack.c.l.b16 %v579
    %v1707 = vunpack.c.h.b16 %v579
    %v1708 = vunpack.c.l.b16 %v580
    %v1709 = vunpack.c.h.b16 %v580
    %v1710 = vunpack.c.l.b16 %v581
    %v1711 = vunpack.c.h.b16 %v581
    %v1712 = vunpack.c.l.b16 %v582
    %v1713 = vunpack.c.h.b16 %v582
    %v1714 = vunpack.c.l.b16 %v583
    %v1715 = vunpack.c.h.b16 %v583
    %v1716 = vunpack.c.l.b16 %v584
    %v1717 = vunpack.c.h.b16 %v584
    %v1718 = vunpack.c.l.b16 %v585
    %v1719 = vunpack.c.h.b16 %v585
    %v1720 = vunpack.c.l.b16 %v586
    %v1721 = vunpack.c.h.b16 %v586
    %v1722 = vunpack.c.l.b16 %v587
    %v1723 = vunpack.c.h.b16 %v587
    %v1724 = vunpack.c.l.b16 %v588
    %v1725 = vunpack.c.h.b16 %v588
    %v1726 = vunpack.c.l.b16 %v589
    %v1727 = vunpack.c.h.b16 %v589
    %v1728 = vunpack.c.l.b16 %v590
    %v1729 = vunpack.c.h.b16 %v590
    %v1730 = vunpack.c.l.b16 %v591
    %v1731 = vunpack.c.h.b16 %v591
    %v1732 = vunpack.c.l.b16 %v592
    %v1733 = vunpack.c.h.b16 %v592
    %v1734 = vunpack.c.l.b16 %v593
    %v1735 = vunpack.c.h.b16 %v593
    %v1736 = vunpack.c.l.b16 %v594
    %v1737 = vunpack.c.h.b16 %v594
    %v1738 = vunpack.c.l.b16 %v595
    %v1739 = vunpack.c.h.b16 %v595
    %v1740 = vunpack.c.l.b16 %v596
    %v1741 = vunpack.c.h.b16 %v596
    %v1742 = vunpack.c.l.b16 %v597
    %v1743 = vunpack.c.h.b16 %v597
    %v1744 = vunpack.c.l.b16 %v598
    %v1745 = vunpack.c.h.b16 %v598
    %v1746 = vunpack.c.l.b16 %v599
    %v1747 = vunpack.c.h.b16 %v599
    %v1748 = vunpack.c.l.b16 %v600
    %v1749 = vunpack.c.h.b16 %v600
    %v1750 = vunpack.c.l.b16 %v601
    %v1751 = vunpack.c.h.b16 %v601
    %v1752 = vunpack.c.l.b16 %v602
    %v1753 = vunpack.c.h.b16 %v602
    %v1754 = vunpack.c.l.b16 %v603
    %v1755 = vunpack.c.h.b16 %v603
    %v1756 = vunpack.c.l.b16 %v604
    %v1757 = vunpack.c.h.b16 %v604
    %v1758 = vunpack.c.l.b16 %v605
    %v1759 = vunpack.c.h.b16 %v605
    %v1760 = vunpack.c.l.b16 %v606
    %v1761 = vunpack.c.h.b16 %v606
    %v1762 = vunpack.c.l.b16 %v607
    %v1763 = vunpack.c.h.b16 %v607
    %v1764 = vunpack.c.l.b16 %v608
    %v1765 = vunpack.c.h.b16 %v608
    %v1766 = vunpack.c.l.b16 %v609
    %v1767 = vunpack.c.h.b16 %v609
    %v1768 = vunpack.c.l.b16 %v610
    %v1769 = vunpack.c.h.b16 %v610
    %v1770 = vunpack.c.l.b16 %v611
    %v1771 = vunpack.c.h.b16 %v611
    %v1772 = vunpack.c.l.b16 %v612
    %v1773 = vunpack.c.h.b16 %v612
    %v1774 = vunpack.c.l.b16 %v613
    %v1775 = vunpack.c.h.b16 %v613
    %v1776 = vunpack.c.l.b16 %v614
    %v1777 = vunpack.c.h.b16 %v614
    %v1778 = vunpack.c.l.b16 %v615
    %v1779 = vunpack.c.h.b16 %v615
    %v1780 = vunpack.c.l.b16 %v616
    %v1781 = vunpack.c.h.b16 %v616
    %v1782 = vunpack.c.l.b16 %v617
    %v1783 = vunpack.c.h.b16 %v617
    %v1784 = vunpack.c.l.b16 %v618
    %v1785 = vunpack.c.h.b16 %v618
    %v1786 = vunpack.c.l.b16 %v619
    %v1787 = vunpack.c.h.b16 %v619
    %v1788 = vunpack.c.l.b16 %v620
    %v1789 = vunpack.c.h.b16 %v620
    %v1790 = vunpack.c.l.b16 %v621
    %v1791 = vunpack.c.h.b16 %v621
    %v1792 = vunpack.c.l.b16 %v622
    %v1793 = vunpack.c.h.b16 %v622
    %v1794 = vunpack.c.l.b16 %v623
    %v1795 = vunpack.c.h.b16 %v623
    %v1796 = vunpack.c.l.b16 %v624
    %v1797 = vunpack.c.h.b16 %v624
    %v1798 = vunpack.c.l.b16 %v625
    %v1799 = vunpack.c.h.b16 %v625
    %v1800 = vunpack.c.l.b16 %v626
    %v1801 = vunpack.c.h.b16 %v626
    %v1802 = vunpack.c.l.b16 %v627
    %v1803 = vunpack.c.h.b16 %v627
    %v1804 = vunpack.c.l.b16 %v628
    %v1805 = vunpack.c.h.b16 %v628
    %v1806 = vunpack.c.l.b16 %v629
    %v1807 = vunpack.c.h.b16 %v629
    %v1808 = vunpack.c.l.b16 %v630
    %v1809 = vunpack.c.h.b16 %v630
    %v1810 = vunpack.c.l.b16 %v631
    %v1811 = vunpack.c.h.b16 %v631
    %v1812 = vunpack.c.l.b16 %v632
    %v1813 = vunpack.c.h.b16 %v632
    %v1814 = vunpack.c.l.b16 %v633
    %v1815 = vunpack.c.h.b16 %v633
    %v1816 = vunpack.c.l.b16 %v634
    %v1817 = vunpack.c.h.b16 %v634
    %v1818 = vunpack.c.l.b16 %v635
    %v1819 = vunpack.c.h.b16 %v635
    %v1820 = vunpack.c.l.b16 %v636
    %v1821 = vunpack.c.h.b16 %v636
    %v1822 = vunpack.c.l.b16 %v637
    %v1823 = vunpack.c.h.b16 %v637
    %v1824 = vunpack.c.l.b16 %v638
    %v1825 = vunpack.c.h.b16 %v638
    %v1826 = vunpack.c.l.b16 %v639
    %v1827 = vunpack.c.h.b16 %v639
    %v1828 = vunpack.c.l.b16 %v640
    %v1829 = vunpack.c.h.b16 %v640
    %v1830 = vunpack.c.l.b16 %v641
    %v1831 = vunpack.c.h.b16 %v641
    %v1832 = vunpack.c.l.b16 %v642
    %v1833 = vunpack.c.h.b16 %v642
    %v1834 = vunpack.c.l.b16 %v643
    %v1835 = vunpack.c.h.b16 %v643
    %v1836 = vunpack.c.l.b16 %v644
    %v1837 = vunpack.c.h.b16 %v644
    %v1838 = vunpack.c.l.b16 %v645
    %v1839 = vunpack.c.h.b16 %v645
    %v1840 = vunpack.c.l.b16 %v646
    %v1841 = vunpack.c.h.b16 %v646
    %v1842 = vunpack.c.l.b16 %v647
    %v1843 = vunpack.c.h.b16 %v647
    %v1844 = vunpack.c.l.b16 %v648
    %v1845 = vunpack.c.h.b16 %v648
    %v1846 = vunpack.c.l.b16 %v649
    %v1847 = vunpack.c.h.b16 %v649
    %v1848 = vunpack.c.l.b16 %v650
    %v1849 = vunpack.c.h.b16 %v650
    %v1850 = vunpack.c.l.b16 %v651
    %v1851 = vunpack.c.h.b16 %v651
    %v1852 = vunpack.c.l.b16 %v652
    %v1853 = vunpack.c.h.b16 %v652
    %v1854 = vunpack.c.l.b16 %v653
    %v1855 = vunpack.c.h.b16 %v653
    %v1856 = vunpack.c.l.b16 %v654
    %v1857 = vunpack.c.h.b16 %v654
    %v1858 = vunpack.c.l.b16 %v655
    %v1859 = vunpack.c.h.b16 %v655
    %v1860 = vunpack.c.l.b16 %v656
    %v1861 = vunpack.c.h.b16 %v656
    %v1862 = vunpack.c.l.b16 %v657
    %v1863 = vunpack.c.h.b16 %v657
    %v1864 = vunpack.c.l.b16 %v658
    %v1865 = vunpack.c.h.b16 %v658
    %v1866 = vunpack.c.l.b16 %v659
    %v1867 = vunpack.c.h.b16 %v659
    %v1868 = vunpack.c.l.b16 %v660
    %v1869 = vunpack.c.h.b16 %v660
    %v1870 = vunpack.c.l.b16 %v661
    %v1871 = vunpack.c.h.b16 %v661
    %v1872 = vunpack.c.l.b16 %v662
    %v1873 = vunpack.c.h.b16 %v662
    %v1874 = vunpack.c.l.b16 %v663
    %v1875 = vunpack.c.h.b16 %v663
    %v1876 = vunpack.c.l.b16 %v664
    %v1877 = vunpack.c.h.b16 %v664
    %v1878 = vunpack.c.l.b16 %v665
    %v1879 = vunpack.c.h.b16 %v665
    %v1880 = vunpack.c.l.b16 %v666
    %v1881 = vunpack.c.h.b16 %v666
    %v1882 = vunpack.c.l.b16 %v667
    %v1883 = vunpack.c.h.b16 %v667
    %v1884 = vunpack.c.l.b16 %v668
    %v1885 = vunpack.c.h.b16 %v668
    %v1886 = vunpack.c.l.b16 %v669
    %v1887 = vunpack.c.h.b16 %v669
    %v1888 = vunpack.c.l.b16 %v670
    %v1889 = vunpack.c.h.b16 %v670
    %v1890 = vunpack.c.l.b16 %v671
    %v1891 = vunpack.c.h.b16 %v671
    %v1892 = vunpack.c.l.b16 %v672
    %v1893 = vunpack.c.h.b16 %v672
    %v1894 = vunpack.c.l.b16 %v673
    %v1895 = vunpack.c.h.b16 %v673
    %v1896 = vunpack.c.l.b16 %v674
    %v1897 = vunpack.c.h.b16 %v674
    %v1898 = vunpack.c.l.b16 %v675
    %v1899 = vunpack.c.h.b16 %v675
    %v1900 = vunpack.c.l.b16 %v676
    %v1901 = vunpack.c.h.b16 %v676
    %v1902 = vunpack.c.l.b16 %v677
    %v1903 = vunpack.c.h.b16 %v677
    %v1904 = vunpack.c.l.b16 %v678
    %v1905 = vunpack.c.h.b16 %v678
    %v1906 = vunpack.c.l.b16 %v679
    %v1907 = vunpack.c.h.b16 %v679
    %v1908 = vunpack.c.l.b16 %v680
    %v1909 = vunpack.c.h.b16 %v680
    %v1910 = vunpack.c.l.b16 %v681
    %v1911 = vunpack.c.h.b16 %v681
    %v1912 = vunpack.c.l.b16 %v682
    %v1913 = vunpack.c.h.b16 %v682
    %v1914 = vunpack.c.l.b16 %v683
    %v1915 = vunpack.c.h.b16 %v683
    %v1916 = vunpack.c.l.b16 %v684
    %v1917 = vunpack.c.h.b16 %v684
    %v1918 = vunpack.c.l.b16 %v685
    %v1919 = vunpack.c.h.b16 %v685
    %v1920 = vunpack.c.l.b16 %v686
    %v1921 = vunpack.c.h.b16 %v686
    %v1922 = vunpack.c.l.b16 %v687
    %v1923 = vunpack.c.h.b16 %v687
    %v1924 = vunpack.c.l.b16 %v688
    %v1925 = vunpack.c.h.b16 %v688
    %v1926 = vunpack.c.l.b16 %v689
    %v1927 = vunpack.c.h.b16 %v689
    %v1928 = vunpack.c.l.b16 %v690
    %v1929 = vunpack.c.h.b16 %v690
    %v1930 = vunpack.c.l.b16 %v691
    %v1931 = vunpack.c.h.b16 %v691
    %v1932 = vunpack.c.l.b16 %v692
    %v1933 = vunpack.c.h.b16 %v692
    %v1934 = vunpack.c.l.b16 %v693
    %v1935 = vunpack.c.h.b16 %v693
    %v1936 = vunpack.c.l.b16 %v694
    %v1937 = vunpack.c.h.b16 %v694
    %v1938 = vunpack.c.l.b16 %v695
    %v1939 = vunpack.c.h.b16 %v695
    %v1940 = vunpack.c.l.b16 %v696
    %v1941 = vunpack.c.h.b16 %v696
    %v1942 = vunpack.c.l.b16 %v697
    %v1943 = vunpack.c.h.b16 %v697
    %v1944 = vunpack.c.l.b16 %v698
    %v1945 = vunpack.c.h.b16 %v698
    %v1946 = vunpack.c.l.b16 %v699
    %v1947 = vunpack.c.h.b16 %v699
    %v1948 = vunpack.c.l.b16 %v700
    %v1949 = vunpack.c.h.b16 %v700
    %v1950 = vunpack.c.l.b16 %v701
    %v1951 = vunpack.c.h.b16 %v701
    %v1952 = vunpack.c.l.b16 %v702
    %v1953 = vunpack.c.h.b16 %v702
    %v1954 = vunpack.c.l.b16 %v703
    %v1955 = vunpack.c.h.b16 %v703
    %v1956 = vunpack.c.l.b16 %v704
    %v1957 = vunpack.c.h.b16 %v704
    %v1958 = vunpack.c.l.b16 %v705
    %v1959 = vunpack.c.h.b16 %v705
    %v1960 = vunpack.c.l.b16 %v706
    %v1961 = vunpack.c.h.b16 %v706
    %v1962 = vunpack.c.l.b16 %v707
    %v1963 = vunpack.c.h.b16 %v707
    %v1964 = vunpack.c.l.b16 %v708
    %v1965 = vunpack.c.h.b16 %v708
    %v1966 = vunpack.c.l.b16 %v709
    %v1967 = vunpack.c.h.b16 %v709
    %v1968 = vunpack.c.l.b16 %v710
    %v1969 = vunpack.c.h.b16 %v710
    %v1970 = vunpack.c.l.b16 %v711
    %v1971 = vunpack.c.h.b16 %v711
    %v1972 = vunpack.c.l.b16 %v712
    %v1973 = vunpack.c.h.b16 %v712
    %v1974 = vunpack.c.l.b16 %v713
    %v1975 = vunpack.c.h.b16 %v713
    %v1976 = vunpack.c.l.b16 %v714
    %v1977 = vunpack.c.h.b16 %v714
    %v1978 = vunpack.c.l.b16 %v715
    %v1979 = vunpack.c.h.b16 %v715
    %v1980 = vunpack.c.l.b16 %v716
    %v1981 = vunpack.c.h.b16 %v716
    %v1982 = vunpack.c.l.b16 %v717
    %v1983 = vunpack.c.h.b16 %v717
    %v1984 = vunpack.c.l.b16 %v718
    %v1985 = vunpack.c.h.b16 %v718
    %v1986 = vunpack.c.l.b16 %v719
    %v1987 = vunpack.c.h.b16 %v719
    %v1988 = vunpack.c.l.b16 %v720
    %v1989 = vunpack.c.h.b16 %v720
    %v1990 = vunpack.c.l.b16 %v721
    %v1991 = vunpack.c.h.b16 %v721
    %v1992 = vunpack.c.l.b16 %v722
    %v1993 = vunpack.c.h.b16 %v722
    %v1994 = vunpack.c.l.b16 %v723
    %v1995 = vunpack.c.h.b16 %v723
    %v1996 = vunpack.c.l.b16 %v724
    %v1997 = vunpack.c.h.b16 %v724
    %v1998 = vunpack.c.l.b16 %v725
    %v1999 = vunpack.c.h.b16 %v725
    %v2000 = vunpack.c.l.b16 %v726
    %v2001 = vunpack.c.h.b16 %v726
    %v2002 = vunpack.c.l.b16 %v727
    %v2003 = vunpack.c.h.b16 %v727
    %v2004 = vunpack.c.l.b16 %v728
    %v2005 = vunpack.c.h.b16 %v728
    %v2006 = vunpack.c.l.b16 %v729
    %v2007 = vunpack.c.h.b16 %v729
    %v2008 = vunpack.c.l.b16 %v730
    %v2009 = vunpack.c.h.b16 %v730
    %v2010 = vunpack.c.l.b16 %v731
    %v2011 = vunpack.c.h.b16 %v731
    %v2012 = vunpack.c.l.b16 %v732
    %v2013 = vunpack.c.h.b16 %v732
    %v2014 = vunpack.c.l.b16 %v733
    %v2015 = vunpack.c.h.b16 %v733
    %v2016 = vunpack.c.l.b16 %v734
    %v2017 = vunpack.c.h.b16 %v734
    %v2018 = vunpack.c.l.b16 %v735
    %v2019 = vunpack.c.h.b16 %v735
    %v2020 = vunpack.c.l.b16 %v736
    %v2021 = vunpack.c.h.b16 %v736
    %v2022 = vunpack.c.l.b16 %v737
    %v2023 = vunpack.c.h.b16 %v737
    %v2024 = vunpack.c.l.b16 %v738
    %v2025 = vunpack.c.h.b16 %v738
    %v2026 = vunpack.c.l.b16 %v739
    %v2027 = vunpack.c.h.b16 %v739
    %v2028 = vunpack.c.l.b16 %v740
    %v2029 = vunpack.c.h.b16 %v740
    %v2030 = vunpack.c.l.b16 %v741
    %v2031 = vunpack.c.h.b16 %v741
    %v2032 = vunpack.c.l.b16 %v742
    %v2033 = vunpack.c.h.b16 %v742
    %v2034 = vunpack.c.l.b16 %v743
    %v2035 = vunpack.c.h.b16 %v743
    %v2036 = vunpack.c.l.b16 %v744
    %v2037 = vunpack.c.h.b16 %v744
    %v2038 = vunpack.c.l.b16 %v745
    %v2039 = vunpack.c.h.b16 %v745
    %v2040 = vunpack.c.l.b16 %v746
    %v2041 = vunpack.c.h.b16 %v746
    %v2042 = vunpack.c.l.b16 %v747
    %v2043 = vunpack.c.h.b16 %v747
    %v2044 = vunpack.c.l.b16 %v748
    %v2045 = vunpack.c.h.b16 %v748
    %v2046 = vunpack.c.l.b16 %v749
    %v2047 = vunpack.c.h.b16 %v749
    %v2048 = vunpack.c.l.b16 %v750
    %v2049 = vunpack.c.h.b16 %v750
    %v2050 = vunpack.c.l.b16 %v751
    %v2051 = vunpack.c.h.b16 %v751
    %v2052 = vunpack.c.l.b16 %v752
    %v2053 = vunpack.c.h.b16 %v752
    %v2054 = vunpack.c.l.b16 %v753
    %v2055 = vunpack.c.h.b16 %v753
    %v2056 = vunpack.c.l.b16 %v754
    %v2057 = vunpack.c.h.b16 %v754
    %v2058 = vunpack.c.l.b16 %v755
    %v2059 = vunpack.c.h.b16 %v755
    %v2060 = vunpack.c.l.b16 %v756
    %v2061 = vunpack.c.h.b16 %v756
    %v2062 = vunpack.c.l.b16 %v757
    %v2063 = vunpack.c.h.b16 %v757
    %v2064 = vunpack.c.l.b16 %v758
    %v2065 = vunpack.c.h.b16 %v758
    %v2066 = vunpack.c.l.b16 %v759
    %v2067 = vunpack.c.h.b16 %v759
    %v2068 = vunpack.c.l.b16 %v760
    %v2069 = vunpack.c.h.b16 %v760
    %v2070 = vunpack.c.l.b16 %v761
    %v2071 = vunpack.c.h.b16 %v761
    %v2072 = vunpack.c.l.b16 %v762
    %v2073 = vunpack.c.h.b16 %v762
    %v2074 = vunpack.c.l.b16 %v763
    %v2075 = vunpack.c.h.b16 %v763
    %v2076 = vunpack.c.l.b16 %v764
    %v2077 = vunpack.c.h.b16 %v764
    %v2078 = vunpack.c.l.b16 %v765
    %v2079 = vunpack.c.h.b16 %v765
    %v2080 = vunpack.c.l.b16 %v766
    %v2081 = vunpack.c.h.b16 %v766
    %v2082 = vunpack.c.l.b16 %v767
    %v2083 = vunpack.c.h.b16 %v767
    %v2084 = vunpack.c.l.b16 %v768
    %v2085 = vunpack.c.h.b16 %v768
    %v2086 = vunpack.c.l.b16 %v769
    %v2087 = vunpack.c.h.b16 %v769
    %v2088 = vunpack.c.l.b16 %v770
    %v2089 = vunpack.c.h.b16 %v770
    %v2090 = vunpack.c.l.b16 %v771
    %v2091 = vunpack.c.h.b16 %v771
    %v2092 = vunpack.c.l.b16 %v772
    %v2093 = vunpack.c.h.b16 %v772
    %v2094 = vunpack.c.l.b16 %v773
    %v2095 = vunpack.c.h.b16 %v773
    %v2096 = vunpack.c.l.b16 %v774
    %v2097 = vunpack.c.h.b16 %v774
    %v2098 = vunpack.c.l.b16 %v775
    %v2099 = vunpack.c.h.b16 %v775
    %v2100 = vunpack.c.l.b16 %v776
    %v2101 = vunpack.c.h.b16 %v776
    %v2102 = vunpack.c.l.b16 %v777
    %v2103 = vunpack.c.h.b16 %v777
    %v2104 = vunpack.c.l.b16 %v778
    %v2105 = vunpack.c.h.b16 %v778
    %v2106 = vunpack.c.l.b16 %v779
    %v2107 = vunpack.c.h.b16 %v779
    %v2108 = vunpack.c.l.b16 %v780
    %v2109 = vunpack.c.h.b16 %v780
    %v2110 = vunpack.c.l.b16 %v781
    %v2111 = vunpack.c.h.b16 %v781
    %v2112 = vunpack.c.l.b16 %v782
    %v2113 = vunpack.c.h.b16 %v782
    %v2114 = vunpack.c.l.b16 %v783
    %v2115 = vunpack.c.h.b16 %v783
    %v2116 = vunpack.c.l.b16 %v784
    %v2117 = vunpack.c.h.b16 %v784
    %v2118 = vunpack.c.l.b16 %v785
    %v2119 = vunpack.c.h.b16 %v785
    %v2120 = vunpack.c.l.b16 %v786
    %v2121 = vunpack.c.h.b16 %v786
    %v2122 = vunpack.c.l.b16 %v787
    %v2123 = vunpack.c.h.b16 %v787
    %v2124 = vunpack.c.l.b16 %v788
    %v2125 = vunpack.c.h.b16 %v788
    %v2126 = vunpack.c.l.b16 %v789
    %v2127 = vunpack.c.h.b16 %v789
    %v2128 = vunpack.c.l.b16 %v790
    %v2129 = vunpack.c.h.b16 %v790
    %v2130 = vunpack.c.l.b16 %v791
    %v2131 = vunpack.c.h.b16 %v791
    %v2132 = vunpack.c.l.b16 %v792
    %v2133 = vunpack.c.h.b16 %v792
    %v2134 = vunpack.c.l.b16 %v793
    %v2135 = vunpack.c.h.b16 %v793
    %v2136 = vunpack.c.l.b16 %v794
    %v2137 = vunpack.c.h.b16 %v794
    %v2138 = vunpack.c.l.b16 %v795
    %v2139 = vunpack.c.h.b16 %v795
    %v2140 = vunpack.c.l.b16 %v796
    %v2141 = vunpack.c.h.b16 %v796
    %v2142 = vunpack.c.l.b16 %v797
    %v2143 = vunpack.c.h.b16 %v797
    %v2144 = vunpack.c.l.b16 %v798
    %v2145 = vunpack.c.h.b16 %v798
    %v2146 = vunpack.c.l.b16 %v799
    %v2147 = vunpack.c.h.b16 %v799
    %v2148 = vunpack.c.l.b16 %v800
    %v2149 = vunpack.c.h.b16 %v800
    %v2150 = vunpack.c.l.b16 %v801
    %v2151 = vunpack.c.h.b16 %v801
    %v2152 = vunpack.c.l.b16 %v802
    %v2153 = vunpack.c.h.b16 %v802
    %v2154 = vunpack.c.l.b16 %v803
    %v2155 = vunpack.c.h.b16 %v803
    %v2156 = vunpack.c.l.b16 %v804
    %v2157 = vunpack.c.h.b16 %v804
    %v2158 = vunpack.c.l.b16 %v805
    %v2159 = vunpack.c.h.b16 %v805
    %v2160 = vunpack.c.l.b16 %v806
    %v2161 = vunpack.c.h.b16 %v806
    %v2162 = vunpack.c.l.b16 %v807
    %v2163 = vunpack.c.h.b16 %v807
    %v2164 = vunpack.c.l.b16 %v808
    %v2165 = vunpack.c.h.b16 %v808
    %v2166 = vunpack.c.l.b16 %v809
    %v2167 = vunpack.c.h.b16 %v809
    %v2168 = vunpack.c.l.b16 %v810
    %v2169 = vunpack.c.h.b16 %v810
    %v2170 = vunpack.c.l.b16 %v811
    %v2171 = vunpack.c.h.b16 %v811
    %v2172 = vunpack.c.l.b16 %v812
    %v2173 = vunpack.c.h.b16 %v812
    %v2174 = vunpack.c.l.b16 %v813
    %v2175 = vunpack.c.h.b16 %v813
    %v2176 = vunpack.c.l.b16 %v814
    %v2177 = vunpack.c.h.b16 %v814
    %v2178 = vunpack.c.l.b16 %v815
    %v2179 = vunpack.c.h.b16 %v815
    %v2180 = vunpack.c.l.b16 %v816
    %v2181 = vunpack.c.h.b16 %v816
    %v2182 = vunpack.c.l.b16 %v817
    %v2183 = vunpack.c.h.b16 %v817
    %v2184 = vunpack.c.l.b16 %v818
    %v2185 = vunpack.c.h.b16 %v818
    %v2186 = vunpack.c.l.b16 %v819
    %v2187 = vunpack.c.h.b16 %v819
    %v2188 = vunpack.c.l.b16 %v820
    %v2189 = vunpack.c.h.b16 %v820
    %v2190 = vunpack.c.l.b16 %v821
    %v2191 = vunpack.c.h.b16 %v821
    %v2192 = vunpack.c.l.b16 %v822
    %v2193 = vunpack.c.h.b16 %v822
    %v2194 = vunpack.c.l.b16 %v823
    %v2195 = vunpack.c.h.b16 %v823
    %v2196 = vunpack.c.l.b16 %v824
    %v2197 = vunpack.c.h.b16 %v824
    %v2198 = vunpack.c.l.b16 %v825
    %v2199 = vunpack.c.h.b16 %v825
    %v2200 = vunpack.c.l.b16 %v826
    %v2201 = vunpack.c.h.b16 %v826
    %v2202 = vunpack.c.l.b16 %v827
    %v2203 = vunpack.c.h.b16 %v827
    %v2204 = vunpack.c.l.b16 %v828
    %v2205 = vunpack.c.h.b16 %v828
    %v2206 = vunpack.c.l.b16 %v829
    %v2207 = vunpack.c.h.b16 %v829
    %v2208 = vunpack.c.l.b16 %v830
    %v2209 = vunpack.c.h.b16 %v830
    %v2210 = vunpack.c.l.b16 %v831
    %v2211 = vunpack.c.h.b16 %v831
    %v2212 = vunpack.c.l.b16 %v832
    %v2213 = vunpack.c.h.b16 %v832
    %v2214 = vunpack.c.l.b16 %v833
    %v2215 = vunpack.c.h.b16 %v833
    %v2216 = vunpack.c.l.b16 %v834
    %v2217 = vunpack.c.h.b16 %v834
    %v2218 = vunpack.c.l.b16 %v835
    %v2219 = vunpack.c.h.b16 %v835
    %v2220 = vunpack.c.l.b16 %v836
    %v2221 = vunpack.c.h.b16 %v836
    %v2222 = vunpack.c.l.b16 %v837
    %v2223 = vunpack.c.h.b16 %v837
    %v2224 = vunpack.c.l.b16 %v838
    %v2225 = vunpack.c.h.b16 %v838
    %v2226 = vunpack.c.l.b16 %v839
    %v2227 = vunpack.c.h.b16 %v839
    %v2228 = vunpack.c.l.b16 %v840
    %v2229 = vunpack.c.h.b16 %v840
    %v2230 = vunpack.c.l.b16 %v841
    %v2231 = vunpack.c.h.b16 %v841
    %v2232 = vunpack.c.l.b16 %v842
    %v2233 = vunpack.c.h.b16 %v842
    %v2234 = vunpack.c.l.b16 %v843
    %v2235 = vunpack.c.h.b16 %v843
    %v2236 = vunpack.c.l.b16 %v844
    %v2237 = vunpack.c.h.b16 %v844
    %v2238 = vunpack.c.l.b16 %v845
    %v2239 = vunpack.c.h.b16 %v845
    %v2240 = vunpack.c.l.b16 %v846
    %v2241 = vunpack.c.h.b16 %v846
    %v2242 = vunpack.c.l.b16 %v847
    %v2243 = vunpack.c.h.b16 %v847
    %v2244 = vunpack.c.l.b16 %v848
    %v2245 = vunpack.c.h.b16 %v848
    %v2246 = vunpack.c.l.b16 %v849
    %v2247 = vunpack.c.h.b16 %v849
    %v2248 = vunpack.c.l.b16 %v850
    %v2249 = vunpack.c.h.b16 %v850
    %v2250 = vunpack.c.l.b16 %v851
    %v2251 = vunpack.c.h.b16 %v851
    %v2252 = vunpack.c.l.b16 %v852
    %v2253 = vunpack.c.h.b16 %v852
    %v2254 = vunpack.c.l.b16 %v853
    %v2255 = vunpack.c.h.b16 %v853
    %v2256 = vunpack.c.l.b16 %v854
    %v2257 = vunpack.c.h.b16 %v854
    %v2258 = vunpack.c.l.b16 %v855
    %v2259 = vunpack.c.h.b16 %v855
    %v2260 = vunpack.c.l.b16 %v856
    %v2261 = vunpack.c.h.b16 %v856
    %v2262 = vunpack.c.l.b16 %v857
    %v2263 = vunpack.c.h.b16 %v857
    %v2264 = vunpack.c.l.b16 %v858
    %v2265 = vunpack.c.h.b16 %v858
    %v2266 = vunpack.c.l.b16 %v859
    %v2267 = vunpack.c.h.b16 %v859
    %v2268 = vunpack.c.l.b16 %v860
    %v2269 = vunpack.c.h.b16 %v860
    %v2270 = vunpack.c.l.b16 %v861
    %v2271 = vunpack.c.h.b16 %v861
    %v2272 = vunpack.c.l.b16 %v862
    %v2273 = vunpack.c.h.b16 %v862
    %v2274 = vunpack.c.l.b16 %v863
    %v2275 = vunpack.c.h.b16 %v863
    %v2276 = vunpack.c.l.b16 %v864
    %v2277 = vunpack.c.h.b16 %v864
    %v2278 = vunpack.c.l.b16 %v865
    %v2279 = vunpack.c.h.b16 %v865
    %v2280 = vunpack.c.l.b16 %v866
    %v2281 = vunpack.c.h.b16 %v866
    %v2282 = vunpack.c.l.b16 %v867
    %v2283 = vunpack.c.h.b16 %v867
    %v2284 = vunpack.c.l.b16 %v868
    %v2285 = vunpack.c.h.b16 %v868
    %v2286 = vunpack.c.l.b16 %v869
    %v2287 = vunpack.c.h.b16 %v869
    %v2288 = vunpack.c.l.b16 %v870
    %v2289 = vunpack.c.h.b16 %v870
    %v2290 = vunpack.c.l.b16 %v871
    %v2291 = vunpack.c.h.b16 %v871
    %v2292 = vunpack.c.l.b16 %v872
    %v2293 = vunpack.c.h.b16 %v872
    %v2294 = vunpack.c.l.b16 %v873
    %v2295 = vunpack.c.h.b16 %v873
    %v2296 = vunpack.c.l.b16 %v874
    %v2297 = vunpack.c.h.b16 %v874
    %v2298 = vunpack.c.l.b16 %v875
    %v2299 = vunpack.c.h.b16 %v875
    %v2300 = vunpack.c.l.b16 %v876
    %v2301 = vunpack.c.h.b16 %v876
    %v2302 = vunpack.c.l.b16 %v877
    %v2303 = vunpack.c.h.b16 %v877
    %v2304 = vunpack.c.l.b16 %v878
    %v2305 = vunpack.c.h.b16 %v878
    %v2306 = vunpack.c.l.b16 %v879
    %v2307 = vunpack.c.h.b16 %v879
    %v2308 = vunpack.c.l.b16 %v880
    %v2309 = vunpack.c.h.b16 %v880
    %v2310 = vunpack.c.l.b16 %v881
    %v2311 = vunpack.c.h.b16 %v881
    %v2312 = vunpack.c.l.b16 %v882
    %v2313 = vunpack.c.h.b16 %v882
    %v2314 = vunpack.c.l.b16 %v883
    %v2315 = vunpack.c.h.b16 %v883
    %v2316 = vunpack.c.l.b16 %v884
    %v2317 = vunpack.c.h.b16 %v884
    %v2318 = vunpack.c.l.b16 %v885
    %v2319 = vunpack.c.h.b16 %v885
    %v2320 = vunpack.c.l.b16 %v886
    %v2321 = vunpack.c.h.b16 %v886
    %v2322 = vunpack.c.l.b16 %v887
    %v2323 = vunpack.c.h.b16 %v887
    %v2324 = vunpack.c.l.b16 %v888
    %v2325 = vunpack.c.h.b16 %v888
    %v2326 = vunpack.c.l.b16 %v889
    %v2327 = vunpack.c.h.b16 %v889
    %v2328 = vunpack.c.l.b16 %v890
    %v2329 = vunpack.c.h.b16 %v890
    %v2330 = vunpack.c.l.b16 %v891
    %v2331 = vunpack.c.h.b16 %v891
    %v2332 = vunpack.c.l.b16 %v892
    %v2333 = vunpack.c.h.b16 %v892
    %v2334 = vunpack.c.l.b16 %v893
    %v2335 = vunpack.c.h.b16 %v893
    %v2336 = vunpack.c.l.b16 %v894
    %v2337 = vunpack.c.h.b16 %v894
    %v2338 = vunpack.c.l.b16 %v895
    %v2339 = vunpack.c.h.b16 %v895
    %v2340 = vunpack.c.l.b16 %v896
    %v2341 = vunpack.c.h.b16 %v896
    %v2342 = vunpack.c.l.b16 %v897
    %v2343 = vunpack.c.h.b16 %v897
    %v2344 = vunpack.c.l.b16 %v898
    %v2345 = vunpack.c.h.b16 %v898
    %v2346 = vunpack.c.l.b16 %v899
    %v2347 = vunpack.c.h.b16 %v899
    %v2348 = vunpack.c.l.b16 %v900
    %v2349 = vunpack.c.h.b16 %v900
    %v2350 = vunpack.c.l.b16 %v901
    %v2351 = vunpack.c.h.b16 %v901
    %v2352 = vunpack.c.l.b16 %v902
    %v2353 = vunpack.c.h.b16 %v902
    %v2354 = vunpack.c.l.b16 %v903
    %v2355 = vunpack.c.h.b16 %v903
    %v2356 = vunpack.c.l.b16 %v904
    %v2357 = vunpack.c.h.b16 %v904
    %v2358 = vunpack.c.l.b16 %v905
    %v2359 = vunpack.c.h.b16 %v905
    %v2360 = vunpack.c.l.b16 %v906
    %v2361 = vunpack.c.h.b16 %v906
    %v2362 = vunpack.c.l.b16 %v907
    %v2363 = vunpack.c.h.b16 %v907
    %v2364 = vunpack.c.l.b16 %v908
    %v2365 = vunpack.c.h.b16 %v908
    %v2366 = vunpack.c.l.b16 %v909
    %v2367 = vunpack.c.h.b16 %v909
    %v2368 = vunpack.c.l.b16 %v910
    %v2369 = vunpack.c.h.b16 %v910
    %v2370 = vunpack.c.l.b16 %v911
    %v2371 = vunpack.c.h.b16 %v911
    %v2372 = vunpack.c.l.b16 %v912
    %v2373 = vunpack.c.h.b16 %v912
    %v2374 = vunpack.c.l.b16 %v913
    %v2375 = vunpack.c.h.b16 %v913
    %v2376 = vunpack.c.l.b16 %v914
    %v2377 = vunpack.c.h.b16 %v914
    %v2378 = vunpack.c.l.b16 %v915
    %v2379 = vunpack.c.h.b16 %v915
    %v2380 = vunpack.c.l.b16 %v916
    %v2381 = vunpack.c.h.b16 %v916
    %v2382 = vunpack.c.l.b16 %v917
    %v2383 = vunpack.c.h.b16 %v917
    %v2384 = vunpack.c.l.b16 %v918
    %v2385 = vunpack.c.h.b16 %v918
    %v2386 = vunpack.c.l.b16 %v919
    %v2387 = vunpack.c.h.b16 %v919
    %v2388 = vunpack.c.l.b16 %v920
    %v2389 = vunpack.c.h.b16 %v920
    %v2390 = vunpack.c.l.b16 %v921
    %v2391 = vunpack.c.h.b16 %v921
    %v2392 = vunpack.c.l.b16 %v922
    %v2393 = vunpack.c.h.b16 %v922
    %v2394 = vunpack.c.l.b16 %v923
    %v2395 = vunpack.c.h.b16 %v923
    %v2396 = vunpack.c.l.b16 %v924
    %v2397 = vunpack.c.h.b16 %v924
    %v2398 = vunpack.c.l.b16 %v925
    %v2399 = vunpack.c.h.b16 %v925
    %v2400 = vunpack.c.l.b16 %v926
    %v2401 = vunpack.c.h.b16 %v926
    %v2402 = vunpack.c.l.b16 %v927
    %v2403 = vunpack.c.h.b16 %v927
    %v2404 = vunpack.c.l.b16 %v928
    %v2405 = vunpack.c.h.b16 %v928
    %v2406 = vunpack.c.l.b16 %v929
    %v2407 = vunpack.c.h.b16 %v929
    %v2408 = vunpack.c.l.b16 %v930
    %v2409 = vunpack.c.h.b16 %v930
    %v2410 = vunpack.c.l.b16 %v931
    %v2411 = vunpack.c.h.b16 %v931
    %v2412 = vunpack.c.l.b16 %v932
    %v2413 = vunpack.c.h.b16 %v932
    %v2414 = vunpack.c.l.b16 %v933
    %v2415 = vunpack.c.h.b16 %v933
    %v2416 = vunpack.c.l.b16 %v934
    %v2417 = vunpack.c.h.b16 %v934
    %v2418 = vunpack.c.l.b16 %v935
    %v2419 = vunpack.c.h.b16 %v935
    %v2420 = vunpack.c.l.b16 %v936
    %v2421 = vunpack.c.h.b16 %v936
    %v2422 = vunpack.c.l.b16 %v937
    %v2423 = vunpack.c.h.b16 %v937
    %v2424 = vunpack.c.l.b16 %v938
    %v2425 = vunpack.c.h.b16 %v938
    %v2426 = vunpack.c.l.b16 %v939
    %v2427 = vunpack.c.h.b16 %v939
    %v2428 = vunpack.c.l.b16 %v940
    %v2429 = vunpack.c.h.b16 %v940
    %v2430 = vunpack.c.l.b16 %v941
    %v2431 = vunpack.c.h.b16 %v941
    %v2432 = vunpack.c.l.b16 %v942
    %v2433 = vunpack.c.h.b16 %v942
    %v2434 = vunpack.c.l.b16 %v943
    %v2435 = vunpack.c.h.b16 %v943
    %v2436 = vunpack.c.l.b16 %v944
    %v2437 = vunpack.c.h.b16 %v944
    %v2438 = vunpack.c.l.b16 %v945
    %v2439 = vunpack.c.h.b16 %v945
    %v2440 = vunpack.c.l.b16 %v946
    %v2441 = vunpack.c.h.b16 %v946
    %v2442 = vunpack.c.l.b16 %v947
    %v2443 = vunpack.c.h.b16 %v947
    %v2444 = vunpack.c.l.b16 %v948
    %v2445 = vunpack.c.h.b16 %v948
    %v2446 = vunpack.c.l.b16 %v949
    %v2447 = vunpack.c.h.b16 %v949
    %v2448 = vunpack.c.l.b16 %v950
    %v2449 = vunpack.c.h.b16 %v950
    %v2450 = vunpack.c.l.b16 %v951
    %v2451 = vunpack.c.h.b16 %v951
    %v2452 = vunpack.c.l.b16 %v952
    %v2453 = vunpack.c.h.b16 %v952
    %v2454 = vunpack.c.l.b16 %v953
    %v2455 = vunpack.c.h.b16 %v953
    %v2456 = vunpack.c.l.b16 %v954
    %v2457 = vunpack.c.h.b16 %v954
    %v2458 = vunpack.c.l.b16 %v955
    %v2459 = vunpack.c.h.b16 %v955
    %v2460 = vunpack.c.l.b16 %v956
    %v2461 = vunpack.c.h.b16 %v956
    %v2462 = vunpack.c.l.b16 %v957
    %v2463 = vunpack.c.h.b16 %v957
    %v2464 = vunpack.c.l.b16 %v958
    %v2465 = vunpack.c.h.b16 %v958
    %v2466 = vunpack.c.l.b16 %v959
    %v2467 = vunpack.c.h.b16 %v959
    %v2468 = vunpack.c.l.b16 %v960
    %v2469 = vunpack.c.h.b16 %v960
    %v2470 = vunpack.c.l.b16 %v961
    %v2471 = vunpack.c.h.b16 %v961
    %v2472 = vunpack.c.l.b16 %v962
    %v2473 = vunpack.c.h.b16 %v962
    %v2474 = vunpack.c.l.b16 %v963
    %v2475 = vunpack.c.h.b16 %v963
    %v2476 = vunpack.c.l.b16 %v964
    %v2477 = vunpack.c.h.b16 %v964
    %v2478 = vunpack.c.l.b16 %v965
    %v2479 = vunpack.c.h.b16 %v965
    %v2480 = vunpack.c.l.b16 %v966
    %v2481 = vunpack.c.h.b16 %v966
    %v2482 = vunpack.c.l.b16 %v967
    %v2483 = vunpack.c.h.b16 %v967
    %v2484 = vunpack.c.l.b16 %v968
    %v2485 = vunpack.c.h.b16 %v968
    %v2486 = vunpack.c.l.b16 %v969
    %v2487 = vunpack.c.h.b16 %v969
    %v2488 = vunpack.c.l.b16 %v970
    %v2489 = vunpack.c.h.b16 %v970
    %v2490 = vunpack.c.l.b16 %v971
    %v2491 = vunpack.c.h.b16 %v971
    %v2492 = vunpack.c.l.b16 %v972
    %v2493 = vunpack.c.h.b16 %v972
    %v2494 = vunpack.c.l.b16 %v973
    %v2495 = vunpack.c.h.b16 %v973
    %v2496 = vunpack.c.l.b16 %v974
    %v2497 = vunpack.c.h.b16 %v974
    %v2498 = vunpack.c.l.b16 %v975
    %v2499 = vunpack.c.h.b16 %v975
    %v2500 = vunpack.c.l.b16 %v976
    %v2501 = vunpack.c.h.b16 %v976
    %v2502 = vunpack.c.l.b16 %v977
    %v2503 = vunpack.c.h.b16 %v977
    %v2504 = vunpack.c.l.b16 %v978
    %v2505 = vunpack.c.h.b16 %v978
    %v2506 = vunpack.c.l.b16 %v979
    %v2507 = vunpack.c.h.b16 %v979
    %v2508 = vunpack.c.l.b16 %v980
    %v2509 = vunpack.c.h.b16 %v980
    %v2510 = vunpack.c.l.b16 %v981
    %v2511 = vunpack.c.h.b16 %v981
    %v2512 = vunpack.c.l.b16 %v982
    %v2513 = vunpack.c.h.b16 %v982
    %v2514 = vunpack.c.l.b16 %v983
    %v2515 = vunpack.c.h.b16 %v983
    %v2516 = vunpack.c.l.b16 %v984
    %v2517 = vunpack.c.h.b16 %v984
    %v2518 = vunpack.c.l.b16 %v985
    %v2519 = vunpack.c.h.b16 %v985
    %v2520 = vunpack.c.l.b16 %v986
    %v2521 = vunpack.c.h.b16 %v986
    %v2522 = vunpack.c.l.b16 %v987
    %v2523 = vunpack.c.h.b16 %v987
    %v2524 = vunpack.c.l.b16 %v988
    %v2525 = vunpack.c.h.b16 %v988
    %v2526 = vunpack.c.l.b16 %v989
    %v2527 = vunpack.c.h.b16 %v989
    %v2528 = vunpack.c.l.b16 %v990
    %v2529 = vunpack.c.h.b16 %v990
    %v2530 = vunpack.c.l.b16 %v991
    %v2531 = vunpack.c.h.b16 %v991
    %v2532 = vunpack.c.l.b16 %v992
    %v2533 = vunpack.c.h.b16 %v992
    %v2534 = vunpack.c.l.b16 %v993
    %v2535 = vunpack.c.h.b16 %v993
    %v2536 = vunpack.c.l.b16 %v994
    %v2537 = vunpack.c.h.b16 %v994
    %v2538 = vunpack.c.l.b16 %v995
    %v2539 = vunpack.c.h.b16 %v995
    %v2540 = vunpack.c.l.b16 %v996
    %v2541 = vunpack.c.h.b16 %v996
    %v2542 = vunpack.c.l.b16 %v997
    %v2543 = vunpack.c.h.b16 %v997
    %v2544 = vunpack.c.l.b16 %v998
    %v2545 = vunpack.c.h.b16 %v998
    %v2546 = vunpack.c.l.b16 %v999
    %v2547 = vunpack.c.h.b16 %v999
    %v2548 = vunpack.c.l.b16 %v1000
    %v2549 = vunpack.c.h.b16 %v1000
    %v2550 = vunpack.c.l.b16 %v1001
    %v2551 = vunpack.c.h.b16 %v1001
    %v2552 = vunpack.c.l.b16 %v1002
    %v2553 = vunpack.c.h.b16 %v1002
    %v2554 = vunpack.c.l.b16 %v1003
    %v2555 = vunpack.c.h.b16 %v1003
    %v2556 = vunpack.c.l.b16 %v1004
    %v2557 = vunpack.c.h.b16 %v1004
    %v2558 = vunpack.c.l.b16 %v1005
    %v2559 = vunpack.c.h.b16 %v1005
    %v2560 = vunpack.c.l.b16 %v1006
    %v2561 = vunpack.c.h.b16 %v1006
    %v2562 = vunpack.c.l.b16 %v1007
    %v2563 = vunpack.c.h.b16 %v1007
    %v2564 = vunpack.c.l.b16 %v1008
    %v2565 = vunpack.c.h.b16 %v1008
    %v2566 = vunpack.c.l.b16 %v1009
    %v2567 = vunpack.c.h.b16 %v1009
    %v2568 = vunpack.c.l.b16 %v1010
    %v2569 = vunpack.c.h.b16 %v1010
    %v2570 = vunpack.c.l.b16 %v1011
    %v2571 = vunpack.c.h.b16 %v1011
    %v2572 = vunpack.c.l.b16 %v1012
    %v2573 = vunpack.c.h.b16 %v1012
    %v2574 = vunpack.c.l.b16 %v1013
    %v2575 = vunpack.c.h.b16 %v1013
    %v2576 = vunpack.c.l.b16 %v1014
    %v2577 = vunpack.c.h.b16 %v1014
    %v2578 = vunpack.c.l.b16 %v1015
    %v2579 = vunpack.c.h.b16 %v1015
    %v2580 = vunpack.c.l.b16 %v1016
    %v2581 = vunpack.c.h.b16 %v1016
    %v2582 = vunpack.c.l.b16 %v1017
    %v2583 = vunpack.c.h.b16 %v1017
    %v2584 = vunpack.c.l.b16 %v1018
    %v2585 = vunpack.c.h.b16 %v1018
    %v2586 = vunpack.c.l.b16 %v1019
    %v2587 = vunpack.c.h.b16 %v1019
    %v2588 = vunpack.c.l.b16 %v1020
    %v2589 = vunpack.c.h.b16 %v1020
    %v2590 = vunpack.c.l.b16 %v1021
    %v2591 = vunpack.c.h.b16 %v1021
    %v2592 = vunpack.c.l.b16 %v1022
    %v2593 = vunpack.c.h.b16 %v1022
    %v2594 = vunpack.c.l.b16 %v1023
    %v2595 = vunpack.c.h.b16 %v1023
    %v2596 = vunpack.c.l.b16 %v1024
    %v2597 = vunpack.c.h.b16 %v1024
    %v2598 = vunpack.c.l.b16 %v1025
    %v2599 = vunpack.c.h.b16 %v1025
    %v2600 = vunpack.c.l.b16 %v1026
    %v2601 = vunpack.c.h.b16 %v1026
    %v2602 = vunpack.c.l.b16 %v1027
    %v2603 = vunpack.c.h.b16 %v1027
    %v2604 = vunpack.c.l.b16 %v1028
    %v2605 = vunpack.c.h.b16 %v1028
    %v2606 = vunpack.c.l.b16 %v1029
    %v2607 = vunpack.c.h.b16 %v1029
    %v2608 = vunpack.c.l.b16 %v1030
    %v2609 = vunpack.c.h.b16 %v1030
    %v2610 = vunpack.c.l.b16 %v1031
    %v2611 = vunpack.c.h.b16 %v1031
    %v2612 = vunpack.c.l.b16 %v1032
    %v2613 = vunpack.c.h.b16 %v1032
    %v2614 = vunpack.c.l.b16 %v1033
    %v2615 = vunpack.c.h.b16 %v1033
    %v2616 = vunpack.c.l.b16 %v1034
    %v2617 = vunpack.c.h.b16 %v1034
    %v2618 = vunpack.c.l.b16 %v1035
    %v2619 = vunpack.c.h.b16 %v1035
    %v2620 = vunpack.c.l.b16 %v1036
    %v2621 = vunpack.c.h.b16 %v1036
    %v2622 = vunpack.c.l.b16 %v1037
    %v2623 = vunpack.c.h.b16 %v1037
    %v2624 = vunpack.c.l.b16 %v1038
    %v2625 = vunpack.c.h.b16 %v1038
    %v2626 = vunpack.c.l.b16 %v1039
    %v2627 = vunpack.c.h.b16 %v1039
    %v2628 = vunpack.c.l.b16 %v1040
    %v2629 = vunpack.c.h.b16 %v1040
    %v2630 = vunpack.c.l.b16 %v1041
    %v2631 = vunpack.c.h.b16 %v1041
    %v2632 = vunpack.c.l.b16 %v1042
    %v2633 = vunpack.c.h.b16 %v1042
    %v2634 = vunpack.c.l.b16 %v1043
    %v2635 = vunpack.c.h.b16 %v1043
    %v2636 = vunpack.c.l.b16 %v1044
    %v2637 = vunpack.c.h.b16 %v1044
    %v2638 = vunpack.c.l.b16 %v1045
    %v2639 = vunpack.c.h.b16 %v1045
    %v2640 = vunpack.c.l.b16 %v1046
    %v2641 = vunpack.c.h.b16 %v1046
    %v2642 = vunpack.c.l.b16 %v1047
    %v2643 = vunpack.c.h.b16 %v1047
    %v2644 = vunpack.c.l.b16 %v1048
    %v2645 = vunpack.c.h.b16 %v1048
    %v2646 = vunpack.c.l.b16 %v1049
    %v2647 = vunpack.c.h.b16 %v1049
    %v2648 = vunpack.c.l.b16 %v1050
    %v2649 = vunpack.c.h.b16 %v1050
    %v2650 = vunpack.c.l.b16 %v1051
    %v2651 = vunpack.c.h.b16 %v1051
    %v2652 = vunpack.c.l.b16 %v1052
    %v2653 = vunpack.c.h.b16 %v1052
    %v2654 = vunpack.c.l.b16 %v1053
    %v2655 = vunpack.c.h.b16 %v1053
    %v2656 = vunpack.c.l.b16 %v1054
    %v2657 = vunpack.c.h.b16 %v1054
    %v2658 = vunpack.c.l.b16 %v1055
    %v2659 = vunpack.c.h.b16 %v1055
    %v2660 = vunpack.c.l.b16 %v1056
    %v2661 = vunpack.c.h.b16 %v1056
    %v2662 = vunpack.c.l.b16 %v1057
    %v2663 = vunpack.c.h.b16 %v1057
    %v2664 = vunpack.c.l.b16 %v1058
    %v2665 = vunpack.c.h.b16 %v1058
    %v2666 = vunpack.c.l.b16 %v1059
    %v2667 = vunpack.c.h.b16 %v1059
    %v2668 = vunpack.c.l.b16 %v1060
    %v2669 = vunpack.c.h.b16 %v1060
    %v2670 = vunpack.c.l.b16 %v1061
    %v2671 = vunpack.c.h.b16 %v1061
    %v2672 = vunpack.c.l.b16 %v1062
    %v2673 = vunpack.c.h.b16 %v1062
    %v2674 = vunpack.c.l.b16 %v1063
    %v2675 = vunpack.c.h.b16 %v1063
    %v2676 = vunpack.c.l.b16 %v1064
    %v2677 = vunpack.c.h.b16 %v1064
    %v2678 = vunpack.c.l.b16 %v1065
    %v2679 = vunpack.c.h.b16 %v1065
    %v2680 = vunpack.c.l.b16 %v1066
    %v2681 = vunpack.c.h.b16 %v1066
    %v2682 = vunpack.c.l.b16 %v1067
    %v2683 = vunpack.c.h.b16 %v1067
    %v2684 = vunpack.c.l.b16 %v1068
    %v2685 = vunpack.c.h.b16 %v1068
    %v2686 = vunpack.c.l.b16 %v1069
    %v2687 = vunpack.c.h.b16 %v1069
    %v2688 = vunpack.c.l.b16 %v1070
    %v2689 = vunpack.c.h.b16 %v1070
    %v2690 = vunpack.c.l.b16 %v1071
    %v2691 = vunpack.c.h.b16 %v1071
    %v2692 = vunpack.c.l.b16 %v1072
    %v2693 = vunpack.c.h.b16 %v1072
    %v2694 = vunpack.c.l.b16 %v1073
    %v2695 = vunpack.c.h.b16 %v1073
    %v2696 = vunpack.c.l.b16 %v1074
    %v2697 = vunpack.c.h.b16 %v1074
    %v2698 = vunpack.c.l.b16 %v1075
    %v2699 = vunpack.c.h.b16 %v1075
    %v2700 = vunpack.c.l.b16 %v1076
    %v2701 = vunpack.c.h.b16 %v1076
    %v2702 = vunpack.c.l.b16 %v1077
    %v2703 = vunpack.c.h.b16 %v1077
    %v2704 = vunpack.c.l.b16 %v1078
    %v2705 = vunpack.c.h.b16 %v1078
    %v2706 = vunpack.c.l.b16 %v1079
    %v2707 = vunpack.c.h.b16 %v1079
    %v2708 = vunpack.c.l.b16 %v1080
    %v2709 = vunpack.c.h.b16 %v1080
    %v2710 = vunpack.c.l.b16 %v1081
    %v2711 = vunpack.c.h.b16 %v1081
    %v2712 = vunpack.c.l.b16 %v1082
    %v2713 = vunpack.c.h.b16 %v1082
    %v2714 = vunpack.c.l.b16 %v1083
    %v2715 = vunpack.c.h.b16 %v1083
    %v2716 = vunpack.c.l.b16 %v1084
    %v2717 = vunpack.c.h.b16 %v1084
    %v2718 = vunpack.c.l.b16 %v1085
    %v2719 = vunpack.c.h.b16 %v1085
    %v2720 = vpack.c.b16 %v1704, %v1696
    %v2721 = vpack.c.b16 %v1705, %v1697
    %v2722 = vpack.c.b16 %v1706, %v1698
    %v2723 = vpack.c.b16 %v1707, %v1699
    %v2724 = vpack.c.b16 %v1708, %v1700
    %v2725 = vpack.c.b16 %v1709, %v1701
    %v2726 = vpack.c.b16 %v1710, %v1702
    %v2727 = vpack.c.b16 %v1711, %v1703
    %v2728 = vpack.c.b16 %v1720, %v1712
    %v2729 = vpack.c.b16 %v1721, %v1713
    %v2730 = vpack.c.b16 %v1722, %v1714
    %v2731 = vpack.c.b16 %v1723, %v1715
    %v2732 = vpack.c.b16 %v1724, %v1716
    %v2733 = vpack.c.b16 %v1725, %v1717
    %v2734 = vpack.c.b16 %v1726, %v1718
    %v2735 = vpack.c.b16 %v1727, %v1719
    %v2736 = vpack.c.b16 %v1736, %v1728
    %v2737 = vpack.c.b16 %v1737, %v1729
    %v2738 = vpack.c.b16 %v1738, %v1730
    %v2739 = vpack.c.b16 %v1739, %v1731
    %v2740 = vpack.c.b16 %v1740, %v1732
    %v2741 = vpack.c.b16 %v1741, %v1733
    %v2742 = vpack.c.b16 %v1742, %v1734
    %v2743 = vpack.c.b16 %v1743, %v1735
    %v2744 = vpack.c.b16 %v1752, %v1744
    %v2745 = vpack.c.b16 %v1753, %v1745
    %v2746 = vpack.c.b16 %v1754, %v1746
    %v2747 = vpack.c.b16 %v1755, %v1747
    %v2748 = vpack.c.b16 %v1756, %v1748
    %v2749 = vpack.c.b16 %v1757, %v1749
    %v2750 = vpack.c.b16 %v1758, %v1750
    %v2751 = vpack.c.b16 %v1759, %v1751
    %v2752 = vpack.c.b16 %v1768, %v1760
    %v2753 = vpack.c.b16 %v1769, %v1761
    %v2754 = vpack.c.b16 %v1770, %v1762
    %v2755 = vpack.c.b16 %v1771, %v1763
    %v2756 = vpack.c.b16 %v1772, %v1764
    %v2757 = vpack.c.b16 %v1773, %v1765
    %v2758 = vpack.c.b16 %v1774, %v1766
    %v2759 = vpack.c.b16 %v1775, %v1767
    %v2760 = vpack.c.b16 %v1784, %v1776
    %v2761 = vpack.c.b16 %v1785, %v1777
    %v2762 = vpack.c.b16 %v1786, %v1778
    %v2763 = vpack.c.b16 %v1787, %v1779
    %v2764 = vpack.c.b16 %v1788, %v1780
    %v2765 = vpack.c.b16 %v1789, %v1781
    %v2766 = vpack.c.b16 %v1790, %v1782
    %v2767 = vpack.c.b16 %v1791, %v1783
    %v2768 = vpack.c.b16 %v1800, %v1792
    %v2769 = vpack.c.b16 %v1801, %v1793
    %v2770 = vpack.c.b16 %v1802, %v1794
    %v2771 = vpack.c.b16 %v1803, %v1795
    %v2772 = vpack.c.b16 %v1804, %v1796
    %v2773 = vpack.c.b16 %v1805, %v1797
    %v2774 = vpack.c.b16 %v1806, %v1798
    %v2775 = vpack.c.b16 %v1807, %v1799
    %v2776 = vpack.c.b16 %v1816, %v1808
    %v2777 = vpack.c.b16 %v1817, %v1809
    %v2778 = vpack.c.b16 %v1818, %v1810
    %v2779 = vpack.c.b16 %v1819, %v1811
    %v2780 = vpack.c.b16 %v1820, %v1812
    %v2781 = vpack.c.b16 %v1821, %v1813
    %v2782 = vpack.c.b16 %v1822, %v1814
    %v2783 = vpack.c.b16 %v1823, %v1815
    %v2784 = vpack.c.b16 %v1832, %v1824
    %v2785 = vpack.c.b16 %v1833, %v1825
    %v2786 = vpack.c.b16 %v1834, %v1826
    %v2787 = vpack.c.b16 %v1835, %v1827
    %v2788 = vpack.c.b16 %v1836, %v1828
    %v2789 = vpack.c.b16 %v1837, %v1829
    %v2790 = vpack.c.b16 %v1838, %v1830
    %v2791 = vpack.c.b16 %v1839, %v1831
    %v2792 = vpack.c.b16 %v1848, %v1840
    %v2793 = vpack.c.b16 %v1849, %v1841
    %v2794 = vpack.c.b16 %v1850, %v1842
    %v2795 = vpack.c.b16 %v1851, %v1843
    %v2796 = vpack.c.b16 %v1852, %v1844
    %v2797 = vpack.c.b16 %v1853, %v1845
    %v2798 = vpack.c.b16 %v1854, %v1846
    %v2799 = vpack.c.b16 %v1855, %v1847
    %v2800 = vpack.c.b16 %v1864, %v1856
    %v2801 = vpack.c.b16 %v1865, %v1857
    %v2802 = vpack.c.b16 %v1866, %v1858
    %v2803 = vpack.c.b16 %v1867, %v1859
    %v2804 = vpack.c.b16 %v1868, %v1860
    %v2805 = vpack.c.b16 %v1869, %v1861
    %v2806 = vpack.c.b16 %v1870, %v1862
    %v2807 = vpack.c.b16 %v1871, %v1863
    %v2808 = vpack.c.b16 %v1880, %v1872
    %v2809 = vpack.c.b16 %v1881, %v1873
    %v2810 = vpack.c.b16 %v1882, %v1874
    %v2811 = vpack.c.b16 %v1883, %v1875
    %v2812 = vpack.c.b16 %v1884, %v1876
    %v2813 = vpack.c.b16 %v1885, %v1877
    %v2814 = vpack.c.b16 %v1886, %v1878
    %v2815 = vpack.c.b16 %v1887, %v1879
    %v2816 = vpack.c.b16 %v1896, %v1888
    %v2817 = vpack.c.b16 %v1897, %v1889
    %v2818 = vpack.c.b16 %v1898, %v1890
    %v2819 = vpack.c.b16 %v1899, %v1891
    %v2820 = vpack.c.b16 %v1900, %v1892
    %v2821 = vpack.c.b16 %v1901, %v1893
    %v2822 = vpack.c.b16 %v1902, %v1894
    %v2823 = vpack.c.b16 %v1903, %v1895
    %v2824 = vpack.c.b16 %v1912, %v1904
    %v2825 = vpack.c.b16 %v1913, %v1905
    %v2826 = vpack.c.b16 %v1914, %v1906
    %v2827 = vpack.c.b16 %v1915, %v1907
    %v2828 = vpack.c.b16 %v1916, %v1908
    %v2829 = vpack.c.b16 %v1917, %v1909
    %v2830 = vpack.c.b16 %v1918, %v1910
    %v2831 = vpack.c.b16 %v1919, %v1911
    %v2832 = vpack.c.b16 %v1928, %v1920
    %v2833 = vpack.c.b16 %v1929, %v1921
    %v2834 = vpack.c.b16 %v1930, %v1922
    %v2835 = vpack.c.b16 %v1931, %v1923
    %v2836 = vpack.c.b16 %v1932, %v1924
    %v2837 = vpack.c.b16 %v1933, %v1925
    %v2838 = vpack.c.b16 %v1934, %v1926
    %v2839 = vpack.c.b16 %v1935, %v1927
    %v2840 = vpack.c.b16 %v1944, %v1936
    %v2841 = vpack.c.b16 %v1945, %v1937
    %v2842 = vpack.c.b16 %v1946, %v1938
    %v2843 = vpack.c.b16 %v1947, %v1939
    %v2844 = vpack.c.b16 %v1948, %v1940
    %v2845 = vpack.c.b16 %v1949, %v1941
    %v2846 = vpack.c.b16 %v1950, %v1942
    %v2847 = vpack.c.b16 %v1951, %v1943
    %v2848 = vpack.c.b16 %v1960, %v1952
    %v2849 = vpack.c.b16 %v1961, %v1953
    %v2850 = vpack.c.b16 %v1962, %v1954
    %v2851 = vpack.c.b16 %v1963, %v1955
    %v2852 = vpack.c.b16 %v1964, %v1956
    %v2853 = vpack.c.b16 %v1965, %v1957
    %v2854 = vpack.c.b16 %v1966, %v1958
    %v2855 = vpack.c.b16 %v1967, %v1959
    %v2856 = vpack.c.b16 %v1976, %v1968
    %v2857 = vpack.c.b16 %v1977, %v1969
    %v2858 = vpack.c.b16 %v1978, %v1970
    %v2859 = vpack.c.b16 %v1979, %v1971
    %v2860 = vpack.c.b16 %v1980, %v1972
    %v2861 = vpack.c.b16 %v1981, %v1973
    %v2862 = vpack.c.b16 %v1982, %v1974
    %v2863 = vpack.c.b16 %v1983, %v1975
    %v2864 = vpack.c.b16 %v1992, %v1984
    %v2865 = vpack.c.b16 %v1993, %v1985
    %v2866 = vpack.c.b16 %v1994, %v1986
    %v2867 = vpack.c.b16 %v1995, %v1987
    %v2868 = vpack.c.b16 %v1996, %v1988
    %v2869 = vpack.c.b16 %v1997, %v1989
    %v2870 = vpack.c.b16 %v1998, %v1990
    %v2871 = vpack.c.b16 %v1999, %v1991
    %v2872 = vpack.c.b16 %v2008, %v2000
    %v2873 = vpack.c.b16 %v2009, %v2001
    %v2874 = vpack.c.b16 %v2010, %v2002
    %v2875 = vpack.c.b16 %v2011, %v2003
    %v2876 = vpack.c.b16 %v2012, %v2004
    %v2877 = vpack.c.b16 %v2013, %v2005
    %v2878 = vpack.c.b16 %v2014, %v2006
    %v2879 = vpack.c.b16 %v2015, %v2007
    %v2880 = vpack.c.b16 %v2024, %v2016
    %v2881 = vpack.c.b16 %v2025, %v2017
    %v2882 = vpack.c.b16 %v2026, %v2018
    %v2883 = vpack.c.b16 %v2027, %v2019
    %v2884 = vpack.c.b16 %v2028, %v2020
    %v2885 = vpack.c.b16 %v2029, %v2021
    %v2886 = vpack.c.b16 %v2030, %v2022
    %v2887 = vpack.c.b16 %v2031, %v2023
    %v2888 = vpack.c.b16 %v2040, %v2032
    %v2889 = vpack.c.b16 %v2041, %v2033
    %v2890 = vpack.c.b16 %v2042, %v2034
    %v2891 = vpack.c.b16 %v2043, %v2035
    %v2892 = vpack.c.b16 %v2044, %v2036
    %v2893 = vpack.c.b16 %v2045, %v2037
    %v2894 = vpack.c.b16 %v2046, %v2038
    %v2895 = vpack.c.b16 %v2047, %v2039
    %v2896 = vpack.c.b16 %v2056, %v2048
    %v2897 = vpack.c.b16 %v2057, %v2049
    %v2898 = vpack.c.b16 %v2058, %v2050
    %v2899 = vpack.c.b16 %v2059, %v2051
    %v2900 = vpack.c.b16 %v2060, %v2052
    %v2901 = vpack.c.b16 %v2061, %v2053
    %v2902 = vpack.c.b16 %v2062, %v2054
    %v2903 = vpack.c.b16 %v2063, %v2055
    %v2904 = vpack.c.b16 %v2072, %v2064
    %v2905 = vpack.c.b16 %v2073, %v2065
    %v2906 = vpack.c.b16 %v2074, %v2066
    %v2907 = vpack.c.b16 %v2075, %v2067
    %v2908 = vpack.c.b16 %v2076, %v2068
    %v2909 = vpack.c.b16 %v2077, %v2069
    %v2910 = vpack.c.b16 %v2078, %v2070
    %v2911 = vpack.c.b16 %v2079, %v2071
    %v2912 = vpack.c.b16 %v2088, %v2080
    %v2913 = vpack.c.b16 %v2089, %v2081
    %v2914 = vpack.c.b16 %v2090, %v2082
    %v2915 = vpack.c.b16 %v2091, %v2083
    %v2916 = vpack.c.b16 %v2092, %v2084
    %v2917 = vpack.c.b16 %v2093, %v2085
    %v2918 = vpack.c.b16 %v2094, %v2086
    %v2919 = vpack.c.b16 %v2095, %v2087
    %v2920 = vpack.c.b16 %v2104, %v2096
    %v2921 = vpack.c.b16 %v2105, %v2097
    %v2922 = vpack.c.b16 %v2106, %v2098
    %v2923 = vpack.c.b16 %v2107, %v2099
    %v2924 = vpack.c.b16 %v2108, %v2100
    %v2925 = vpack.c.b16 %v2109, %v2101
    %v2926 = vpack.c.b16 %v2110, %v2102
    %v2927 = vpack.c.b16 %v2111, %v2103
    %v2928 = vpack.c.b16 %v2120, %v2112
    %v2929 = vpack.c.b16 %v2121, %v2113
    %v2930 = vpack.c.b16 %v2122, %v2114
    %v2931 = vpack.c.b16 %v2123, %v2115
    %v2932 = vpack.c.b16 %v2124, %v2116
    %v2933 = vpack.c.b16 %v2125, %v2117
    %v2934 = vpack.c.b16 %v2126, %v2118
    %v2935 = vpack.c.b16 %v2127, %v2119
    %v2936 = vpack.c.b16 %v2136, %v2128
    %v2937 = vpack.c.b16 %v2137, %v2129
    %v2938 = vpack.c.b16 %v2138, %v2130
    %v2939 = vpack.c.b16 %v2139, %v2131
    %v2940 = vpack.c.b16 %v2140, %v2132
    %v2941 = vpack.c.b16 %v2141, %v2133
    %v2942 = vpack.c.b16 %v2142, %v2134
    %v2943 = vpack.c.b16 %v2143, %v2135
    %v2944 = vpack.c.b16 %v2152, %v2144
    %v2945 = vpack.c.b16 %v2153, %v2145
    %v2946 = vpack.c.b16 %v2154, %v2146
    %v2947 = vpack.c.b16 %v2155, %v2147
    %v2948 = vpack.c.b16 %v2156, %v2148
    %v2949 = vpack.c.b16 %v2157, %v2149
    %v2950 = vpack.c.b16 %v2158, %v2150
    %v2951 = vpack.c.b16 %v2159, %v2151
    %v2952 = vpack.c.b16 %v2168, %v2160
    %v2953 = vpack.c.b16 %v2169, %v2161
    %v2954 = vpack.c.b16 %v2170, %v2162
    %v2955 = vpack.c.b16 %v2171, %v2163
    %v2956 = vpack.c.b16 %v2172, %v2164
    %v2957 = vpack.c.b16 %v2173, %v2165
    %v2958 = vpack.c.b16 %v2174, %v2166
    %v2959 = vpack.c.b16 %v2175, %v2167
    %v2960 = vpack.c.b16 %v2184, %v2176
    %v2961 = vpack.c.b16 %v2185, %v2177
    %v2962 = vpack.c.b16 %v2186, %v2178
    %v2963 = vpack.c.b16 %v2187, %v2179
    %v2964 = vpack.c.b16 %v2188, %v2180
    %v2965 = vpack.c.b16 %v2189, %v2181
    %v2966 = vpack.c.b16 %v2190, %v2182
    %v2967 = vpack.c.b16 %v2191, %v2183
    %v2968 = vpack.c.b16 %v2200, %v2192
    %v2969 = vpack.c.b16 %v2201, %v2193
    %v2970 = vpack.c.b16 %v2202, %v2194
    %v2971 = vpack.c.b16 %v2203, %v2195
    %v2972 = vpack.c.b16 %v2204, %v2196
    %v2973 = vpack.c.b16 %v2205, %v2197
    %v2974 = vpack.c.b16 %v2206, %v2198
    %v2975 = vpack.c.b16 %v2207, %v2199
    %v2976 = vpack.c.b16 %v2216, %v2208
    %v2977 = vpack.c.b16 %v2217, %v2209
    %v2978 = vpack.c.b16 %v2218, %v2210
    %v2979 = vpack.c.b16 %v2219, %v2211
    %v2980 = vpack.c.b16 %v2220, %v2212
    %v2981 = vpack.c.b16 %v2221, %v2213
    %v2982 = vpack.c.b16 %v2222, %v2214
    %v2983 = vpack.c.b16 %v2223, %v2215
    %v2984 = vpack.c.b16 %v2232, %v2224
    %v2985 = vpack.c.b16 %v2233, %v2225
    %v2986 = vpack.c.b16 %v2234, %v2226
    %v2987 = vpack.c.b16 %v2235, %v2227
    %v2988 = vpack.c.b16 %v2236, %v2228
    %v2989 = vpack.c.b16 %v2237, %v2229
    %v2990 = vpack.c.b16 %v2238, %v2230
    %v2991 = vpack.c.b16 %v2239, %v2231
    %v2992 = vpack.c.b16 %v2248, %v2240
    %v2993 = vpack.c.b16 %v2249, %v2241
    %v2994 = vpack.c.b16 %v2250, %v2242
    %v2995 = vpack.c.b16 %v2251, %v2243
    %v2996 = vpack.c.b16 %v2252, %v2244
    %v2997 = vpack.c.b16 %v2253, %v2245
    %v2998 = vpack.c.b16 %v2254, %v2246
    %v2999 = vpack.c.b16 %v2255, %v2247
    %v3000 = vpack.c.b16 %v2264, %v2256
    %v3001 = vpack.c.b16 %v2265, %v2257
    %v3002 = vpack.c.b16 %v2266, %v2258
    %v3003 = vpack.c.b16 %v2267, %v2259
    %v3004 = vpack.c.b16 %v2268, %v2260
    %v3005 = vpack.c.b16 %v2269, %v2261
    %v3006 = vpack.c.b16 %v2270, %v2262
    %v3007 = vpack.c.b16 %v2271, %v2263
    %v3008 = vpack.c.b16 %v2280, %v2272
    %v3009 = vpack.c.b16 %v2281, %v2273
    %v3010 = vpack.c.b16 %v2282, %v2274
    %v3011 = vpack.c.b16 %v2283, %v2275
    %v3012 = vpack.c.b16 %v2284, %v2276
    %v3013 = vpack.c.b16 %v2285, %v2277
    %v3014 = vpack.c.b16 %v2286, %v2278
    %v3015 = vpack.c.b16 %v2287, %v2279
    %v3016 = vpack.c.b16 %v2296, %v2288
    %v3017 = vpack.c.b16 %v2297, %v2289
    %v3018 = vpack.c.b16 %v2298, %v2290
    %v3019 = vpack.c.b16 %v2299, %v2291
    %v3020 = vpack.c.b16 %v2300, %v2292
    %v3021 = vpack.c.b16 %v2301, %v2293
    %v3022 = vpack.c.b16 %v2302, %v2294
    %v3023 = vpack.c.b16 %v2303, %v2295
    %v3024 = vpack.c.b16 %v2312, %v2304
    %v3025 = vpack.c.b16 %v2313, %v2305
    %v3026 = vpack.c.b16 %v2314, %v2306
    %v3027 = vpack.c.b16 %v2315, %v2307
    %v3028 = vpack.c.b16 %v2316, %v2308
    %v3029 = vpack.c.b16 %v2317, %v2309
    %v3030 = vpack.c.b16 %v2318, %v2310
    %v3031 = vpack.c.b16 %v2319, %v2311
    %v3032 = vpack.c.b16 %v2328, %v2320
    %v3033 = vpack.c.b16 %v2329, %v2321
    %v3034 = vpack.c.b16 %v2330, %v2322
    %v3035 = vpack.c.b16 %v2331, %v2323
    %v3036 = vpack.c.b16 %v2332, %v2324
    %v3037 = vpack.c.b16 %v2333, %v2325
    %v3038 = vpack.c.b16 %v2334, %v2326
    %v3039 = vpack.c.b16 %v2335, %v2327
    %v3040 = vpack.c.b16 %v2344, %v2336
    %v3041 = vpack.c.b16 %v2345, %v2337
    %v3042 = vpack.c.b16 %v2346, %v2338
    %v3043 = vpack.c.b16 %v2347, %v2339
    %v3044 = vpack.c.b16 %v2348, %v2340
    %v3045 = vpack.c.b16 %v2349, %v2341
    %v3046 = vpack.c.b16 %v2350, %v2342
    %v3047 = vpack.c.b16 %v2351, %v2343
    %v3048 = vpack.c.b16 %v2360, %v2352
    %v3049 = vpack.c.b16 %v2361, %v2353
    %v3050 = vpack.c.b16 %v2362, %v2354
    %v3051 = vpack.c.b16 %v2363, %v2355
    %v3052 = vpack.c.b16 %v2364, %v2356
    %v3053 = vpack.c.b16 %v2365, %v2357
    %v3054 = vpack.c.b16 %v2366, %v2358
    %v3055 = vpack.c.b16 %v2367, %v2359
    %v3056 = vpack.c.b16 %v2376, %v2368
    %v3057 = vpack.c.b16 %v2377, %v2369
    %v3058 = vpack.c.b16 %v2378, %v2370
    %v3059 = vpack.c.b16 %v2379, %v2371
    %v3060 = vpack.c.b16 %v2380, %v2372
    %v3061 = vpack.c.b16 %v2381, %v2373
    %v3062 = vpack.c.b16 %v2382, %v2374
    %v3063 = vpack.c.b16 %v2383, %v2375
    %v3064 = vpack.c.b16 %v2392, %v2384
    %v3065 = vpack.c.b16 %v2393, %v2385
    %v3066 = vpack.c.b16 %v2394, %v2386
    %v3067 = vpack.c.b16 %v2395, %v2387
    %v3068 = vpack.c.b16 %v2396, %v2388
    %v3069 = vpack.c.b16 %v2397, %v2389
    %v3070 = vpack.c.b16 %v2398, %v2390
    %v3071 = vpack.c.b16 %v2399, %v2391
    %v3072 = vpack.c.b16 %v2408, %v2400
    %v3073 = vpack.c.b16 %v2409, %v2401
    %v3074 = vpack.c.b16 %v2410, %v2402
    %v3075 = vpack.c.b16 %v2411, %v2403
    %v3076 = vpack.c.b16 %v2412, %v2404
    %v3077 = vpack.c.b16 %v2413, %v2405
    %v3078 = vpack.c.b16 %v2414, %v2406
    %v3079 = vpack.c.b16 %v2415, %v2407
    %v3080 = vpack.c.b16 %v2424, %v2416
    %v3081 = vpack.c.b16 %v2425, %v2417
    %v3082 = vpack.c.b16 %v2426, %v2418
    %v3083 = vpack.c.b16 %v2427, %v2419
    %v3084 = vpack.c.b16 %v2428, %v2420
    %v3085 = vpack.c.b16 %v2429, %v2421
    %v3086 = vpack.c.b16 %v2430, %v2422
    %v3087 = vpack.c.b16 %v2431, %v2423
    %v3088 = vpack.c.b16 %v2440, %v2432
    %v3089 = vpack.c.b16 %v2441, %v2433
    %v3090 = vpack.c.b16 %v2442, %v2434
    %v3091 = vpack.c.b16 %v2443, %v2435
    %v3092 = vpack.c.b16 %v2444, %v2436
    %v3093 = vpack.c.b16 %v2445, %v2437
    %v3094 = vpack.c.b16 %v2446, %v2438
    %v3095 = vpack.c.b16 %v2447, %v2439
    %v3096 = vpack.c.b16 %v2456, %v2448
    %v3097 = vpack.c.b16 %v2457, %v2449
    %v3098 = vpack.c.b16 %v2458, %v2450
    %v3099 = vpack.c.b16 %v2459, %v2451
    %v3100 = vpack.c.b16 %v2460, %v2452
    %v3101 = vpack.c.b16 %v2461, %v2453
    %v3102 = vpack.c.b16 %v2462, %v2454
    %v3103 = vpack.c.b16 %v2463, %v2455
    %v3104 = vpack.c.b16 %v2472, %v2464
    %v3105 = vpack.c.b16 %v2473, %v2465
    %v3106 = vpack.c.b16 %v2474, %v2466
    %v3107 = vpack.c.b16 %v2475, %v2467
    %v3108 = vpack.c.b16 %v2476, %v2468
    %v3109 = vpack.c.b16 %v2477, %v2469
    %v3110 = vpack.c.b16 %v2478, %v2470
    %v3111 = vpack.c.b16 %v2479, %v2471
    %v3112 = vpack.c.b16 %v2488, %v2480
    %v3113 = vpack.c.b16 %v2489, %v2481
    %v3114 = vpack.c.b16 %v2490, %v2482
    %v3115 = vpack.c.b16 %v2491, %v2483
    %v3116 = vpack.c.b16 %v2492, %v2484
    %v3117 = vpack.c.b16 %v2493, %v2485
    %v3118 = vpack.c.b16 %v2494, %v2486
    %v3119 = vpack.c.b16 %v2495, %v2487
    %v3120 = vpack.c.b16 %v2504, %v2496
    %v3121 = vpack.c.b16 %v2505, %v2497
    %v3122 = vpack.c.b16 %v2506, %v2498
    %v3123 = vpack.c.b16 %v2507, %v2499
    %v3124 = vpack.c.b16 %v2508, %v2500
    %v3125 = vpack.c.b16 %v2509, %v2501
    %v3126 = vpack.c.b16 %v2510, %v2502
    %v3127 = vpack.c.b16 %v2511, %v2503
    %v3128 = vpack.c.b16 %v2520, %v2512
    %v3129 = vpack.c.b16 %v2521, %v2513
    %v3130 = vpack.c.b16 %v2522, %v2514
    %v3131 = vpack.c.b16 %v2523, %v2515
    %v3132 = vpack.c.b16 %v2524, %v2516
    %v3133 = vpack.c.b16 %v2525, %v2517
    %v3134 = vpack.c.b16 %v2526, %v2518
    %v3135 = vpack.c.b16 %v2527, %v2519
    %v3136 = vpack.c.b16 %v2536, %v2528
    %v3137 = vpack.c.b16 %v2537, %v2529
    %v3138 = vpack.c.b16 %v2538, %v2530
    %v3139 = vpack.c.b16 %v2539, %v2531
    %v3140 = vpack.c.b16 %v2540, %v2532
    %v3141 = vpack.c.b16 %v2541, %v2533
    %v3142 = vpack.c.b16 %v2542, %v2534
    %v3143 = vpack.c.b16 %v2543, %v2535
    %v3144 = vpack.c.b16 %v2552, %v2544
    %v3145 = vpack.c.b16 %v2553, %v2545
    %v3146 = vpack.c.b16 %v2554, %v2546
    %v3147 = vpack.c.b16 %v2555, %v2547
    %v3148 = vpack.c.b16 %v2556, %v2548
    %v3149 = vpack.c.b16 %v2557, %v2549
    %v3150 = vpack.c.b16 %v2558, %v2550
    %v3151 = vpack.c.b16 %v2559, %v2551
    %v3152 = vpack.c.b16 %v2568, %v2560
    %v3153 = vpack.c.b16 %v2569, %v2561
    %v3154 = vpack.c.b16 %v2570, %v2562
    %v3155 = vpack.c.b16 %v2571, %v2563
    %v3156 = vpack.c.b16 %v2572, %v2564
    %v3157 = vpack.c.b16 %v2573, %v2565
    %v3158 = vpack.c.b16 %v2574, %v2566
    %v3159 = vpack.c.b16 %v2575, %v2567
    %v3160 = vpack.c.b16 %v2584, %v2576
    %v3161 = vpack.c.b16 %v2585, %v2577
    %v3162 = vpack.c.b16 %v2586, %v2578
    %v3163 = vpack.c.b16 %v2587, %v2579
    %v3164 = vpack.c.b16 %v2588, %v2580
    %v3165 = vpack.c.b16 %v2589, %v2581
    %v3166 = vpack.c.b16 %v2590, %v2582
    %v3167 = vpack.c.b16 %v2591, %v2583
    %v3168 = vpack.c.b16 %v2600, %v2592
    %v3169 = vpack.c.b16 %v2601, %v2593
    %v3170 = vpack.c.b16 %v2602, %v2594
    %v3171 = vpack.c.b16 %v2603, %v2595
    %v3172 = vpack.c.b16 %v2604, %v2596
    %v3173 = vpack.c.b16 %v2605, %v2597
    %v3174 = vpack.c.b16 %v2606, %v2598
    %v3175 = vpack.c.b16 %v2607, %v2599
    %v3176 = vpack.c.b16 %v2616, %v2608
    %v3177 = vpack.c.b16 %v2617, %v2609
    %v3178 = vpack.c.b16 %v2618, %v2610
    %v3179 = vpack.c.b16 %v2619, %v2611
    %v3180 = vpack.c.b16 %v2620, %v2612
    %v3181 = vpack.c.b16 %v2621, %v2613
    %v3182 = vpack.c.b16 %v2622, %v2614
    %v3183 = vpack.c.b16 %v2623, %v2615
    %v3184 = vpack.c.b16 %v2632, %v2624
    %v3185 = vpack.c.b16 %v2633, %v2625
    %v3186 = vpack.c.b16 %v2634, %v2626
    %v3187 = vpack.c.b16 %v2635, %v2627
    %v3188 = vpack.c.b16 %v2636, %v2628
    %v3189 = vpack.c.b16 %v2637, %v2629
    %v3190 = vpack.c.b16 %v2638, %v2630
    %v3191 = vpack.c.b16 %v2639, %v2631
    %v3192 = vpack.c.b16 %v2648, %v2640
    %v3193 = vpack.c.b16 %v2649, %v2641
    %v3194 = vpack.c.b16 %v2650, %v2642
    %v3195 = vpack.c.b16 %v2651, %v2643
    %v3196 = vpack.c.b16 %v2652, %v2644
    %v3197 = vpack.c.b16 %v2653, %v2645
    %v3198 = vpack.c.b16 %v2654, %v2646
    %v3199 = vpack.c.b16 %v2655, %v2647
    %v3200 = vpack.c.b16 %v2664, %v2656
    %v3201 = vpack.c.b16 %v2665, %v2657
    %v3202 = vpack.c.b16 %v2666, %v2658
    %v3203 = vpack.c.b16 %v2667, %v2659
    %v3204 = vpack.c.b16 %v2668, %v2660
    %v3205 = vpack.c.b16 %v2669, %v2661
    %v3206 = vpack.c.b16 %v2670, %v2662
    %v3207 = vpack.c.b16 %v2671, %v2663
    %v3208 = vpack.c.b16 %v2680, %v2672
    %v3209 = vpack.c.b16 %v2681, %v2673
    %v3210 = vpack.c.b16 %v2682, %v2674
    %v3211 = vpack.c.b16 %v2683, %v2675
    %v3212 = vpack.c.b16 %v2684, %v2676
    %v3213 = vpack.c.b16 %v2685, %v2677
    %v3214 = vpack.c.b16 %v2686, %v2678
    %v3215 = vpack.c.b16 %v2687, %v2679
    %v3216 = vpack.c.b16 %v2696, %v2688
    %v3217 = vpack.c.b16 %v2697, %v2689
    %v3218 = vpack.c.b16 %v2698, %v2690
    %v3219 = vpack.c.b16 %v2699, %v2691
    %v3220 = vpack.c.b16 %v2700, %v2692
    %v3221 = vpack.c.b16 %v2701, %v2693
    %v3222 = vpack.c.b16 %v2702, %v2694
    %v3223 = vpack.c.b16 %v2703, %v2695
    %v3224 = vpack.c.b16 %v2712, %v2704
    %v3225 = vpack.c.b16 %v2713, %v2705
    %v3226 = vpack.c.b16 %v2714, %v2706
    %v3227 = vpack.c.b16 %v2715, %v2707
    %v3228 = vpack.c.b16 %v2716, %v2708
    %v3229 = vpack.c.b16 %v2717, %v2709
    %v3230 = vpack.c.b16 %v2718, %v2710
    %v3231 = vpack.c.b16 %v2719, %v2711
    %3744 = vmatprep.subr.bf16.mxu0 %v2721
    %3745 = vmatpush1.bf16.msra.mxu0 %v2720
    %3746 = vmatprep.subr.bf16.mxu0 %v2729
    %3747 = vmatpush1.bf16.msra.mxu0 %v2728
    %3748 = vmatprep.subr.bf16.mxu0 %v2737
    %3749 = vmatpush1.bf16.msra.mxu0 %v2736
    %3750 = vmatprep.subr.bf16.mxu0 %v2745
    %3751 = vmatpush1.bf16.msra.mxu0 %v2744
    %3752 = vmatprep.subr.bf16.mxu0 %v2753
    %3753 = vmatpush1.bf16.msra.mxu0 %v2752
    %3754 = vmatprep.subr.bf16.mxu0 %v2761
    %3755 = vmatpush1.bf16.msra.mxu0 %v2760
    %3756 = vmatprep.subr.bf16.mxu0 %v2769
    %3757 = vmatpush1.bf16.msra.mxu0 %v2768
    %3758 = vmatprep.subr.bf16.mxu0 %v2777
    %3759 = vmatpush1.bf16.msra.mxu0 %v2776
    %3760 = vmatprep.subr.bf16.mxu0 %v2785
    %3761 = vmatpush1.bf16.msra.mxu0 %v2784
    %3762 = vmatprep.subr.bf16.mxu0 %v2793
    %3763 = vmatpush1.bf16.msra.mxu0 %v2792
    %3764 = vmatprep.subr.bf16.mxu0 %v2801
    %3765 = vmatpush1.bf16.msra.mxu0 %v2800
    %3766 = vmatprep.subr.bf16.mxu0 %v2809
    %3767 = vmatpush1.bf16.msra.mxu0 %v2808
    %3768 = vmatprep.subr.bf16.mxu0 %v2817
    %3769 = vmatpush1.bf16.msra.mxu0 %v2816
    %3770 = vmatprep.subr.bf16.mxu0 %v2825
    %3771 = vmatpush1.bf16.msra.mxu0 %v2824
    %3772 = vmatprep.subr.bf16.mxu0 %v2833
    %3773 = vmatpush1.bf16.msra.mxu0 %v2832
    %3774 = vmatprep.subr.bf16.mxu0 %v2841
    %3775 = vmatpush1.bf16.msra.mxu0 %v2840
    %3776 = vmatprep.mubr.bf16.mxu0 %v1169
    %3777 = vmatmul.mubr.bf16.gmra.mrb[0].mxu0 %v1168
    %v3778 = vpop.f32.mrb[0].mxu0
    %v3779 = vadd.f32 %v1091, %v3778
    %v3780 = vpop.f32.mrb[0].mxu0
    %v3781 = vadd.f32 %v1095, %v3780
    %v3782 = vpop.f32.mrb[0].mxu0
    %v3783 = vpop.f32.mrb[0].mxu0
    %3784 = vdwg.mxu0
    %3785 = vmatprep.subr.bf16.mxu0 %v2849
    %3786 = vmatpush1.bf16.msra.mxu0 %v2848
    %3787 = vmatprep.subr.bf16.mxu0 %v2857
    %3788 = vmatpush1.bf16.msra.mxu0 %v2856
    %3789 = vmatprep.subr.bf16.mxu0 %v2865
    %3790 = vmatpush1.bf16.msra.mxu0 %v2864
    %3791 = vmatprep.subr.bf16.mxu0 %v2873
    %3792 = vmatpush1.bf16.msra.mxu0 %v2872
    %3793 = vmatprep.subr.bf16.mxu0 %v2881
    %3794 = vmatpush1.bf16.msra.mxu0 %v2880
    %3795 = vmatprep.subr.bf16.mxu0 %v2889
    %3796 = vmatpush1.bf16.msra.mxu0 %v2888
    %3797 = vmatprep.subr.bf16.mxu0 %v2897
    %3798 = vmatpush1.bf16.msra.mxu0 %v2896
    %3799 = vmatprep.subr.bf16.mxu0 %v2905
    %3800 = vmatpush1.bf16.msra.mxu0 %v2904
    %3801 = vmatprep.subr.bf16.mxu0 %v2913
    %3802 = vmatpush1.bf16.msra.mxu0 %v2912
    %3803 = vmatprep.subr.bf16.mxu0 %v2921
    %3804 = vmatpush1.bf16.msra.mxu0 %v2920
    %3805 = vmatprep.subr.bf16.mxu0 %v2929
    %3806 = vmatpush1.bf16.msra.mxu0 %v2928
    %3807 = vmatprep.subr.bf16.mxu0 %v2937
    %3808 = vmatpush1.bf16.msra.mxu0 %v2936
    %3809 = vmatprep.subr.bf16.mxu0 %v2945
    %3810 = vmatpush1.bf16.msra.mxu0 %v2944
    %3811 = vmatprep.subr.bf16.mxu0 %v2953
    %3812 = vmatpush1.bf16.msra.mxu0 %v2952
    %3813 = vmatprep.subr.bf16.mxu0 %v2961
    %3814 = vmatpush1.bf16.msra.mxu0 %v2960
    %3815 = vmatprep.subr.bf16.mxu0 %v2969
    %3816 = vmatpush1.bf16.msra.mxu0 %v2968
    %3817 = vmatprep.mubr.bf16.mxu0 %v1171
    %3818 = vmatmul.mubr.bf16.gmra.mrb[0].mxu0 %v1170
    %v3819 = vpop.f32.mrb[0].mxu0
    %v3820 = vadd.f32 %v3779, %v3819
    %v3821 = vpop.f32.mrb[0].mxu0
    %v3822 = vadd.f32 %v3781, %v3821
    %v3823 = vpop.f32.mrb[0].mxu0
    %v3824 = vpop.f32.mrb[0].mxu0
    %3825 = vdwg.mxu0
    %3826 = vmatprep.subr.bf16.mxu0 %v2977
    %3827 = vmatpush1.bf16.msra.mxu0 %v2976
    %3828 = vmatprep.subr.bf16.mxu0 %v2985
    %3829 = vmatpush1.bf16.msra.mxu0 %v2984
    %3830 = vmatprep.subr.bf16.mxu0 %v2993
    %3831 = vmatpush1.bf16.msra.mxu0 %v2992
    %3832 = vmatprep.subr.bf16.mxu0 %v3001
    %3833 = vmatpush1.bf16.msra.mxu0 %v3000
    %3834 = vmatprep.subr.bf16.mxu0 %v3009
    %3835 = vmatpush1.bf16.msra.mxu0 %v3008
    %3836 = vmatprep.subr.bf16.mxu0 %v3017
    %3837 = vmatpush1.bf16.msra.mxu0 %v3016
    %3838 = vmatprep.subr.bf16.mxu0 %v3025
    %3839 = vmatpush1.bf16.msra.mxu0 %v3024
    %3840 = vmatprep.subr.bf16.mxu0 %v3033
    %3841 = vmatpush1.bf16.msra.mxu0 %v3032
    %3842 = vmatprep.subr.bf16.mxu0 %v3041
    %3843 = vmatpush1.bf16.msra.mxu0 %v3040
    %3844 = vmatprep.subr.bf16.mxu0 %v3049
    %3845 = vmatpush1.bf16.msra.mxu0 %v3048
    %3846 = vmatprep.subr.bf16.mxu0 %v3057
    %3847 = vmatpush1.bf16.msra.mxu0 %v3056
    %3848 = vmatprep.subr.bf16.mxu0 %v3065
    %3849 = vmatpush1.bf16.msra.mxu0 %v3064
    %3850 = vmatprep.subr.bf16.mxu0 %v3073
    %3851 = vmatpush1.bf16.msra.mxu0 %v3072
    %3852 = vmatprep.subr.bf16.mxu0 %v3081
    %3853 = vmatpush1.bf16.msra.mxu0 %v3080
    %3854 = vmatprep.subr.bf16.mxu0 %v3089
    %3855 = vmatpush1.bf16.msra.mxu0 %v3088
    %3856 = vmatprep.subr.bf16.mxu0 %v3097
    %3857 = vmatpush1.bf16.msra.mxu0 %v3096
    %3858 = vmatprep.mubr.bf16.mxu0 %v1173
    %3859 = vmatmul.mubr.bf16.gmra.mrb[0].mxu0 %v1172
    %v3860 = vpop.f32.mrb[0].mxu0
    %v3861 = vadd.f32 %v3820, %v3860
    %v3862 = vpop.f32.mrb[0].mxu0
    %v3863 = vadd.f32 %v3822, %v3862
    %v3864 = vpop.f32.mrb[0].mxu0
    %v3865 = vpop.f32.mrb[0].mxu0
    %3866 = vdwg.mxu0
    %3867 = vmatprep.subr.bf16.mxu0 %v3105
    %3868 = vmatpush1.bf16.msra.mxu0 %v3104
    %3869 = vmatprep.subr.bf16.mxu0 %v3113
    %3870 = vmatpush1.bf16.msra.mxu0 %v3112
    %3871 = vmatprep.subr.bf16.mxu0 %v3121
    %3872 = vmatpush1.bf16.msra.mxu0 %v3120
    %3873 = vmatprep.subr.bf16.mxu0 %v3129
    %3874 = vmatpush1.bf16.msra.mxu0 %v3128
    %3875 = vmatprep.subr.bf16.mxu0 %v3137
    %3876 = vmatpush1.bf16.msra.mxu0 %v3136
    %3877 = vmatprep.subr.bf16.mxu0 %v3145
    %3878 = vmatpush1.bf16.msra.mxu0 %v3144
    %3879 = vmatprep.subr.bf16.mxu0 %v3153
    %3880 = vmatpush1.bf16.msra.mxu0 %v3152
    %3881 = vmatprep.subr.bf16.mxu0 %v3161
    %3882 = vmatpush1.bf16.msra.mxu0 %v3160
    %3883 = vmatprep.subr.bf16.mxu0 %v3169
    %3884 = vmatpush1.bf16.msra.mxu0 %v3168
    %3885 = vmatprep.subr.bf16.mxu0 %v3177
    %3886 = vmatpush1.bf16.msra.mxu0 %v3176
    %3887 = vmatprep.subr.bf16.mxu0 %v3185
    %3888 = vmatpush1.bf16.msra.mxu0 %v3184
    %3889 = vmatprep.subr.bf16.mxu0 %v3193
    %3890 = vmatpush1.bf16.msra.mxu0 %v3192
    %3891 = vmatprep.subr.bf16.mxu0 %v3201
    %3892 = vmatpush1.bf16.msra.mxu0 %v3200
    %3893 = vmatprep.subr.bf16.mxu0 %v3209
    %3894 = vmatpush1.bf16.msra.mxu0 %v3208
    %3895 = vmatprep.subr.bf16.mxu0 %v3217
    %3896 = vmatpush1.bf16.msra.mxu0 %v3216
    %3897 = vmatprep.subr.bf16.mxu0 %v3225
    %3898 = vmatpush1.bf16.msra.mxu0 %v3224
    %3899 = vmatprep.mubr.bf16.mxu0 %v1175
    %3900 = vmatmul.mubr.bf16.gmra.mrb[0].mxu0 %v1174
    %v3901 = vpop.f32.mrb[0].mxu0
    %v3902 = vadd.f32 %v3861, %v3901
    %v3903 = vpop.f32.mrb[0].mxu0
    %v3904 = vadd.f32 %v3863, %v3903
    %v3905 = vpop.f32.mrb[0].mxu0
    %v3906 = vpop.f32.mrb[0].mxu0
    %3907 = vdwg.mxu0
    %3908 = vmatprep.subr.bf16.mxu0 %v2723
    %3909 = vmatpush1.bf16.msra.mxu0 %v2722
    %3910 = vmatprep.subr.bf16.mxu0 %v2731
    %3911 = vmatpush1.bf16.msra.mxu0 %v2730
    %3912 = vmatprep.subr.bf16.mxu0 %v2739
    %3913 = vmatpush1.bf16.msra.mxu0 %v2738
    %3914 = vmatprep.subr.bf16.mxu0 %v2747
    %3915 = vmatpush1.bf16.msra.mxu0 %v2746
    %3916 = vmatprep.subr.bf16.mxu0 %v2755
    %3917 = vmatpush1.bf16.msra.mxu0 %v2754
    %3918 = vmatprep.subr.bf16.mxu0 %v2763
    %3919 = vmatpush1.bf16.msra.mxu0 %v2762
    %3920 = vmatprep.subr.bf16.mxu0 %v2771
    %3921 = vmatpush1.bf16.msra.mxu0 %v2770
    %3922 = vmatprep.subr.bf16.mxu0 %v2779
    %3923 = vmatpush1.bf16.msra.mxu0 %v2778
    %3924 = vmatprep.subr.bf16.mxu0 %v2787
    %3925 = vmatpush1.bf16.msra.mxu0 %v2786
    %3926 = vmatprep.subr.bf16.mxu0 %v2795
    %3927 = vmatpush1.bf16.msra.mxu0 %v2794
    %3928 = vmatprep.subr.bf16.mxu0 %v2803
    %3929 = vmatpush1.bf16.msra.mxu0 %v2802
    %3930 = vmatprep.subr.bf16.mxu0 %v2811
    %3931 = vmatpush1.bf16.msra.mxu0 %v2810
    %3932 = vmatprep.subr.bf16.mxu0 %v2819
    %3933 = vmatpush1.bf16.msra.mxu0 %v2818
    %3934 = vmatprep.subr.bf16.mxu0 %v2827
    %3935 = vmatpush1.bf16.msra.mxu0 %v2826
    %3936 = vmatprep.subr.bf16.mxu0 %v2835
    %3937 = vmatpush1.bf16.msra.mxu0 %v2834
    %3938 = vmatprep.subr.bf16.mxu0 %v2843
    %3939 = vmatpush1.bf16.msra.mxu0 %v2842
    %3940 = vmatprep.mubr.bf16.mxu0 %v1169
    %3941 = vmatmul.mubr.bf16.gmra.mrb[0].mxu0 %v1168
    %v3942 = vpop.f32.mrb[0].mxu0
    %v3943 = vadd.f32 %v1099, %v3942
    %v3944 = vpop.f32.mrb[0].mxu0
    %v3945 = vadd.f32 %v1103, %v3944
    %v3946 = vpop.f32.mrb[0].mxu0
    %v3947 = vpop.f32.mrb[0].mxu0
    %3948 = vdwg.mxu0
    %3949 = vmatprep.subr.bf16.mxu0 %v2851
    %3950 = vmatpush1.bf16.msra.mxu0 %v2850
    %3951 = vmatprep.subr.bf16.mxu0 %v2859
    %3952 = vmatpush1.bf16.msra.mxu0 %v2858
    %3953 = vmatprep.subr.bf16.mxu0 %v2867
    %3954 = vmatpush1.bf16.msra.mxu0 %v2866
    %3955 = vmatprep.subr.bf16.mxu0 %v2875
    %3956 = vmatpush1.bf16.msra.mxu0 %v2874
    %3957 = vmatprep.subr.bf16.mxu0 %v2883
    %3958 = vmatpush1.bf16.msra.mxu0 %v2882
    %3959 = vmatprep.subr.bf16.mxu0 %v2891
    %3960 = vmatpush1.bf16.msra.mxu0 %v2890
    %3961 = vmatprep.subr.bf16.mxu0 %v2899
    %3962 = vmatpush1.bf16.msra.mxu0 %v2898
    %3963 = vmatprep.subr.bf16.mxu0 %v2907
    %3964 = vmatpush1.bf16.msra.mxu0 %v2906
    %3965 = vmatprep.subr.bf16.mxu0 %v2915
    %3966 = vmatpush1.bf16.msra.mxu0 %v2914
    %3967 = vmatprep.subr.bf16.mxu0 %v2923
    %3968 = vmatpush1.bf16.msra.mxu0 %v2922
    %3969 = vmatprep.subr.bf16.mxu0 %v2931
    %3970 = vmatpush1.bf16.msra.mxu0 %v2930
    %3971 = vmatprep.subr.bf16.mxu0 %v2939
    %3972 = vmatpush1.bf16.msra.mxu0 %v2938
    %3973 = vmatprep.subr.bf16.mxu0 %v2947
    %3974 = vmatpush1.bf16.msra.mxu0 %v2946
    %3975 = vmatprep.subr.bf16.mxu0 %v2955
    %3976 = vmatpush1.bf16.msra.mxu0 %v2954
    %3977 = vmatprep.subr.bf16.mxu0 %v2963
    %3978 = vmatpush1.bf16.msra.mxu0 %v2962
    %3979 = vmatprep.subr.bf16.mxu0 %v2971
    %3980 = vmatpush1.bf16.msra.mxu0 %v2970
    %3981 = vmatprep.mubr.bf16.mxu0 %v1171
    %3982 = vmatmul.mubr.bf16.gmra.mrb[0].mxu0 %v1170
    %v3983 = vpop.f32.mrb[0].mxu0
    %v3984 = vadd.f32 %v3943, %v3983
    %v3985 = vpop.f32.mrb[0].mxu0
    %v3986 = vadd.f32 %v3945, %v3985
    %v3987 = vpop.f32.mrb[0].mxu0
    %v3988 = vpop.f32.mrb[0].mxu0
    %3989 = vdwg.mxu0
    %3990 = vmatprep.subr.bf16.mxu0 %v2979
    %3991 = vmatpush1.bf16.msra.mxu0 %v2978
    %3992 = vmatprep.subr.bf16.mxu0 %v2987
    %3993 = vmatpush1.bf16.msra.mxu0 %v2986
    %3994 = vmatprep.subr.bf16.mxu0 %v2995
    %3995 = vmatpush1.bf16.msra.mxu0 %v2994
    %3996 = vmatprep.subr.bf16.mxu0 %v3003
    %3997 = vmatpush1.bf16.msra.mxu0 %v3002
    %3998 = vmatprep.subr.bf16.mxu0 %v3011
    %3999 = vmatpush1.bf16.msra.mxu0 %v3010
    %4000 = vmatprep.subr.bf16.mxu0 %v3019
    %4001 = vmatpush1.bf16.msra.mxu0 %v3018
    %4002 = vmatprep.subr.bf16.mxu0 %v3027
    %4003 = vmatpush1.bf16.msra.mxu0 %v3026
    %4004 = vmatprep.subr.bf16.mxu0 %v3035
    %4005 = vmatpush1.bf16.msra.mxu0 %v3034
    %4006 = vmatprep.subr.bf16.mxu0 %v3043
    %4007 = vmatpush1.bf16.msra.mxu0 %v3042
    %4008 = vmatprep.subr.bf16.mxu0 %v3051
    %4009 = vmatpush1.bf16.msra.mxu0 %v3050
    %4010 = vmatprep.subr.bf16.mxu0 %v3059
    %4011 = vmatpush1.bf16.msra.mxu0 %v3058
    %4012 = vmatprep.subr.bf16.mxu0 %v3067
    %4013 = vmatpush1.bf16.msra.mxu0 %v3066
    %4014 = vmatprep.subr.bf16.mxu0 %v3075
    %4015 = vmatpush1.bf16.msra.mxu0 %v3074
    %4016 = vmatprep.subr.bf16.mxu0 %v3083
    %4017 = vmatpush1.bf16.msra.mxu0 %v3082
    %4018 = vmatprep.subr.bf16.mxu0 %v3091
    %4019 = vmatpush1.bf16.msra.mxu0 %v3090
    %4020 = vmatprep.subr.bf16.mxu0 %v3099
    %4021 = vmatpush1.bf16.msra.mxu0 %v3098
    %4022 = vmatprep.mubr.bf16.mxu0 %v1173
    %4023 = vmatmul.mubr.bf16.gmra.mrb[0].mxu0 %v1172
    %v4024 = vpop.f32.mrb[0].mxu0
    %v4025 = vadd.f32 %v3984, %v4024
    %v4026 = vpop.f32.mrb[0].mxu0
    %v4027 = vadd.f32 %v3986, %v4026
    %v4028 = vpop.f32.mrb[0].mxu0
    %v4029 = vpop.f32.mrb[0].mxu0
    %4030 = vdwg.mxu0
    %4031 = vmatprep.subr.bf16.mxu0 %v3107
    %4032 = vmatpush1.bf16.msra.mxu0 %v3106
    %4033 = vmatprep.subr.bf16.mxu0 %v3115
    %4034 = vmatpush1.bf16.msra.mxu0 %v3114
    %4035 = vmatprep.subr.bf16.mxu0 %v3123
    %4036 = vmatpush1.bf16.msra.mxu0 %v3122
    %4037 = vmatprep.subr.bf16.mxu0 %v3131
    %4038 = vmatpush1.bf16.msra.mxu0 %v3130
    %4039 = vmatprep.subr.bf16.mxu0 %v3139
    %4040 = vmatpush1.bf16.msra.mxu0 %v3138
    %4041 = vmatprep.subr.bf16.mxu0 %v3147
    %4042 = vmatpush1.bf16.msra.mxu0 %v3146
    %4043 = vmatprep.subr.bf16.mxu0 %v3155
    %4044 = vmatpush1.bf16.msra.mxu0 %v3154
    %4045 = vmatprep.subr.bf16.mxu0 %v3163
    %4046 = vmatpush1.bf16.msra.mxu0 %v3162
    %4047 = vmatprep.subr.bf16.mxu0 %v3171
    %4048 = vmatpush1.bf16.msra.mxu0 %v3170
    %4049 = vmatprep.subr.bf16.mxu0 %v3179
    %4050 = vmatpush1.bf16.msra.mxu0 %v3178
    %4051 = vmatprep.subr.bf16.mxu0 %v3187
    %4052 = vmatpush1.bf16.msra.mxu0 %v3186
    %4053 = vmatprep.subr.bf16.mxu0 %v3195
    %4054 = vmatpush1.bf16.msra.mxu0 %v3194
    %4055 = vmatprep.subr.bf16.mxu0 %v3203
    %4056 = vmatpush1.bf16.msra.mxu0 %v3202
    %4057 = vmatprep.subr.bf16.mxu0 %v3211
    %4058 = vmatpush1.bf16.msra.mxu0 %v3210
    %4059 = vmatprep.subr.bf16.mxu0 %v3219
    %4060 = vmatpush1.bf16.msra.mxu0 %v3218
    %4061 = vmatprep.subr.bf16.mxu0 %v3227
    %4062 = vmatpush1.bf16.msra.mxu0 %v3226
    %4063 = vmatprep.mubr.bf16.mxu0 %v1175
    %4064 = vmatmul.mubr.bf16.gmra.mrb[0].mxu0 %v1174
    %v4065 = vpop.f32.mrb[0].mxu0
    %v4066 = vadd.f32 %v4025, %v4065
    %v4067 = vpop.f32.mrb[0].mxu0
    %v4068 = vadd.f32 %v4027, %v4067
    %v4069 = vpop.f32.mrb[0].mxu0
    %v4070 = vpop.f32.mrb[0].mxu0
    %4071 = vdwg.mxu0
    %4072 = vmatprep.subr.bf16.mxu0 %v2725
    %4073 = vmatpush1.bf16.msra.mxu0 %v2724
    %4074 = vmatprep.subr.bf16.mxu0 %v2733
    %4075 = vmatpush1.bf16.msra.mxu0 %v2732
    %4076 = vmatprep.subr.bf16.mxu0 %v2741
    %4077 = vmatpush1.bf16.msra.mxu0 %v2740
    %4078 = vmatprep.subr.bf16.mxu0 %v2749
    %4079 = vmatpush1.bf16.msra.mxu0 %v2748
    %4080 = vmatprep.subr.bf16.mxu0 %v2757
    %4081 = vmatpush1.bf16.msra.mxu0 %v2756
    %4082 = vmatprep.subr.bf16.mxu0 %v2765
    %4083 = vmatpush1.bf16.msra.mxu0 %v2764
    %4084 = vmatprep.subr.bf16.mxu0 %v2773
    %4085 = vmatpush1.bf16.msra.mxu0 %v2772
    %4086 = vmatprep.subr.bf16.mxu0 %v2781
    %4087 = vmatpush1.bf16.msra.mxu0 %v2780
    %4088 = vmatprep.subr.bf16.mxu0 %v2789
    %4089 = vmatpush1.bf16.msra.mxu0 %v2788
    %4090 = vmatprep.subr.bf16.mxu0 %v2797
    %4091 = vmatpush1.bf16.msra.mxu0 %v2796
    %4092 = vmatprep.subr.bf16.mxu0 %v2805
    %4093 = vmatpush1.bf16.msra.mxu0 %v2804
    %4094 = vmatprep.subr.bf16.mxu0 %v2813
    %4095 = vmatpush1.bf16.msra.mxu0 %v2812
    %4096 = vmatprep.subr.bf16.mxu0 %v2821
    %4097 = vmatpush1.bf16.msra.mxu0 %v2820
    %4098 = vmatprep.subr.bf16.mxu0 %v2829
    %4099 = vmatpush1.bf16.msra.mxu0 %v2828
    %4100 = vmatprep.subr.bf16.mxu0 %v2837
    %4101 = vmatpush1.bf16.msra.mxu0 %v2836
    %4102 = vmatprep.subr.bf16.mxu0 %v2845
    %4103 = vmatpush1.bf16.msra.mxu0 %v2844
    %4104 = vmatprep.mubr.bf16.mxu0 %v1169
    %4105 = vmatmul.mubr.bf16.gmra.mrb[0].mxu0 %v1168
    %v4106 = vpop.f32.mrb[0].mxu0
    %v4107 = vadd.f32 %v1107, %v4106
    %v4108 = vpop.f32.mrb[0].mxu0
    %v4109 = vadd.f32 %v1111, %v4108
    %v4110 = vpop.f32.mrb[0].mxu0
    %v4111 = vpop.f32.mrb[0].mxu0
    %4112 = vdwg.mxu0
    %4113 = vmatprep.subr.bf16.mxu0 %v2853
    %4114 = vmatpush1.bf16.msra.mxu0 %v2852
    %4115 = vmatprep.subr.bf16.mxu0 %v2861
    %4116 = vmatpush1.bf16.msra.mxu0 %v2860
    %4117 = vmatprep.subr.bf16.mxu0 %v2869
    %4118 = vmatpush1.bf16.msra.mxu0 %v2868
    %4119 = vmatprep.subr.bf16.mxu0 %v2877
    %4120 = vmatpush1.bf16.msra.mxu0 %v2876
    %4121 = vmatprep.subr.bf16.mxu0 %v2885
    %4122 = vmatpush1.bf16.msra.mxu0 %v2884
    %4123 = vmatprep.subr.bf16.mxu0 %v2893
    %4124 = vmatpush1.bf16.msra.mxu0 %v2892
    %4125 = vmatprep.subr.bf16.mxu0 %v2901
    %4126 = vmatpush1.bf16.msra.mxu0 %v2900
    %4127 = vmatprep.subr.bf16.mxu0 %v2909
    %4128 = vmatpush1.bf16.msra.mxu0 %v2908
    %4129 = vmatprep.subr.bf16.mxu0 %v2917
    %4130 = vmatpush1.bf16.msra.mxu0 %v2916
    %4131 = vmatprep.subr.bf16.mxu0 %v2925
    %4132 = vmatpush1.bf16.msra.mxu0 %v2924
    %4133 = vmatprep.subr.bf16.mxu0 %v2933
    %4134 = vmatpush1.bf16.msra.mxu0 %v2932
    %4135 = vmatprep.subr.bf16.mxu0 %v2941
    %4136 = vmatpush1.bf16.msra.mxu0 %v2940
    %4137 = vmatprep.subr.bf16.mxu0 %v2949
    %4138 = vmatpush1.bf16.msra.mxu0 %v2948
    %4139 = vmatprep.subr.bf16.mxu0 %v2957
    %4140 = vmatpush1.bf16.msra.mxu0 %v2956
    %4141 = vmatprep.subr.bf16.mxu0 %v2965
    %4142 = vmatpush1.bf16.msra.mxu0 %v2964
    %4143 = vmatprep.subr.bf16.mxu0 %v2973
    %4144 = vmatpush1.bf16.msra.mxu0 %v2972
    %4145 = vmatprep.mubr.bf16.mxu0 %v1171
    %4146 = vmatmul.mubr.bf16.gmra.mrb[0].mxu0 %v1170
    %v4147 = vpop.f32.mrb[0].mxu0
    %v4148 = vadd.f32 %v4107, %v4147
    %v4149 = vpop.f32.mrb[0].mxu0
    %v4150 = vadd.f32 %v4109, %v4149
    %v4151 = vpop.f32.mrb[0].mxu0
    %v4152 = vpop.f32.mrb[0].mxu0
    %4153 = vdwg.mxu0
    %4154 = vmatprep.subr.bf16.mxu0 %v2981
    %4155 = vmatpush1.bf16.msra.mxu0 %v2980
    %4156 = vmatprep.subr.bf16.mxu0 %v2989
    %4157 = vmatpush1.bf16.msra.mxu0 %v2988
    %4158 = vmatprep.subr.bf16.mxu0 %v2997
    %4159 = vmatpush1.bf16.msra.mxu0 %v2996
    %4160 = vmatprep.subr.bf16.mxu0 %v3005
    %4161 = vmatpush1.bf16.msra.mxu0 %v3004
    %4162 = vmatprep.subr.bf16.mxu0 %v3013
    %4163 = vmatpush1.bf16.msra.mxu0 %v3012
    %4164 = vmatprep.subr.bf16.mxu0 %v3021
    %4165 = vmatpush1.bf16.msra.mxu0 %v3020
    %4166 = vmatprep.subr.bf16.mxu0 %v3029
    %4167 = vmatpush1.bf16.msra.mxu0 %v3028
    %4168 = vmatprep.subr.bf16.mxu0 %v3037
    %4169 = vmatpush1.bf16.msra.mxu0 %v3036
    %4170 = vmatprep.subr.bf16.mxu0 %v3045
    %4171 = vmatpush1.bf16.msra.mxu0 %v3044
    %4172 = vmatprep.subr.bf16.mxu0 %v3053
    %4173 = vmatpush1.bf16.msra.mxu0 %v3052
    %4174 = vmatprep.subr.bf16.mxu0 %v3061
    %4175 = vmatpush1.bf16.msra.mxu0 %v3060
    %4176 = vmatprep.subr.bf16.mxu0 %v3069
    %4177 = vmatpush1.bf16.msra.mxu0 %v3068
    %4178 = vmatprep.subr.bf16.mxu0 %v3077
    %4179 = vmatpush1.bf16.msra.mxu0 %v3076
    %4180 = vmatprep.subr.bf16.mxu0 %v3085
    %4181 = vmatpush1.bf16.msra.mxu0 %v3084
    %4182 = vmatprep.subr.bf16.mxu0 %v3093
    %4183 = vmatpush1.bf16.msra.mxu0 %v3092
    %4184 = vmatprep.subr.bf16.mxu0 %v3101
    %4185 = vmatpush1.bf16.msra.mxu0 %v3100
    %4186 = vmatprep.mubr.bf16.mxu0 %v1173
    %4187 = vmatmul.mubr.bf16.gmra.mrb[0].mxu0 %v1172
    %v4188 = vpop.f32.mrb[0].mxu0
    %v4189 = vadd.f32 %v4148, %v4188
    %v4190 = vpop.f32.mrb[0].mxu0
    %v4191 = vadd.f32 %v4150, %v4190
    %v4192 = vpop.f32.mrb[0].mxu0
    %v4193 = vpop.f32.mrb[0].mxu0
    %4194 = vdwg.mxu0
    %4195 = vmatprep.subr.bf16.mxu0 %v3109
    %4196 = vmatpush1.bf16.msra.mxu0 %v3108
    %4197 = vmatprep.subr.bf16.mxu0 %v3117
    %4198 = vmatpush1.bf16.msra.mxu0 %v3116
    %4199 = vmatprep.subr.bf16.mxu0 %v3125
    %4200 = vmatpush1.bf16.msra.mxu0 %v3124
    %4201 = vmatprep.subr.bf16.mxu0 %v3133
    %4202 = vmatpush1.bf16.msra.mxu0 %v3132
    %4203 = vmatprep.subr.bf16.mxu0 %v3141
    %4204 = vmatpush1.bf16.msra.mxu0 %v3140
    %4205 = vmatprep.subr.bf16.mxu0 %v3149
    %4206 = vmatpush1.bf16.msra.mxu0 %v3148
    %4207 = vmatprep.subr.bf16.mxu0 %v3157
    %4208 = vmatpush1.bf16.msra.mxu0 %v3156
    %4209 = vmatprep.subr.bf16.mxu0 %v3165
    %4210 = vmatpush1.bf16.msra.mxu0 %v3164
    %4211 = vmatprep.subr.bf16.mxu0 %v3173
    %4212 = vmatpush1.bf16.msra.mxu0 %v3172
    %4213 = vmatprep.subr.bf16.mxu0 %v3181
    %4214 = vmatpush1.bf16.msra.mxu0 %v3180
    %4215 = vmatprep.subr.bf16.mxu0 %v3189
    %4216 = vmatpush1.bf16.msra.mxu0 %v3188
    %4217 = vmatprep.subr.bf16.mxu0 %v3197
    %4218 = vmatpush1.bf16.msra.mxu0 %v3196
    %4219 = vmatprep.subr.bf16.mxu0 %v3205
    %4220 = vmatpush1.bf16.msra.mxu0 %v3204
    %4221 = vmatprep.subr.bf16.mxu0 %v3213
    %4222 = vmatpush1.bf16.msra.mxu0 %v3212
    %4223 = vmatprep.subr.bf16.mxu0 %v3221
    %4224 = vmatpush1.bf16.msra.mxu0 %v3220
    %4225 = vmatprep.subr.bf16.mxu0 %v3229
    %4226 = vmatpush1.bf16.msra.mxu0 %v3228
    %4227 = vmatprep.mubr.bf16.mxu0 %v1175
    %4228 = vmatmul.mubr.bf16.gmra.mrb[0].mxu0 %v1174
    %v4229 = vpop.f32.mrb[0].mxu0
    %v4230 = vadd.f32 %v4189, %v4229
    %v4231 = vpop.f32.mrb[0].mxu0
    %v4232 = vadd.f32 %v4191, %v4231
    %v4233 = vpop.f32.mrb[0].mxu0
    %v4234 = vpop.f32.mrb[0].mxu0
    %4235 = vdwg.mxu0
    %4236 = vmatprep.subr.bf16.mxu0 %v2727
    %4237 = vmatpush1.bf16.msra.mxu0 %v2726
    %4238 = vmatprep.subr.bf16.mxu0 %v2735
    %4239 = vmatpush1.bf16.msra.mxu0 %v2734
    %4240 = vmatprep.subr.bf16.mxu0 %v2743
    %4241 = vmatpush1.bf16.msra.mxu0 %v2742
    %4242 = vmatprep.subr.bf16.mxu0 %v2751
    %4243 = vmatpush1.bf16.msra.mxu0 %v2750
    %4244 = vmatprep.subr.bf16.mxu0 %v2759
    %4245 = vmatpush1.bf16.msra.mxu0 %v2758
    %4246 = vmatprep.subr.bf16.mxu0 %v2767
    %4247 = vmatpush1.bf16.msra.mxu0 %v2766
    %4248 = vmatprep.subr.bf16.mxu0 %v2775
    %4249 = vmatpush1.bf16.msra.mxu0 %v2774
    %4250 = vmatprep.subr.bf16.mxu0 %v2783
    %4251 = vmatpush1.bf16.msra.mxu0 %v2782
    %4252 = vmatprep.subr.bf16.mxu0 %v2791
    %4253 = vmatpush1.bf16.msra.mxu0 %v2790
    %4254 = vmatprep.subr.bf16.mxu0 %v2799
    %4255 = vmatpush1.bf16.msra.mxu0 %v2798
    %4256 = vmatprep.subr.bf16.mxu0 %v2807
    %4257 = vmatpush1.bf16.msra.mxu0 %v2806
    %4258 = vmatprep.subr.bf16.mxu0 %v2815
    %4259 = vmatpush1.bf16.msra.mxu0 %v2814
    %4260 = vmatprep.subr.bf16.mxu0 %v2823
    %4261 = vmatpush1.bf16.msra.mxu0 %v2822
    %4262 = vmatprep.subr.bf16.mxu0 %v2831
    %4263 = vmatpush1.bf16.msra.mxu0 %v2830
    %4264 = vmatprep.subr.bf16.mxu0 %v2839
    %4265 = vmatpush1.bf16.msra.mxu0 %v2838
    %4266 = vmatprep.subr.bf16.mxu0 %v2847
    %4267 = vmatpush1.bf16.msra.mxu0 %v2846
    %4268 = vmatprep.mubr.bf16.mxu0 %v1169
    %4269 = vmatmul.mubr.bf16.gmra.mrb[0].mxu0 %v1168
    %v4270 = vpop.f32.mrb[0].mxu0
    %v4271 = vadd.f32 %v1115, %v4270
    %v4272 = vpop.f32.mrb[0].mxu0
    %v4273 = vadd.f32 %v1119, %v4272
    %v4274 = vpop.f32.mrb[0].mxu0
    %v4275 = vpop.f32.mrb[0].mxu0
    %4276 = vdwg.mxu0
    %4277 = vmatprep.subr.bf16.mxu0 %v2855
    %4278 = vmatpush1.bf16.msra.mxu0 %v2854
    %4279 = vmatprep.subr.bf16.mxu0 %v2863
    %4280 = vmatpush1.bf16.msra.mxu0 %v2862
    %4281 = vmatprep.subr.bf16.mxu0 %v2871
    %4282 = vmatpush1.bf16.msra.mxu0 %v2870
    %4283 = vmatprep.subr.bf16.mxu0 %v2879
    %4284 = vmatpush1.bf16.msra.mxu0 %v2878
    %4285 = vmatprep.subr.bf16.mxu0 %v2887
    %4286 = vmatpush1.bf16.msra.mxu0 %v2886
    %4287 = vmatprep.subr.bf16.mxu0 %v2895
    %4288 = vmatpush1.bf16.msra.mxu0 %v2894
    %4289 = vmatprep.subr.bf16.mxu0 %v2903
    %4290 = vmatpush1.bf16.msra.mxu0 %v2902
    %4291 = vmatprep.subr.bf16.mxu0 %v2911
    %4292 = vmatpush1.bf16.msra.mxu0 %v2910
    %4293 = vmatprep.subr.bf16.mxu0 %v2919
    %4294 = vmatpush1.bf16.msra.mxu0 %v2918
    %4295 = vmatprep.subr.bf16.mxu0 %v2927
    %4296 = vmatpush1.bf16.msra.mxu0 %v2926
    %4297 = vmatprep.subr.bf16.mxu0 %v2935
    %4298 = vmatpush1.bf16.msra.mxu0 %v2934
    %4299 = vmatprep.subr.bf16.mxu0 %v2943
    %4300 = vmatpush1.bf16.msra.mxu0 %v2942
    %4301 = vmatprep.subr.bf16.mxu0 %v2951
    %4302 = vmatpush1.bf16.msra.mxu0 %v2950
    %4303 = vmatprep.subr.bf16.mxu0 %v2959
    %4304 = vmatpush1.bf16.msra.mxu0 %v2958
    %4305 = vmatprep.subr.bf16.mxu0 %v2967
    %4306 = vmatpush1.bf16.msra.mxu0 %v2966
    %4307 = vmatprep.subr.bf16.mxu0 %v2975
    %4308 = vmatpush1.bf16.msra.mxu0 %v2974
    %4309 = vmatprep.mubr.bf16.mxu0 %v1171
    %4310 = vmatmul.mubr.bf16.gmra.mrb[0].mxu0 %v1170
    %v4311 = vpop.f32.mrb[0].mxu0
    %v4312 = vadd.f32 %v4271, %v4311
    %v4313 = vpop.f32.mrb[0].mxu0
    %v4314 = vadd.f32 %v4273, %v4313
    %v4315 = vpop.f32.mrb[0].mxu0
    %v4316 = vpop.f32.mrb[0].mxu0
    %4317 = vdwg.mxu0
    %4318 = vmatprep.subr.bf16.mxu0 %v2983
    %4319 = vmatpush1.bf16.msra.mxu0 %v2982
    %4320 = vmatprep.subr.bf16.mxu0 %v2991
    %4321 = vmatpush1.bf16.msra.mxu0 %v2990
    %4322 = vmatprep.subr.bf16.mxu0 %v2999
    %4323 = vmatpush1.bf16.msra.mxu0 %v2998
    %4324 = vmatprep.subr.bf16.mxu0 %v3007
    %4325 = vmatpush1.bf16.msra.mxu0 %v3006
    %4326 = vmatprep.subr.bf16.mxu0 %v3015
    %4327 = vmatpush1.bf16.msra.mxu0 %v3014
    %4328 = vmatprep.subr.bf16.mxu0 %v3023
    %4329 = vmatpush1.bf16.msra.mxu0 %v3022
    %4330 = vmatprep.subr.bf16.mxu0 %v3031
    %4331 = vmatpush1.bf16.msra.mxu0 %v3030
    %4332 = vmatprep.subr.bf16.mxu0 %v3039
    %4333 = vmatpush1.bf16.msra.mxu0 %v3038
    %4334 = vmatprep.subr.bf16.mxu0 %v3047
    %4335 = vmatpush1.bf16.msra.mxu0 %v3046
    %4336 = vmatprep.subr.bf16.mxu0 %v3055
    %4337 = vmatpush1.bf16.msra.mxu0 %v3054
    %4338 = vmatprep.subr.bf16.mxu0 %v3063
    %4339 = vmatpush1.bf16.msra.mxu0 %v3062
    %4340 = vmatprep.subr.bf16.mxu0 %v3071
    %4341 = vmatpush1.bf16.msra.mxu0 %v3070
    %4342 = vmatprep.subr.bf16.mxu0 %v3079
    %4343 = vmatpush1.bf16.msra.mxu0 %v3078
    %4344 = vmatprep.subr.bf16.mxu0 %v3087
    %4345 = vmatpush1.bf16.msra.mxu0 %v3086
    %4346 = vmatprep.subr.bf16.mxu0 %v3095
    %4347 = vmatpush1.bf16.msra.mxu0 %v3094
    %4348 = vmatprep.subr.bf16.mxu0 %v3103
    %4349 = vmatpush1.bf16.msra.mxu0 %v3102
    %4350 = vmatprep.mubr.bf16.mxu0 %v1173
    %4351 = vmatmul.mubr.bf16.gmra.mrb[0].mxu0 %v1172
    %v4352 = vpop.f32.mrb[0].mxu0
    %v4353 = vadd.f32 %v4312, %v4352
    %v4354 = vpop.f32.mrb[0].mxu0
    %v4355 = vadd.f32 %v4314, %v4354
    %v4356 = vpop.f32.mrb[0].mxu0
    %v4357 = vpop.f32.mrb[0].mxu0
    %4358 = vdwg.mxu0
    %4359 = vmatprep.subr.bf16.mxu0 %v3111
    %4360 = vmatpush1.bf16.msra.mxu0 %v3110
    %4361 = vmatprep.subr.bf16.mxu0 %v3119
    %4362 = vmatpush1.bf16.msra.mxu0 %v3118
    %4363 = vmatprep.subr.bf16.mxu0 %v3127
    %4364 = vmatpush1.bf16.msra.mxu0 %v3126
    %4365 = vmatprep.subr.bf16.mxu0 %v3135
    %4366 = vmatpush1.bf16.msra.mxu0 %v3134
    %4367 = vmatprep.subr.bf16.mxu0 %v3143
    %4368 = vmatpush1.bf16.msra.mxu0 %v3142
    %4369 = vmatprep.subr.bf16.mxu0 %v3151
    %4370 = vmatpush1.bf16.msra.mxu0 %v3150
    %4371 = vmatprep.subr.bf16.mxu0 %v3159
    %4372 = vmatpush1.bf16.msra.mxu0 %v3158
    %4373 = vmatprep.subr.bf16.mxu0 %v3167
    %4374 = vmatpush1.bf16.msra.mxu0 %v3166
    %4375 = vmatprep.subr.bf16.mxu0 %v3175
    %4376 = vmatpush1.bf16.msra.mxu0 %v3174
    %4377 = vmatprep.subr.bf16.mxu0 %v3183
    %4378 = vmatpush1.bf16.msra.mxu0 %v3182
    %4379 = vmatprep.subr.bf16.mxu0 %v3191
    %4380 = vmatpush1.bf16.msra.mxu0 %v3190
    %4381 = vmatprep.subr.bf16.mxu0 %v3199
    %4382 = vmatpush1.bf16.msra.mxu0 %v3198
    %4383 = vmatprep.subr.bf16.mxu0 %v3207
    %4384 = vmatpush1.bf16.msra.mxu0 %v3206
    %4385 = vmatprep.subr.bf16.mxu0 %v3215
    %4386 = vmatpush1.bf16.msra.mxu0 %v3214
    %4387 = vmatprep.subr.bf16.mxu0 %v3223
    %4388 = vmatpush1.bf16.msra.mxu0 %v3222
    %4389 = vmatprep.subr.bf16.mxu0 %v3231
    %4390 = vmatpush1.bf16.msra.mxu0 %v3230
    %4391 = vmatprep.mubr.bf16.mxu0 %v1175
    %4392 = vmatmul.mubr.bf16.gmra.mrb[0].mxu0 %v1174
    %v4393 = vpop.f32.mrb[0].mxu0
    %v4394 = vadd.f32 %v4353, %v4393
    %v4395 = vpop.f32.mrb[0].mxu0
    %v4396 = vadd.f32 %v4355, %v4395
    %v4397 = vpop.f32.mrb[0].mxu0
    %v4398 = vpop.f32.mrb[0].mxu0
    %4399 = vdwg.mxu0
    %v4400 = vmax.f32 %v3902, 0.0
    %v4401 = vmax.f32 %v3904, 0.0
    %v4402 = vmax.f32 %v4066, 0.0
    %v4403 = vmax.f32 %v4068, 0.0
    %v4404 = vmax.f32 %v4230, 0.0
    %v4405 = vmax.f32 %v4232, 0.0
    %v4406 = vmax.f32 %v4394, 0.0
    %v4407 = vmax.f32 %v4396, 0.0
    %v4408 = vld [vmem:[%s2] sm:$0x3]
    %v4409 = vpack.c.bf16 %v4408, %v4408
    %v4410 = vld [vmem:[%s3] sm:$0xf]
    %v4411 = vld [vmem:[%s3 + $0x4] sm:$0xf]
    %v4412 = vld [vmem:[%s3 + $0x8] sm:$0xf]
    %v4413 = vld [vmem:[%s3 + $0xc] sm:$0xf]
    %v4414 = vld [vmem:[%s3 + $0x10] sm:$0xf]
    %v4415 = vld [vmem:[%s3 + $0x14] sm:$0xf]
    %v4416 = vld [vmem:[%s3 + $0x18] sm:$0xf]
    %v4417 = vld [vmem:[%s3 + $0x1c] sm:$0xf]
    %v4418 = vld [vmem:[%s3 + $0x20] sm:$0xf]
    %v4419 = vld [vmem:[%s3 + $0x24] sm:$0xf]
    %v4420 = vld [vmem:[%s3 + $0x28] sm:$0xf]
    %v4421 = vld [vmem:[%s3 + $0x2c] sm:$0xf]
    %v4422 = vld [vmem:[%s3 + $0x30] sm:$0xf]
    %v4423 = vld [vmem:[%s3 + $0x34] sm:$0xf]
    %v4424 = vld [vmem:[%s3 + $0x38] sm:$0xf]
    %v4425 = vld [vmem:[%s3 + $0x3c] sm:$0xf]
    %v4426 = vld [vmem:[#allocation2] sm:$0x1]
    %v4428 = vlaneseq
    %v4429 = vshrl.u32 %v4428, 7
    %v4430 = vsub.s32 0, %v4429
    %v4431 = vrot.slane %v4426, %v4430
    %v4449 = vunpack.c.l.b16 %v4410
    %v4450 = vunpack.c.l.b16 %v4411
    %v4451 = vunpack.c.l.b16 %v4412
    %v4452 = vunpack.c.l.b16 %v4413
    %v4453 = vunpack.c.l.b16 %v4414
    %v4454 = vunpack.c.l.b16 %v4415
    %v4455 = vunpack.c.l.b16 %v4416
    %v4456 = vunpack.c.l.b16 %v4417
    %v4457 = vunpack.c.l.b16 %v4418
    %v4458 = vunpack.c.l.b16 %v4419
    %v4459 = vunpack.c.l.b16 %v4420
    %v4460 = vunpack.c.l.b16 %v4421
    %v4461 = vunpack.c.l.b16 %v4422
    %v4462 = vunpack.c.l.b16 %v4423
    %v4463 = vunpack.c.l.b16 %v4424
    %v4464 = vunpack.c.l.b16 %v4425
    %v4465 = vpack.c.b16 %v4450, %v4449
    %v4466 = vpack.c.b16 %v4452, %v4451
    %v4467 = vpack.c.b16 %v4454, %v4453
    %v4468 = vpack.c.b16 %v4456, %v4455
    %v4469 = vpack.c.b16 %v4458, %v4457
    %v4470 = vpack.c.b16 %v4460, %v4459
    %v4471 = vpack.c.b16 %v4462, %v4461
    %v4472 = vpack.c.b16 %v4464, %v4463
    %4481 = vmatprep.subr.bf16.mxu0 0
    %4482 = vmatpush1.bf16.msra.mxu0 %v4465
    %4483 = vmatprep.subr.bf16.mxu0 0
    %4484 = vmatpush1.bf16.msra.mxu0 %v4466
    %4485 = vmatprep.subr.bf16.mxu0 0
    %4486 = vmatpush1.bf16.msra.mxu0 %v4467
    %4487 = vmatprep.subr.bf16.mxu0 0
    %4488 = vmatpush1.bf16.msra.mxu0 %v4468
    %4489 = vmatprep.subr.bf16.mxu0 0
    %4490 = vmatpush1.bf16.msra.mxu0 %v4469
    %4491 = vmatprep.subr.bf16.mxu0 0
    %4492 = vmatpush1.bf16.msra.mxu0 %v4470
    %4493 = vmatprep.subr.bf16.mxu0 0
    %4494 = vmatpush1.bf16.msra.mxu0 %v4471
    %4495 = vmatprep.subr.bf16.mxu0 0
    %4496 = vmatpush1.bf16.msra.mxu0 %v4472
    %4497 = vmatprep.subr.bf16.mxu0 0
    %4498 = vmatpush1.bf16.msra.mxu0 0
    %4499 = vmatprep.subr.bf16.mxu0 0
    %4500 = vmatpush1.bf16.msra.mxu0 0
    %4501 = vmatprep.subr.bf16.mxu0 0
    %4502 = vmatpush1.bf16.msra.mxu0 0
    %4503 = vmatprep.subr.bf16.mxu0 0
    %4504 = vmatpush1.bf16.msra.mxu0 0
    %4505 = vmatprep.subr.bf16.mxu0 0
    %4506 = vmatpush1.bf16.msra.mxu0 0
    %4507 = vmatprep.subr.bf16.mxu0 0
    %4508 = vmatpush1.bf16.msra.mxu0 0
    %4509 = vmatprep.subr.bf16.mxu0 0
    %4510 = vmatpush1.bf16.msra.mxu0 0
    %4511 = vmatprep.subr.bf16.mxu0 0
    %4512 = vmatpush1.bf16.msra.mxu0 0
    %4513 = vmatprep.mubr.bf16.mxu0 0
    %4514 = vmatmul.mubr.bf16.gmra.mrb[0].mxu0 %v4409
    %v4515 = vpop.f32.mrb[0].mxu0
    %v4516 = vadd.f32 %v4431, %v4515
    %v4517 = vpop.f32.mrb[0].mxu0
    %v4518 = vpop.f32.mrb[0].mxu0
    %v4519 = vpop.f32.mrb[0].mxu0
    %4520 = vdwg.mxu0
    %v4521 = vmax.f32 %v4516, 0.0
    %v4522 = vpack.c.bf16 %v4521, %v4521
    %v4523 = vld [vmem:[#allocation5] sm:$0xff]
    %v4524 = vld [vmem:[#allocation5 + $0x8] sm:$0xff]
    %v4525 = vld [vmem:[#allocation5 + $0x10] sm:$0xff]
    %v4526 = vld [vmem:[#allocation5 + $0x18] sm:$0xff]
    %v4527 = vld [vmem:[#allocation5 + $0x20] sm:$0xff]
    %v4528 = vld [vmem:[#allocation5 + $0x28] sm:$0xff]
    %v4529 = vld [vmem:[#allocation5 + $0x30] sm:$0xff]
    %v4530 = vld [vmem:[#allocation5 + $0x38] sm:$0xff]
    %v4531 = vld [vmem:[#allocation7] sm:$0x3]
    %v4533 = vlaneseq
    %v4534 = vshrl.u32 %v4533, 7
    %v4535 = vsub.s32 0, %v4534
    %v4536 = vrot.slane %v4531, %v4535
    %v4537 = vlaneseq
    %v4538 = vshrl.u32 %v4537, 7
    %v4539 = vsub.s32 1, %v4538
    %v4540 = vrot.slane %v4531, %v4539
    %v4551 = vunpack.c.l.b16 %v4523
    %v4552 = vunpack.c.h.b16 %v4523
    %v4553 = vunpack.c.l.b16 %v4524
    %v4554 = vunpack.c.h.b16 %v4524
    %v4555 = vunpack.c.l.b16 %v4525
    %v4556 = vunpack.c.h.b16 %v4525
    %v4557 = vunpack.c.l.b16 %v4526
    %v4558 = vunpack.c.h.b16 %v4526
    %v4559 = vunpack.c.l.b16 %v4527
    %v4560 = vunpack.c.h.b16 %v4527
    %v4561 = vunpack.c.l.b16 %v4528
    %v4562 = vunpack.c.h.b16 %v4528
    %v4563 = vunpack.c.l.b16 %v4529
    %v4564 = vunpack.c.h.b16 %v4529
    %v4565 = vunpack.c.l.b16 %v4530
    %v4566 = vunpack.c.h.b16 %v4530
    %v4567 = vpack.c.b16 %v4553, %v4551
    %v4568 = vpack.c.b16 %v4554, %v4552
    %v4569 = vpack.c.b16 %v4557, %v4555
    %v4570 = vpack.c.b16 %v4558, %v4556
    %v4571 = vpack.c.b16 %v4561, %v4559
    %v4572 = vpack.c.b16 %v4562, %v4560
    %v4573 = vpack.c.b16 %v4565, %v4563
    %v4574 = vpack.c.b16 %v4566, %v4564
    %vm4583 = vcmask 523264
    %v4585 = vsel %vm4583, %v4522, 0
    %4587 = vmatprep.subr.bf16.mxu0 %v4568
    %4588 = vmatpush1.bf16.msra.mxu0 %v4567
    %4589 = vmatprep.subr.bf16.mxu0 %v4570
    %4590 = vmatpush1.bf16.msra.mxu0 %v4569
    %4591 = vmatprep.subr.bf16.mxu0 %v4572
    %4592 = vmatpush1.bf16.msra.mxu0 %v4571
    %4593 = vmatprep.subr.bf16.mxu0 %v4574
    %4594 = vmatpush1.bf16.msra.mxu0 %v4573
    %4595 = vmatprep.subr.bf16.mxu0 0
    %4596 = vmatpush1.bf16.msra.mxu0 0
    %4597 = vmatprep.subr.bf16.mxu0 0
    %4598 = vmatpush1.bf16.msra.mxu0 0
    %4599 = vmatprep.subr.bf16.mxu0 0
    %4600 = vmatpush1.bf16.msra.mxu0 0
    %4601 = vmatprep.subr.bf16.mxu0 0
    %4602 = vmatpush1.bf16.msra.mxu0 0
    %4603 = vmatprep.subr.bf16.mxu0 0
    %4604 = vmatpush1.bf16.msra.mxu0 0
    %4605 = vmatprep.subr.bf16.mxu0 0
    %4606 = vmatpush1.bf16.msra.mxu0 0
    %4607 = vmatprep.subr.bf16.mxu0 0
    %4608 = vmatpush1.bf16.msra.mxu0 0
    %4609 = vmatprep.subr.bf16.mxu0 0
    %4610 = vmatpush1.bf16.msra.mxu0 0
    %4611 = vmatprep.subr.bf16.mxu0 0
    %4612 = vmatpush1.bf16.msra.mxu0 0
    %4613 = vmatprep.subr.bf16.mxu0 0
    %4614 = vmatpush1.bf16.msra.mxu0 0
    %4615 = vmatprep.subr.bf16.mxu0 0
    %4616 = vmatpush1.bf16.msra.mxu0 0
    %4617 = vmatprep.subr.bf16.mxu0 0
    %4618 = vmatpush1.bf16.msra.mxu0 0
    %4619 = vmatprep.mubr.bf16.mxu0 0
    %4620 = vmatmul.mubr.bf16.gmra.mrb[0].mxu0 %v4585
    %v4621 = vpop.f32.mrb[0].mxu0
    %v4622 = vadd.f32 %v4536, %v4621
    %v4623 = vpop.f32.mrb[0].mxu0
    %v4624 = vadd.f32 %v4540, %v4623
    %v4625 = vpop.f32.mrb[0].mxu0
    %v4626 = vpop.f32.mrb[0].mxu0
    %4627 = vdwg.mxu0
    %v4628 = vmax.f32 %v4622, 0.0
    %v4629 = vmax.f32 %v4624, 0.0
    %v4630 = vpack.c.bf16 %v4628, %v4628
    %v4631 = vpack.c.bf16 %v4629, %v4629
    %v4632 = vld [vmem:[#allocation11] sm:$0xff]
    %v4633 = vld [vmem:[#allocation11 + $0x8] sm:$0xff]
    %v4634 = vld [vmem:[#allocation11 + $0x10] sm:$0xff]
    %v4635 = vld [vmem:[#allocation11 + $0x18] sm:$0xff]
    %v4636 = vld [vmem:[#allocation11 + $0x20] sm:$0xff]
    %v4637 = vld [vmem:[#allocation11 + $0x28] sm:$0xff]
    %v4638 = vld [vmem:[#allocation11 + $0x30] sm:$0xff]
    %v4639 = vld [vmem:[#allocation11 + $0x38] sm:$0xff]
    %v4640 = vld [vmem:[#allocation11 + $0x40] sm:$0xff]
    %v4641 = vld [vmem:[#allocation11 + $0x48] sm:$0xff]
    %v4642 = vld [vmem:[#allocation11 + $0x50] sm:$0xff]
    %v4643 = vld [vmem:[#allocation11 + $0x58] sm:$0xff]
    %v4644 = vld [vmem:[#allocation11 + $0x60] sm:$0xff]
    %v4645 = vld [vmem:[#allocation11 + $0x68] sm:$0xff]
    %v4646 = vld [vmem:[#allocation11 + $0x70] sm:$0xff]
    %v4647 = vld [vmem:[#allocation11 + $0x78] sm:$0xff]
    %v4648 = vld [vmem:[#allocation11 + $0x80] sm:$0xff]
    %v4649 = vld [vmem:[#allocation11 + $0x88] sm:$0xff]
    %v4650 = vld [vmem:[#allocation11 + $0x90] sm:$0xff]
    %v4651 = vld [vmem:[#allocation11 + $0x98] sm:$0xff]
    %v4652 = vld [vmem:[#allocation11 + $0xa0] sm:$0xff]
    %v4653 = vld [vmem:[#allocation11 + $0xa8] sm:$0xff]
    %v4654 = vld [vmem:[#allocation11 + $0xb0] sm:$0xff]
    %v4655 = vld [vmem:[#allocation11 + $0xb8] sm:$0xff]
    %v4656 = vld [vmem:[#allocation11 + $0xc0] sm:$0xff]
    %v4657 = vld [vmem:[#allocation11 + $0xc8] sm:$0xff]
    %v4658 = vld [vmem:[#allocation11 + $0xd0] sm:$0xff]
    %v4659 = vld [vmem:[#allocation11 + $0xd8] sm:$0xff]
    %v4660 = vld [vmem:[#allocation11 + $0xe0] sm:$0xff]
    %v4661 = vld [vmem:[#allocation11 + $0xe8] sm:$0xff]
    %v4662 = vld [vmem:[#allocation11 + $0xf0] sm:$0xff]
    %v4663 = vld [vmem:[#allocation11 + $0xf8] sm:$0xff]
    %v4664 = vld [vmem:[#allocation13] sm:$0x3]
    %v4666 = vlaneseq
    %v4667 = vshrl.u32 %v4666, 7
    %v4668 = vsub.s32 0, %v4667
    %v4669 = vrot.slane %v4664, %v4668
    %v4670 = vlaneseq
    %v4671 = vshrl.u32 %v4670, 7
    %v4672 = vsub.s32 1, %v4671
    %v4673 = vrot.slane %v4664, %v4672
    %v4708 = vunpack.c.l.b16 %v4632
    %v4709 = vunpack.c.h.b16 %v4632
    %v4710 = vunpack.c.l.b16 %v4633
    %v4711 = vunpack.c.h.b16 %v4633
    %v4712 = vunpack.c.l.b16 %v4634
    %v4713 = vunpack.c.h.b16 %v4634
    %v4714 = vunpack.c.l.b16 %v4635
    %v4715 = vunpack.c.h.b16 %v4635
    %v4716 = vunpack.c.l.b16 %v4636
    %v4717 = vunpack.c.h.b16 %v4636
    %v4718 = vunpack.c.l.b16 %v4637
    %v4719 = vunpack.c.h.b16 %v4637
    %v4720 = vunpack.c.l.b16 %v4638
    %v4721 = vunpack.c.h.b16 %v4638
    %v4722 = vunpack.c.l.b16 %v4639
    %v4723 = vunpack.c.h.b16 %v4639
    %v4724 = vunpack.c.l.b16 %v4640
    %v4725 = vunpack.c.h.b16 %v4640
    %v4726 = vunpack.c.l.b16 %v4641
    %v4727 = vunpack.c.h.b16 %v4641
    %v4728 = vunpack.c.l.b16 %v4642
    %v4729 = vunpack.c.h.b16 %v4642
    %v4730 = vunpack.c.l.b16 %v4643
    %v4731 = vunpack.c.h.b16 %v4643
    %v4732 = vunpack.c.l.b16 %v4644
    %v4733 = vunpack.c.h.b16 %v4644
    %v4734 = vunpack.c.l.b16 %v4645
    %v4735 = vunpack.c.h.b16 %v4645
    %v4736 = vunpack.c.l.b16 %v4646
    %v4737 = vunpack.c.h.b16 %v4646
    %v4738 = vunpack.c.l.b16 %v4647
    %v4739 = vunpack.c.h.b16 %v4647
    %v4740 = vunpack.c.l.b16 %v4648
    %v4741 = vunpack.c.h.b16 %v4648
    %v4742 = vunpack.c.l.b16 %v4649
    %v4743 = vunpack.c.h.b16 %v4649
    %v4744 = vunpack.c.l.b16 %v4650
    %v4745 = vunpack.c.h.b16 %v4650
    %v4746 = vunpack.c.l.b16 %v4651
    %v4747 = vunpack.c.h.b16 %v4651
    %v4748 = vunpack.c.l.b16 %v4652
    %v4749 = vunpack.c.h.b16 %v4652
    %v4750 = vunpack.c.l.b16 %v4653
    %v4751 = vunpack.c.h.b16 %v4653
    %v4752 = vunpack.c.l.b16 %v4654
    %v4753 = vunpack.c.h.b16 %v4654
    %v4754 = vunpack.c.l.b16 %v4655
    %v4755 = vunpack.c.h.b16 %v4655
    %v4756 = vunpack.c.l.b16 %v4656
    %v4757 = vunpack.c.h.b16 %v4656
    %v4758 = vunpack.c.l.b16 %v4657
    %v4759 = vunpack.c.h.b16 %v4657
    %v4760 = vunpack.c.l.b16 %v4658
    %v4761 = vunpack.c.h.b16 %v4658
    %v4762 = vunpack.c.l.b16 %v4659
    %v4763 = vunpack.c.h.b16 %v4659
    %v4764 = vunpack.c.l.b16 %v4660
    %v4765 = vunpack.c.h.b16 %v4660
    %v4766 = vunpack.c.l.b16 %v4661
    %v4767 = vunpack.c.h.b16 %v4661
    %v4768 = vunpack.c.l.b16 %v4662
    %v4769 = vunpack.c.h.b16 %v4662
    %v4770 = vunpack.c.l.b16 %v4663
    %v4771 = vunpack.c.h.b16 %v4663
    %v4772 = vpack.c.b16 %v4710, %v4708
    %v4773 = vpack.c.b16 %v4711, %v4709
    %v4774 = vpack.c.b16 %v4714, %v4712
    %v4775 = vpack.c.b16 %v4715, %v4713
    %v4776 = vpack.c.b16 %v4718, %v4716
    %v4777 = vpack.c.b16 %v4719, %v4717
    %v4778 = vpack.c.b16 %v4722, %v4720
    %v4779 = vpack.c.b16 %v4723, %v4721
    %v4780 = vpack.c.b16 %v4726, %v4724
    %v4781 = vpack.c.b16 %v4727, %v4725
    %v4782 = vpack.c.b16 %v4730, %v4728
    %v4783 = vpack.c.b16 %v4731, %v4729
    %v4784 = vpack.c.b16 %v4734, %v4732
    %v4785 = vpack.c.b16 %v4735, %v4733
    %v4786 = vpack.c.b16 %v4738, %v4736
    %v4787 = vpack.c.b16 %v4739, %v4737
    %v4788 = vpack.c.b16 %v4742, %v4740
    %v4789 = vpack.c.b16 %v4743, %v4741
    %v4790 = vpack.c.b16 %v4746, %v4744
    %v4791 = vpack.c.b16 %v4747, %v4745
    %v4792 = vpack.c.b16 %v4750, %v4748
    %v4793 = vpack.c.b16 %v4751, %v4749
    %v4794 = vpack.c.b16 %v4754, %v4752
    %v4795 = vpack.c.b16 %v4755, %v4753
    %v4796 = vpack.c.b16 %v4758, %v4756
    %v4797 = vpack.c.b16 %v4759, %v4757
    %v4798 = vpack.c.b16 %v4762, %v4760
    %v4799 = vpack.c.b16 %v4763, %v4761
    %v4800 = vpack.c.b16 %v4766, %v4764
    %v4801 = vpack.c.b16 %v4767, %v4765
    %v4802 = vpack.c.b16 %v4770, %v4768
    %v4803 = vpack.c.b16 %v4771, %v4769
    %4836 = vmatprep.subr.bf16.mxu0 %v4773
    %4837 = vmatpush1.bf16.msra.mxu0 %v4772
    %4838 = vmatprep.subr.bf16.mxu0 %v4775
    %4839 = vmatpush1.bf16.msra.mxu0 %v4774
    %4840 = vmatprep.subr.bf16.mxu0 %v4777
    %4841 = vmatpush1.bf16.msra.mxu0 %v4776
    %4842 = vmatprep.subr.bf16.mxu0 %v4779
    %4843 = vmatpush1.bf16.msra.mxu0 %v4778
    %4844 = vmatprep.subr.bf16.mxu0 %v4781
    %4845 = vmatpush1.bf16.msra.mxu0 %v4780
    %4846 = vmatprep.subr.bf16.mxu0 %v4783
    %4847 = vmatpush1.bf16.msra.mxu0 %v4782
    %4848 = vmatprep.subr.bf16.mxu0 %v4785
    %4849 = vmatpush1.bf16.msra.mxu0 %v4784
    %4850 = vmatprep.subr.bf16.mxu0 %v4787
    %4851 = vmatpush1.bf16.msra.mxu0 %v4786
    %4852 = vmatprep.subr.bf16.mxu0 %v4789
    %4853 = vmatpush1.bf16.msra.mxu0 %v4788
    %4854 = vmatprep.subr.bf16.mxu0 %v4791
    %4855 = vmatpush1.bf16.msra.mxu0 %v4790
    %4856 = vmatprep.subr.bf16.mxu0 %v4793
    %4857 = vmatpush1.bf16.msra.mxu0 %v4792
    %4858 = vmatprep.subr.bf16.mxu0 %v4795
    %4859 = vmatpush1.bf16.msra.mxu0 %v4794
    %4860 = vmatprep.subr.bf16.mxu0 %v4797
    %4861 = vmatpush1.bf16.msra.mxu0 %v4796
    %4862 = vmatprep.subr.bf16.mxu0 %v4799
    %4863 = vmatpush1.bf16.msra.mxu0 %v4798
    %4864 = vmatprep.subr.bf16.mxu0 %v4801
    %4865 = vmatpush1.bf16.msra.mxu0 %v4800
    %4866 = vmatprep.subr.bf16.mxu0 %v4803
    %4867 = vmatpush1.bf16.msra.mxu0 %v4802
    %4868 = vmatprep.mubr.bf16.mxu0 %v4631
    %4869 = vmatmul.mubr.bf16.gmra.mrb[0].mxu0 %v4630
    %v4870 = vpop.f32.mrb[0].mxu0
    %v4871 = vadd.f32 %v4669, %v4870
    %v4872 = vpop.f32.mrb[0].mxu0
    %v4873 = vadd.f32 %v4673, %v4872
    %v4874 = vpop.f32.mrb[0].mxu0
    %v4875 = vpop.f32.mrb[0].mxu0
    %4876 = vdwg.mxu0
    %v4877 = vmax.f32 %v4871, 0.0
    %v4878 = vmax.f32 %v4873, 0.0
    %v4879 = vpack.c.bf16 %v4877, %v4877
    %v4880 = vpack.c.bf16 %v4878, %v4878
    %v4881 = vld [vmem:[#allocation14] sm:$0xff]
    %v4882 = vld [vmem:[#allocation14 + $0x8] sm:$0xff]
    %v4883 = vld [vmem:[#allocation14 + $0x10] sm:$0xff]
    %v4884 = vld [vmem:[#allocation14 + $0x18] sm:$0xff]
    %v4885 = vld [vmem:[#allocation14 + $0x20] sm:$0xff]
    %v4886 = vld [vmem:[#allocation14 + $0x28] sm:$0xff]
    %v4887 = vld [vmem:[#allocation14 + $0x30] sm:$0xff]
    %v4888 = vld [vmem:[#allocation14 + $0x38] sm:$0xff]
    %v4889 = vld [vmem:[#allocation14 + $0x40] sm:$0xff]
    %v4890 = vld [vmem:[#allocation14 + $0x48] sm:$0xff]
    %v4891 = vld [vmem:[#allocation14 + $0x50] sm:$0xff]
    %v4892 = vld [vmem:[#allocation14 + $0x58] sm:$0xff]
    %v4893 = vld [vmem:[#allocation14 + $0x60] sm:$0xff]
    %v4894 = vld [vmem:[#allocation14 + $0x68] sm:$0xff]
    %v4895 = vld [vmem:[#allocation14 + $0x70] sm:$0xff]
    %v4896 = vld [vmem:[#allocation14 + $0x78] sm:$0xff]
    %v4897 = vld [vmem:[#allocation14 + $0x80] sm:$0xff]
    %v4898 = vld [vmem:[#allocation14 + $0x88] sm:$0xff]
    %v4899 = vld [vmem:[#allocation14 + $0x90] sm:$0xff]
    %v4900 = vld [vmem:[#allocation14 + $0x98] sm:$0xff]
    %v4901 = vld [vmem:[#allocation14 + $0xa0] sm:$0xff]
    %v4902 = vld [vmem:[#allocation14 + $0xa8] sm:$0xff]
    %v4903 = vld [vmem:[#allocation14 + $0xb0] sm:$0xff]
    %v4904 = vld [vmem:[#allocation14 + $0xb8] sm:$0xff]
    %v4905 = vld [vmem:[#allocation14 + $0xc0] sm:$0xff]
    %v4906 = vld [vmem:[#allocation14 + $0xc8] sm:$0xff]
    %v4907 = vld [vmem:[#allocation14 + $0xd0] sm:$0xff]
    %v4908 = vld [vmem:[#allocation14 + $0xd8] sm:$0xff]
    %v4909 = vld [vmem:[#allocation14 + $0xe0] sm:$0xff]
    %v4910 = vld [vmem:[#allocation14 + $0xe8] sm:$0xff]
    %v4911 = vld [vmem:[#allocation14 + $0xf0] sm:$0xff]
    %v4912 = vld [vmem:[#allocation14 + $0xf8] sm:$0xff]
    %v4913 = vld [vmem:[#allocation14 + $0x100] sm:$0xff]
    %v4914 = vld [vmem:[#allocation14 + $0x108] sm:$0xff]
    %v4915 = vld [vmem:[#allocation14 + $0x110] sm:$0xff]
    %v4916 = vld [vmem:[#allocation14 + $0x118] sm:$0xff]
    %v4917 = vld [vmem:[#allocation14 + $0x120] sm:$0xff]
    %v4918 = vld [vmem:[#allocation14 + $0x128] sm:$0xff]
    %v4919 = vld [vmem:[#allocation14 + $0x130] sm:$0xff]
    %v4920 = vld [vmem:[#allocation14 + $0x138] sm:$0xff]
    %v4921 = vld [vmem:[#allocation14 + $0x140] sm:$0xff]
    %v4922 = vld [vmem:[#allocation14 + $0x148] sm:$0xff]
    %v4923 = vld [vmem:[#allocation14 + $0x150] sm:$0xff]
    %v4924 = vld [vmem:[#allocation14 + $0x158] sm:$0xff]
    %v4925 = vld [vmem:[#allocation14 + $0x160] sm:$0xff]
    %v4926 = vld [vmem:[#allocation14 + $0x168] sm:$0xff]
    %v4927 = vld [vmem:[#allocation14 + $0x170] sm:$0xff]
    %v4928 = vld [vmem:[#allocation14 + $0x178] sm:$0xff]
    %v4929 = vld [vmem:[#allocation14 + $0x180] sm:$0xff]
    %v4930 = vld [vmem:[#allocation14 + $0x188] sm:$0xff]
    %v4931 = vld [vmem:[#allocation14 + $0x190] sm:$0xff]
    %v4932 = vld [vmem:[#allocation14 + $0x198] sm:$0xff]
    %v4933 = vld [vmem:[#allocation14 + $0x1a0] sm:$0xff]
    %v4934 = vld [vmem:[#allocation14 + $0x1a8] sm:$0xff]
    %v4935 = vld [vmem:[#allocation14 + $0x1b0] sm:$0xff]
    %v4936 = vld [vmem:[#allocation14 + $0x1b8] sm:$0xff]
    %v4937 = vld [vmem:[#allocation14 + $0x1c0] sm:$0xff]
    %v4938 = vld [vmem:[#allocation14 + $0x1c8] sm:$0xff]
    %v4939 = vld [vmem:[#allocation14 + $0x1d0] sm:$0xff]
    %v4940 = vld [vmem:[#allocation14 + $0x1d8] sm:$0xff]
    %v4941 = vld [vmem:[#allocation14 + $0x1e0] sm:$0xff]
    %v4942 = vld [vmem:[#allocation14 + $0x1e8] sm:$0xff]
    %v4943 = vld [vmem:[#allocation14 + $0x1f0] sm:$0xff]
    %v4944 = vld [vmem:[#allocation14 + $0x1f8] sm:$0xff]
    %v4945 = vld [vmem:[#allocation16] sm:$0xf]
    %v4947 = vlaneseq
    %v4948 = vshrl.u32 %v4947, 7
    %v4949 = vsub.s32 0, %v4948
    %v4950 = vrot.slane %v4945, %v4949
    %v4951 = vlaneseq
    %v4952 = vshrl.u32 %v4951, 7
    %v4953 = vsub.s32 1, %v4952
    %v4954 = vrot.slane %v4945, %v4953
    %v4955 = vlaneseq
    %v4956 = vshrl.u32 %v4955, 7
    %v4957 = vsub.s32 2, %v4956
    %v4958 = vrot.slane %v4945, %v4957
    %v4959 = vlaneseq
    %v4960 = vshrl.u32 %v4959, 7
    %v4961 = vsub.s32 3, %v4960
    %v4962 = vrot.slane %v4945, %v4961
    %v5031 = vunpack.c.l.b16 %v4881
    %v5032 = vunpack.c.h.b16 %v4881
    %v5033 = vunpack.c.l.b16 %v4882
    %v5034 = vunpack.c.h.b16 %v4882
    %v5035 = vunpack.c.l.b16 %v4883
    %v5036 = vunpack.c.h.b16 %v4883
    %v5037 = vunpack.c.l.b16 %v4884
    %v5038 = vunpack.c.h.b16 %v4884
    %v5039 = vunpack.c.l.b16 %v4885
    %v5040 = vunpack.c.h.b16 %v4885
    %v5041 = vunpack.c.l.b16 %v4886
    %v5042 = vunpack.c.h.b16 %v4886
    %v5043 = vunpack.c.l.b16 %v4887
    %v5044 = vunpack.c.h.b16 %v4887
    %v5045 = vunpack.c.l.b16 %v4888
    %v5046 = vunpack.c.h.b16 %v4888
    %v5047 = vunpack.c.l.b16 %v4889
    %v5048 = vunpack.c.h.b16 %v4889
    %v5049 = vunpack.c.l.b16 %v4890
    %v5050 = vunpack.c.h.b16 %v4890
    %v5051 = vunpack.c.l.b16 %v4891
    %v5052 = vunpack.c.h.b16 %v4891
    %v5053 = vunpack.c.l.b16 %v4892
    %v5054 = vunpack.c.h.b16 %v4892
    %v5055 = vunpack.c.l.b16 %v4893
    %v5056 = vunpack.c.h.b16 %v4893
    %v5057 = vunpack.c.l.b16 %v4894
    %v5058 = vunpack.c.h.b16 %v4894
    %v5059 = vunpack.c.l.b16 %v4895
    %v5060 = vunpack.c.h.b16 %v4895
    %v5061 = vunpack.c.l.b16 %v4896
    %v5062 = vunpack.c.h.b16 %v4896
    %v5063 = vunpack.c.l.b16 %v4897
    %v5064 = vunpack.c.h.b16 %v4897
    %v5065 = vunpack.c.l.b16 %v4898
    %v5066 = vunpack.c.h.b16 %v4898
    %v5067 = vunpack.c.l.b16 %v4899
    %v5068 = vunpack.c.h.b16 %v4899
    %v5069 = vunpack.c.l.b16 %v4900
    %v5070 = vunpack.c.h.b16 %v4900
    %v5071 = vunpack.c.l.b16 %v4901
    %v5072 = vunpack.c.h.b16 %v4901
    %v5073 = vunpack.c.l.b16 %v4902
    %v5074 = vunpack.c.h.b16 %v4902
    %v5075 = vunpack.c.l.b16 %v4903
    %v5076 = vunpack.c.h.b16 %v4903
    %v5077 = vunpack.c.l.b16 %v4904
    %v5078 = vunpack.c.h.b16 %v4904
    %v5079 = vunpack.c.l.b16 %v4905
    %v5080 = vunpack.c.h.b16 %v4905
    %v5081 = vunpack.c.l.b16 %v4906
    %v5082 = vunpack.c.h.b16 %v4906
    %v5083 = vunpack.c.l.b16 %v4907
    %v5084 = vunpack.c.h.b16 %v4907
    %v5085 = vunpack.c.l.b16 %v4908
    %v5086 = vunpack.c.h.b16 %v4908
    %v5087 = vunpack.c.l.b16 %v4909
    %v5088 = vunpack.c.h.b16 %v4909
    %v5089 = vunpack.c.l.b16 %v4910
    %v5090 = vunpack.c.h.b16 %v4910
    %v5091 = vunpack.c.l.b16 %v4911
    %v5092 = vunpack.c.h.b16 %v4911
    %v5093 = vunpack.c.l.b16 %v4912
    %v5094 = vunpack.c.h.b16 %v4912
    %v5095 = vunpack.c.l.b16 %v4913
    %v5096 = vunpack.c.h.b16 %v4913
    %v5097 = vunpack.c.l.b16 %v4914
    %v5098 = vunpack.c.h.b16 %v4914
    %v5099 = vunpack.c.l.b16 %v4915
    %v5100 = vunpack.c.h.b16 %v4915
    %v5101 = vunpack.c.l.b16 %v4916
    %v5102 = vunpack.c.h.b16 %v4916
    %v5103 = vunpack.c.l.b16 %v4917
    %v5104 = vunpack.c.h.b16 %v4917
    %v5105 = vunpack.c.l.b16 %v4918
    %v5106 = vunpack.c.h.b16 %v4918
    %v5107 = vunpack.c.l.b16 %v4919
    %v5108 = vunpack.c.h.b16 %v4919
    %v5109 = vunpack.c.l.b16 %v4920
    %v5110 = vunpack.c.h.b16 %v4920
    %v5111 = vunpack.c.l.b16 %v4921
    %v5112 = vunpack.c.h.b16 %v4921
    %v5113 = vunpack.c.l.b16 %v4922
    %v5114 = vunpack.c.h.b16 %v4922
    %v5115 = vunpack.c.l.b16 %v4923
    %v5116 = vunpack.c.h.b16 %v4923
    %v5117 = vunpack.c.l.b16 %v4924
    %v5118 = vunpack.c.h.b16 %v4924
    %v5119 = vunpack.c.l.b16 %v4925
    %v5120 = vunpack.c.h.b16 %v4925
    %v5121 = vunpack.c.l.b16 %v4926
    %v5122 = vunpack.c.h.b16 %v4926
    %v5123 = vunpack.c.l.b16 %v4927
    %v5124 = vunpack.c.h.b16 %v4927
    %v5125 = vunpack.c.l.b16 %v4928
    %v5126 = vunpack.c.h.b16 %v4928
    %v5127 = vunpack.c.l.b16 %v4929
    %v5128 = vunpack.c.h.b16 %v4929
    %v5129 = vunpack.c.l.b16 %v4930
    %v5130 = vunpack.c.h.b16 %v4930
    %v5131 = vunpack.c.l.b16 %v4931
    %v5132 = vunpack.c.h.b16 %v4931
    %v5133 = vunpack.c.l.b16 %v4932
    %v5134 = vunpack.c.h.b16 %v4932
    %v5135 = vunpack.c.l.b16 %v4933
    %v5136 = vunpack.c.h.b16 %v4933
    %v5137 = vunpack.c.l.b16 %v4934
    %v5138 = vunpack.c.h.b16 %v4934
    %v5139 = vunpack.c.l.b16 %v4935
    %v5140 = vunpack.c.h.b16 %v4935
    %v5141 = vunpack.c.l.b16 %v4936
    %v5142 = vunpack.c.h.b16 %v4936
    %v5143 = vunpack.c.l.b16 %v4937
    %v5144 = vunpack.c.h.b16 %v4937
    %v5145 = vunpack.c.l.b16 %v4938
    %v5146 = vunpack.c.h.b16 %v4938
    %v5147 = vunpack.c.l.b16 %v4939
    %v5148 = vunpack.c.h.b16 %v4939
    %v5149 = vunpack.c.l.b16 %v4940
    %v5150 = vunpack.c.h.b16 %v4940
    %v5151 = vunpack.c.l.b16 %v4941
    %v5152 = vunpack.c.h.b16 %v4941
    %v5153 = vunpack.c.l.b16 %v4942
    %v5154 = vunpack.c.h.b16 %v4942
    %v5155 = vunpack.c.l.b16 %v4943
    %v5156 = vunpack.c.h.b16 %v4943
    %v5157 = vunpack.c.l.b16 %v4944
    %v5158 = vunpack.c.h.b16 %v4944
    %v5159 = vpack.c.b16 %v5035, %v5031
    %v5160 = vpack.c.b16 %v5036, %v5032
    %v5161 = vpack.c.b16 %v5037, %v5033
    %v5162 = vpack.c.b16 %v5038, %v5034
    %v5163 = vpack.c.b16 %v5043, %v5039
    %v5164 = vpack.c.b16 %v5044, %v5040
    %v5165 = vpack.c.b16 %v5045, %v5041
    %v5166 = vpack.c.b16 %v5046, %v5042
    %v5167 = vpack.c.b16 %v5051, %v5047
    %v5168 = vpack.c.b16 %v5052, %v5048
    %v5169 = vpack.c.b16 %v5053, %v5049
    %v5170 = vpack.c.b16 %v5054, %v5050
    %v5171 = vpack.c.b16 %v5059, %v5055
    %v5172 = vpack.c.b16 %v5060, %v5056
    %v5173 = vpack.c.b16 %v5061, %v5057
    %v5174 = vpack.c.b16 %v5062, %v5058
    %v5175 = vpack.c.b16 %v5067, %v5063
    %v5176 = vpack.c.b16 %v5068, %v5064
    %v5177 = vpack.c.b16 %v5069, %v5065
    %v5178 = vpack.c.b16 %v5070, %v5066
    %v5179 = vpack.c.b16 %v5075, %v5071
    %v5180 = vpack.c.b16 %v5076, %v5072
    %v5181 = vpack.c.b16 %v5077, %v5073
    %v5182 = vpack.c.b16 %v5078, %v5074
    %v5183 = vpack.c.b16 %v5083, %v5079
    %v5184 = vpack.c.b16 %v5084, %v5080
    %v5185 = vpack.c.b16 %v5085, %v5081
    %v5186 = vpack.c.b16 %v5086, %v5082
    %v5187 = vpack.c.b16 %v5091, %v5087
    %v5188 = vpack.c.b16 %v5092, %v5088
    %v5189 = vpack.c.b16 %v5093, %v5089
    %v5190 = vpack.c.b16 %v5094, %v5090
    %v5191 = vpack.c.b16 %v5099, %v5095
    %v5192 = vpack.c.b16 %v5100, %v5096
    %v5193 = vpack.c.b16 %v5101, %v5097
    %v5194 = vpack.c.b16 %v5102, %v5098
    %v5195 = vpack.c.b16 %v5107, %v5103
    %v5196 = vpack.c.b16 %v5108, %v5104
    %v5197 = vpack.c.b16 %v5109, %v5105
    %v5198 = vpack.c.b16 %v5110, %v5106
    %v5199 = vpack.c.b16 %v5115, %v5111
    %v5200 = vpack.c.b16 %v5116, %v5112
    %v5201 = vpack.c.b16 %v5117, %v5113
    %v5202 = vpack.c.b16 %v5118, %v5114
    %v5203 = vpack.c.b16 %v5123, %v5119
    %v5204 = vpack.c.b16 %v5124, %v5120
    %v5205 = vpack.c.b16 %v5125, %v5121
    %v5206 = vpack.c.b16 %v5126, %v5122
    %v5207 = vpack.c.b16 %v5131, %v5127
    %v5208 = vpack.c.b16 %v5132, %v5128
    %v5209 = vpack.c.b16 %v5133, %v5129
    %v5210 = vpack.c.b16 %v5134, %v5130
    %v5211 = vpack.c.b16 %v5139, %v5135
    %v5212 = vpack.c.b16 %v5140, %v5136
    %v5213 = vpack.c.b16 %v5141, %v5137
    %v5214 = vpack.c.b16 %v5142, %v5138
    %v5215 = vpack.c.b16 %v5147, %v5143
    %v5216 = vpack.c.b16 %v5148, %v5144
    %v5217 = vpack.c.b16 %v5149, %v5145
    %v5218 = vpack.c.b16 %v5150, %v5146
    %v5219 = vpack.c.b16 %v5155, %v5151
    %v5220 = vpack.c.b16 %v5156, %v5152
    %v5221 = vpack.c.b16 %v5157, %v5153
    %v5222 = vpack.c.b16 %v5158, %v5154
    %5287 = vmatprep.subr.bf16.mxu0 %v5160
    %5288 = vmatpush1.bf16.msra.mxu0 %v5159
    %5289 = vmatprep.subr.bf16.mxu0 %v5164
    %5290 = vmatpush1.bf16.msra.mxu0 %v5163
    %5291 = vmatprep.subr.bf16.mxu0 %v5168
    %5292 = vmatpush1.bf16.msra.mxu0 %v5167
    %5293 = vmatprep.subr.bf16.mxu0 %v5172
    %5294 = vmatpush1.bf16.msra.mxu0 %v5171
    %5295 = vmatprep.subr.bf16.mxu0 %v5176
    %5296 = vmatpush1.bf16.msra.mxu0 %v5175
    %5297 = vmatprep.subr.bf16.mxu0 %v5180
    %5298 = vmatpush1.bf16.msra.mxu0 %v5179
    %5299 = vmatprep.subr.bf16.mxu0 %v5184
    %5300 = vmatpush1.bf16.msra.mxu0 %v5183
    %5301 = vmatprep.subr.bf16.mxu0 %v5188
    %5302 = vmatpush1.bf16.msra.mxu0 %v5187
    %5303 = vmatprep.subr.bf16.mxu0 %v5192
    %5304 = vmatpush1.bf16.msra.mxu0 %v5191
    %5305 = vmatprep.subr.bf16.mxu0 %v5196
    %5306 = vmatpush1.bf16.msra.mxu0 %v5195
    %5307 = vmatprep.subr.bf16.mxu0 %v5200
    %5308 = vmatpush1.bf16.msra.mxu0 %v5199
    %5309 = vmatprep.subr.bf16.mxu0 %v5204
    %5310 = vmatpush1.bf16.msra.mxu0 %v5203
    %5311 = vmatprep.subr.bf16.mxu0 %v5208
    %5312 = vmatpush1.bf16.msra.mxu0 %v5207
    %5313 = vmatprep.subr.bf16.mxu0 %v5212
    %5314 = vmatpush1.bf16.msra.mxu0 %v5211
    %5315 = vmatprep.subr.bf16.mxu0 %v5216
    %5316 = vmatpush1.bf16.msra.mxu0 %v5215
    %5317 = vmatprep.subr.bf16.mxu0 %v5220
    %5318 = vmatpush1.bf16.msra.mxu0 %v5219
    %5319 = vmatprep.mubr.bf16.mxu0 %v4880
    %5320 = vmatmul.mubr.bf16.gmra.mrb[0].mxu0 %v4879
    %v5321 = vpop.f32.mrb[0].mxu0
    %v5322 = vadd.f32 %v4950, %v5321
    %v5323 = vpop.f32.mrb[0].mxu0
    %v5324 = vadd.f32 %v4954, %v5323
    %v5325 = vpop.f32.mrb[0].mxu0
    %v5326 = vpop.f32.mrb[0].mxu0
    %5327 = vdwg.mxu0
    %5328 = vmatprep.subr.bf16.mxu0 %v5162
    %5329 = vmatpush1.bf16.msra.mxu0 %v5161
    %5330 = vmatprep.subr.bf16.mxu0 %v5166
    %5331 = vmatpush1.bf16.msra.mxu0 %v5165
    %5332 = vmatprep.subr.bf16.mxu0 %v5170
    %5333 = vmatpush1.bf16.msra.mxu0 %v5169
    %5334 = vmatprep.subr.bf16.mxu0 %v5174
    %5335 = vmatpush1.bf16.msra.mxu0 %v5173
    %5336 = vmatprep.subr.bf16.mxu0 %v5178
    %5337 = vmatpush1.bf16.msra.mxu0 %v5177
    %5338 = vmatprep.subr.bf16.mxu0 %v5182
    %5339 = vmatpush1.bf16.msra.mxu0 %v5181
    %5340 = vmatprep.subr.bf16.mxu0 %v5186
    %5341 = vmatpush1.bf16.msra.mxu0 %v5185
    %5342 = vmatprep.subr.bf16.mxu0 %v5190
    %5343 = vmatpush1.bf16.msra.mxu0 %v5189
    %5344 = vmatprep.subr.bf16.mxu0 %v5194
    %5345 = vmatpush1.bf16.msra.mxu0 %v5193
    %5346 = vmatprep.subr.bf16.mxu0 %v5198
    %5347 = vmatpush1.bf16.msra.mxu0 %v5197
    %5348 = vmatprep.subr.bf16.mxu0 %v5202
    %5349 = vmatpush1.bf16.msra.mxu0 %v5201
    %5350 = vmatprep.subr.bf16.mxu0 %v5206
    %5351 = vmatpush1.bf16.msra.mxu0 %v5205
    %5352 = vmatprep.subr.bf16.mxu0 %v5210
    %5353 = vmatpush1.bf16.msra.mxu0 %v5209
    %5354 = vmatprep.subr.bf16.mxu0 %v5214
    %5355 = vmatpush1.bf16.msra.mxu0 %v5213
    %5356 = vmatprep.subr.bf16.mxu0 %v5218
    %5357 = vmatpush1.bf16.msra.mxu0 %v5217
    %5358 = vmatprep.subr.bf16.mxu0 %v5222
    %5359 = vmatpush1.bf16.msra.mxu0 %v5221
    %5360 = vmatprep.mubr.bf16.mxu0 %v4880
    %5361 = vmatmul.mubr.bf16.gmra.mrb[0].mxu0 %v4879
    %v5362 = vpop.f32.mrb[0].mxu0
    %v5363 = vadd.f32 %v4958, %v5362
    %v5364 = vpop.f32.mrb[0].mxu0
    %v5365 = vadd.f32 %v4962, %v5364
    %v5366 = vpop.f32.mrb[0].mxu0
    %v5367 = vpop.f32.mrb[0].mxu0
    %5368 = vdwg.mxu0
    %v5369 = vmax.f32 %v5322, 0.0
    %v5370 = vmax.f32 %v5324, 0.0
    %v5371 = vmax.f32 %v5363, 0.0
    %v5372 = vmax.f32 %v5365, 0.0
    %v5373 = vpack.c.bf16 %v4400, %v4400
    %v5374 = vpack.c.bf16 %v4401, %v4401
    %v5375 = vpack.c.bf16 %v4402, %v4402
    %v5376 = vpack.c.bf16 %v4403, %v4403
    %v5377 = vpack.c.bf16 %v4404, %v4404
    %v5378 = vpack.c.bf16 %v4405, %v4405
    %v5379 = vpack.c.bf16 %v4406, %v4406
    %v5380 = vpack.c.bf16 %v4407, %v4407
    %v5381 = vld [vmem:[#allocation17] sm:$0xf]
    %v5382 = vld [vmem:[#allocation17 + $0x4] sm:$0xf]
    %v5383 = vld [vmem:[#allocation17 + $0x8] sm:$0xf]
    %v5384 = vld [vmem:[#allocation17 + $0xc] sm:$0xf]
    %v5385 = vld [vmem:[#allocation17 + $0x10] sm:$0xf]
    %v5386 = vld [vmem:[#allocation17 + $0x14] sm:$0xf]
    %v5387 = vld [vmem:[#allocation17 + $0x18] sm:$0xf]
    %v5388 = vld [vmem:[#allocation17 + $0x1c] sm:$0xf]
    %v5389 = vld [vmem:[#allocation17 + $0x20] sm:$0xf]
    %v5390 = vld [vmem:[#allocation17 + $0x24] sm:$0xf]
    %v5391 = vld [vmem:[#allocation17 + $0x28] sm:$0xf]
    %v5392 = vld [vmem:[#allocation17 + $0x2c] sm:$0xf]
    %v5393 = vld [vmem:[#allocation17 + $0x30] sm:$0xf]
    %v5394 = vld [vmem:[#allocation17 + $0x34] sm:$0xf]
    %v5395 = vld [vmem:[#allocation17 + $0x38] sm:$0xf]
    %v5396 = vld [vmem:[#allocation17 + $0x3c] sm:$0xf]
    %v5397 = vld [vmem:[#allocation17 + $0x40] sm:$0xf]
    %v5398 = vld [vmem:[#allocation17 + $0x44] sm:$0xf]
    %v5399 = vld [vmem:[#allocation17 + $0x48] sm:$0xf]
    %v5400 = vld [vmem:[#allocation17 + $0x4c] sm:$0xf]
    %v5401 = vld [vmem:[#allocation17 + $0x50] sm:$0xf]
    %v5402 = vld [vmem:[#allocation17 + $0x54] sm:$0xf]
    %v5403 = vld [vmem:[#allocation17 + $0x58] sm:$0xf]
    %v5404 = vld [vmem:[#allocation17 + $0x5c] sm:$0xf]
    %v5405 = vld [vmem:[#allocation17 + $0x60] sm:$0xf]
    %v5406 = vld [vmem:[#allocation17 + $0x64] sm:$0xf]
    %v5407 = vld [vmem:[#allocation17 + $0x68] sm:$0xf]
    %v5408 = vld [vmem:[#allocation17 + $0x6c] sm:$0xf]
    %v5409 = vld [vmem:[#allocation17 + $0x70] sm:$0xf]
    %v5410 = vld [vmem:[#allocation17 + $0x74] sm:$0xf]
    %v5411 = vld [vmem:[#allocation17 + $0x78] sm:$0xf]
    %v5412 = vld [vmem:[#allocation17 + $0x7c] sm:$0xf]
    %v5413 = vld [vmem:[#allocation17 + $0x80] sm:$0xf]
    %v5414 = vld [vmem:[#allocation17 + $0x84] sm:$0xf]
    %v5415 = vld [vmem:[#allocation17 + $0x88] sm:$0xf]
    %v5416 = vld [vmem:[#allocation17 + $0x8c] sm:$0xf]
    %v5417 = vld [vmem:[#allocation17 + $0x90] sm:$0xf]
    %v5418 = vld [vmem:[#allocation17 + $0x94] sm:$0xf]
    %v5419 = vld [vmem:[#allocation17 + $0x98] sm:$0xf]
    %v5420 = vld [vmem:[#allocation17 + $0x9c] sm:$0xf]
    %v5421 = vld [vmem:[#allocation17 + $0xa0] sm:$0xf]
    %v5422 = vld [vmem:[#allocation17 + $0xa4] sm:$0xf]
    %v5423 = vld [vmem:[#allocation17 + $0xa8] sm:$0xf]
    %v5424 = vld [vmem:[#allocation17 + $0xac] sm:$0xf]
    %v5425 = vld [vmem:[#allocation17 + $0xb0] sm:$0xf]
    %v5426 = vld [vmem:[#allocation17 + $0xb4] sm:$0xf]
    %v5427 = vld [vmem:[#allocation17 + $0xb8] sm:$0xf]
    %v5428 = vld [vmem:[#allocation17 + $0xbc] sm:$0xf]
    %v5429 = vld [vmem:[#allocation17 + $0xc0] sm:$0xf]
    %v5430 = vld [vmem:[#allocation17 + $0xc4] sm:$0xf]
    %v5431 = vld [vmem:[#allocation17 + $0xc8] sm:$0xf]
    %v5432 = vld [vmem:[#allocation17 + $0xcc] sm:$0xf]
    %v5433 = vld [vmem:[#allocation17 + $0xd0] sm:$0xf]
    %v5434 = vld [vmem:[#allocation17 + $0xd4] sm:$0xf]
    %v5435 = vld [vmem:[#allocation17 + $0xd8] sm:$0xf]
    %v5436 = vld [vmem:[#allocation17 + $0xdc] sm:$0xf]
    %v5437 = vld [vmem:[#allocation17 + $0xe0] sm:$0xf]
    %v5438 = vld [vmem:[#allocation17 + $0xe4] sm:$0xf]
    %v5439 = vld [vmem:[#allocation17 + $0xe8] sm:$0xf]
    %v5440 = vld [vmem:[#allocation17 + $0xec] sm:$0xf]
    %v5441 = vld [vmem:[#allocation17 + $0xf0] sm:$0xf]
    %v5442 = vld [vmem:[#allocation17 + $0xf4] sm:$0xf]
    %v5443 = vld [vmem:[#allocation17 + $0xf8] sm:$0xf]
    %v5444 = vld [vmem:[#allocation17 + $0xfc] sm:$0xf]
    %v5445 = vld [vmem:[#allocation17 + $0x100] sm:$0xf]
    %v5446 = vld [vmem:[#allocation17 + $0x104] sm:$0xf]
    %v5447 = vld [vmem:[#allocation17 + $0x108] sm:$0xf]
    %v5448 = vld [vmem:[#allocation17 + $0x10c] sm:$0xf]
    %v5449 = vld [vmem:[#allocation17 + $0x110] sm:$0xf]
    %v5450 = vld [vmem:[#allocation17 + $0x114] sm:$0xf]
    %v5451 = vld [vmem:[#allocation17 + $0x118] sm:$0xf]
    %v5452 = vld [vmem:[#allocation17 + $0x11c] sm:$0xf]
    %v5453 = vld [vmem:[#allocation17 + $0x120] sm:$0xf]
    %v5454 = vld [vmem:[#allocation17 + $0x124] sm:$0xf]
    %v5455 = vld [vmem:[#allocation17 + $0x128] sm:$0xf]
    %v5456 = vld [vmem:[#allocation17 + $0x12c] sm:$0xf]
    %v5457 = vld [vmem:[#allocation17 + $0x130] sm:$0xf]
    %v5458 = vld [vmem:[#allocation17 + $0x134] sm:$0xf]
    %v5459 = vld [vmem:[#allocation17 + $0x138] sm:$0xf]
    %v5460 = vld [vmem:[#allocation17 + $0x13c] sm:$0xf]
    %v5461 = vld [vmem:[#allocation17 + $0x140] sm:$0xf]
    %v5462 = vld [vmem:[#allocation17 + $0x144] sm:$0xf]
    %v5463 = vld [vmem:[#allocation17 + $0x148] sm:$0xf]
    %v5464 = vld [vmem:[#allocation17 + $0x14c] sm:$0xf]
    %v5465 = vld [vmem:[#allocation17 + $0x150] sm:$0xf]
    %v5466 = vld [vmem:[#allocation17 + $0x154] sm:$0xf]
    %v5467 = vld [vmem:[#allocation17 + $0x158] sm:$0xf]
    %v5468 = vld [vmem:[#allocation17 + $0x15c] sm:$0xf]
    %v5469 = vld [vmem:[#allocation17 + $0x160] sm:$0xf]
    %v5470 = vld [vmem:[#allocation17 + $0x164] sm:$0xf]
    %v5471 = vld [vmem:[#allocation17 + $0x168] sm:$0xf]
    %v5472 = vld [vmem:[#allocation17 + $0x16c] sm:$0xf]
    %v5473 = vld [vmem:[#allocation17 + $0x170] sm:$0xf]
    %v5474 = vld [vmem:[#allocation17 + $0x174] sm:$0xf]
    %v5475 = vld [vmem:[#allocation17 + $0x178] sm:$0xf]
    %v5476 = vld [vmem:[#allocation17 + $0x17c] sm:$0xf]
    %v5477 = vld [vmem:[#allocation17 + $0x180] sm:$0xf]
    %v5478 = vld [vmem:[#allocation17 + $0x184] sm:$0xf]
    %v5479 = vld [vmem:[#allocation17 + $0x188] sm:$0xf]
    %v5480 = vld [vmem:[#allocation17 + $0x18c] sm:$0xf]
    %v5481 = vld [vmem:[#allocation17 + $0x190] sm:$0xf]
    %v5482 = vld [vmem:[#allocation17 + $0x194] sm:$0xf]
    %v5483 = vld [vmem:[#allocation17 + $0x198] sm:$0xf]
    %v5484 = vld [vmem:[#allocation17 + $0x19c] sm:$0xf]
    %v5485 = vld [vmem:[#allocation17 + $0x1a0] sm:$0xf]
    %v5486 = vld [vmem:[#allocation17 + $0x1a4] sm:$0xf]
    %v5487 = vld [vmem:[#allocation17 + $0x1a8] sm:$0xf]
    %v5488 = vld [vmem:[#allocation17 + $0x1ac] sm:$0xf]
    %v5489 = vld [vmem:[#allocation17 + $0x1b0] sm:$0xf]
    %v5490 = vld [vmem:[#allocation17 + $0x1b4] sm:$0xf]
    %v5491 = vld [vmem:[#allocation17 + $0x1b8] sm:$0xf]
    %v5492 = vld [vmem:[#allocation17 + $0x1bc] sm:$0xf]
    %v5493 = vld [vmem:[#allocation17 + $0x1c0] sm:$0xf]
    %v5494 = vld [vmem:[#allocation17 + $0x1c4] sm:$0xf]
    %v5495 = vld [vmem:[#allocation17 + $0x1c8] sm:$0xf]
    %v5496 = vld [vmem:[#allocation17 + $0x1cc] sm:$0xf]
    %v5497 = vld [vmem:[#allocation17 + $0x1d0] sm:$0xf]
    %v5498 = vld [vmem:[#allocation17 + $0x1d4] sm:$0xf]
    %v5499 = vld [vmem:[#allocation17 + $0x1d8] sm:$0xf]
    %v5500 = vld [vmem:[#allocation17 + $0x1dc] sm:$0xf]
    %v5501 = vld [vmem:[#allocation17 + $0x1e0] sm:$0xf]
    %v5502 = vld [vmem:[#allocation17 + $0x1e4] sm:$0xf]
    %v5503 = vld [vmem:[#allocation17 + $0x1e8] sm:$0xf]
    %v5504 = vld [vmem:[#allocation17 + $0x1ec] sm:$0xf]
    %v5505 = vld [vmem:[#allocation17 + $0x1f0] sm:$0xf]
    %v5506 = vld [vmem:[#allocation17 + $0x1f4] sm:$0xf]
    %v5507 = vld [vmem:[#allocation17 + $0x1f8] sm:$0xf]
    %v5508 = vld [vmem:[#allocation17 + $0x1fc] sm:$0xf]
    %v5509 = vpack.c.bf16 %v5369, %v5369
    %v5510 = vpack.c.bf16 %v5370, %v5370
    %v5511 = vpack.c.bf16 %v5371, %v5371
    %v5512 = vpack.c.bf16 %v5372, %v5372
    %v5513 = vld [vmem:[#allocation19] sm:$0xf]
    %v5514 = vld [vmem:[#allocation19 + $0x4] sm:$0xf]
    %v5515 = vld [vmem:[#allocation19 + $0x8] sm:$0xf]
    %v5516 = vld [vmem:[#allocation19 + $0xc] sm:$0xf]
    %v5517 = vld [vmem:[#allocation19 + $0x10] sm:$0xf]
    %v5518 = vld [vmem:[#allocation19 + $0x14] sm:$0xf]
    %v5519 = vld [vmem:[#allocation19 + $0x18] sm:$0xf]
    %v5520 = vld [vmem:[#allocation19 + $0x1c] sm:$0xf]
    %v5521 = vld [vmem:[#allocation19 + $0x20] sm:$0xf]
    %v5522 = vld [vmem:[#allocation19 + $0x24] sm:$0xf]
    %v5523 = vld [vmem:[#allocation19 + $0x28] sm:$0xf]
    %v5524 = vld [vmem:[#allocation19 + $0x2c] sm:$0xf]
    %v5525 = vld [vmem:[#allocation19 + $0x30] sm:$0xf]
    %v5526 = vld [vmem:[#allocation19 + $0x34] sm:$0xf]
    %v5527 = vld [vmem:[#allocation19 + $0x38] sm:$0xf]
    %v5528 = vld [vmem:[#allocation19 + $0x3c] sm:$0xf]
    %v5529 = vld [vmem:[#allocation19 + $0x40] sm:$0xf]
    %v5530 = vld [vmem:[#allocation19 + $0x44] sm:$0xf]
    %v5531 = vld [vmem:[#allocation19 + $0x48] sm:$0xf]
    %v5532 = vld [vmem:[#allocation19 + $0x4c] sm:$0xf]
    %v5533 = vld [vmem:[#allocation19 + $0x50] sm:$0xf]
    %v5534 = vld [vmem:[#allocation19 + $0x54] sm:$0xf]
    %v5535 = vld [vmem:[#allocation19 + $0x58] sm:$0xf]
    %v5536 = vld [vmem:[#allocation19 + $0x5c] sm:$0xf]
    %v5537 = vld [vmem:[#allocation19 + $0x60] sm:$0xf]
    %v5538 = vld [vmem:[#allocation19 + $0x64] sm:$0xf]
    %v5539 = vld [vmem:[#allocation19 + $0x68] sm:$0xf]
    %v5540 = vld [vmem:[#allocation19 + $0x6c] sm:$0xf]
    %v5541 = vld [vmem:[#allocation19 + $0x70] sm:$0xf]
    %v5542 = vld [vmem:[#allocation19 + $0x74] sm:$0xf]
    %v5543 = vld [vmem:[#allocation19 + $0x78] sm:$0xf]
    %v5544 = vld [vmem:[#allocation19 + $0x7c] sm:$0xf]
    %v5545 = vld [vmem:[#allocation19 + $0x80] sm:$0xf]
    %v5546 = vld [vmem:[#allocation19 + $0x84] sm:$0xf]
    %v5547 = vld [vmem:[#allocation19 + $0x88] sm:$0xf]
    %v5548 = vld [vmem:[#allocation19 + $0x8c] sm:$0xf]
    %v5549 = vld [vmem:[#allocation19 + $0x90] sm:$0xf]
    %v5550 = vld [vmem:[#allocation19 + $0x94] sm:$0xf]
    %v5551 = vld [vmem:[#allocation19 + $0x98] sm:$0xf]
    %v5552 = vld [vmem:[#allocation19 + $0x9c] sm:$0xf]
    %v5553 = vld [vmem:[#allocation19 + $0xa0] sm:$0xf]
    %v5554 = vld [vmem:[#allocation19 + $0xa4] sm:$0xf]
    %v5555 = vld [vmem:[#allocation19 + $0xa8] sm:$0xf]
    %v5556 = vld [vmem:[#allocation19 + $0xac] sm:$0xf]
    %v5557 = vld [vmem:[#allocation19 + $0xb0] sm:$0xf]
    %v5558 = vld [vmem:[#allocation19 + $0xb4] sm:$0xf]
    %v5559 = vld [vmem:[#allocation19 + $0xb8] sm:$0xf]
    %v5560 = vld [vmem:[#allocation19 + $0xbc] sm:$0xf]
    %v5561 = vld [vmem:[#allocation19 + $0xc0] sm:$0xf]
    %v5562 = vld [vmem:[#allocation19 + $0xc4] sm:$0xf]
    %v5563 = vld [vmem:[#allocation19 + $0xc8] sm:$0xf]
    %v5564 = vld [vmem:[#allocation19 + $0xcc] sm:$0xf]
    %v5565 = vld [vmem:[#allocation19 + $0xd0] sm:$0xf]
    %v5566 = vld [vmem:[#allocation19 + $0xd4] sm:$0xf]
    %v5567 = vld [vmem:[#allocation19 + $0xd8] sm:$0xf]
    %v5568 = vld [vmem:[#allocation19 + $0xdc] sm:$0xf]
    %v5569 = vld [vmem:[#allocation19 + $0xe0] sm:$0xf]
    %v5570 = vld [vmem:[#allocation19 + $0xe4] sm:$0xf]
    %v5571 = vld [vmem:[#allocation19 + $0xe8] sm:$0xf]
    %v5572 = vld [vmem:[#allocation19 + $0xec] sm:$0xf]
    %v5573 = vld [vmem:[#allocation19 + $0xf0] sm:$0xf]
    %v5574 = vld [vmem:[#allocation19 + $0xf4] sm:$0xf]
    %v5575 = vld [vmem:[#allocation19 + $0xf8] sm:$0xf]
    %v5576 = vld [vmem:[#allocation19 + $0xfc] sm:$0xf]
    %v5641 = vunpack.c.l.b16 %v5513
    %v5642 = vunpack.c.l.b16 %v5514
    %v5643 = vunpack.c.l.b16 %v5515
    %v5644 = vunpack.c.l.b16 %v5516
    %v5645 = vunpack.c.l.b16 %v5517
    %v5646 = vunpack.c.l.b16 %v5518
    %v5647 = vunpack.c.l.b16 %v5519
    %v5648 = vunpack.c.l.b16 %v5520
    %v5649 = vunpack.c.l.b16 %v5521
    %v5650 = vunpack.c.l.b16 %v5522
    %v5651 = vunpack.c.l.b16 %v5523
    %v5652 = vunpack.c.l.b16 %v5524
    %v5653 = vunpack.c.l.b16 %v5525
    %v5654 = vunpack.c.l.b16 %v5526
    %v5655 = vunpack.c.l.b16 %v5527
    %v5656 = vunpack.c.l.b16 %v5528
    %v5657 = vunpack.c.l.b16 %v5529
    %v5658 = vunpack.c.l.b16 %v5530
    %v5659 = vunpack.c.l.b16 %v5531
    %v5660 = vunpack.c.l.b16 %v5532
    %v5661 = vunpack.c.l.b16 %v5533
    %v5662 = vunpack.c.l.b16 %v5534
    %v5663 = vunpack.c.l.b16 %v5535
    %v5664 = vunpack.c.l.b16 %v5536
    %v5665 = vunpack.c.l.b16 %v5537
    %v5666 = vunpack.c.l.b16 %v5538
    %v5667 = vunpack.c.l.b16 %v5539
    %v5668 = vunpack.c.l.b16 %v5540
    %v5669 = vunpack.c.l.b16 %v5541
    %v5670 = vunpack.c.l.b16 %v5542
    %v5671 = vunpack.c.l.b16 %v5543
    %v5672 = vunpack.c.l.b16 %v5544
    %v5673 = vunpack.c.l.b16 %v5545
    %v5674 = vunpack.c.l.b16 %v5546
    %v5675 = vunpack.c.l.b16 %v5547
    %v5676 = vunpack.c.l.b16 %v5548
    %v5677 = vunpack.c.l.b16 %v5549
    %v5678 = vunpack.c.l.b16 %v5550
    %v5679 = vunpack.c.l.b16 %v5551
    %v5680 = vunpack.c.l.b16 %v5552
    %v5681 = vunpack.c.l.b16 %v5553
    %v5682 = vunpack.c.l.b16 %v5554
    %v5683 = vunpack.c.l.b16 %v5555
    %v5684 = vunpack.c.l.b16 %v5556
    %v5685 = vunpack.c.l.b16 %v5557
    %v5686 = vunpack.c.l.b16 %v5558
    %v5687 = vunpack.c.l.b16 %v5559
    %v5688 = vunpack.c.l.b16 %v5560
    %v5689 = vunpack.c.l.b16 %v5561
    %v5690 = vunpack.c.l.b16 %v5562
    %v5691 = vunpack.c.l.b16 %v5563
    %v5692 = vunpack.c.l.b16 %v5564
    %v5693 = vunpack.c.l.b16 %v5565
    %v5694 = vunpack.c.l.b16 %v5566
    %v5695 = vunpack.c.l.b16 %v5567
    %v5696 = vunpack.c.l.b16 %v5568
    %v5697 = vunpack.c.l.b16 %v5569
    %v5698 = vunpack.c.l.b16 %v5570
    %v5699 = vunpack.c.l.b16 %v5571
    %v5700 = vunpack.c.l.b16 %v5572
    %v5701 = vunpack.c.l.b16 %v5573
    %v5702 = vunpack.c.l.b16 %v5574
    %v5703 = vunpack.c.l.b16 %v5575
    %v5704 = vunpack.c.l.b16 %v5576
    %v5705 = vpack.c.b16 %v5642, %v5641
    %v5706 = vpack.c.b16 %v5644, %v5643
    %v5707 = vpack.c.b16 %v5646, %v5645
    %v5708 = vpack.c.b16 %v5648, %v5647
    %v5709 = vpack.c.b16 %v5650, %v5649
    %v5710 = vpack.c.b16 %v5652, %v5651
    %v5711 = vpack.c.b16 %v5654, %v5653
    %v5712 = vpack.c.b16 %v5656, %v5655
    %v5713 = vpack.c.b16 %v5658, %v5657
    %v5714 = vpack.c.b16 %v5660, %v5659
    %v5715 = vpack.c.b16 %v5662, %v5661
    %v5716 = vpack.c.b16 %v5664, %v5663
    %v5717 = vpack.c.b16 %v5666, %v5665
    %v5718 = vpack.c.b16 %v5668, %v5667
    %v5719 = vpack.c.b16 %v5670, %v5669
    %v5720 = vpack.c.b16 %v5672, %v5671
    %v5721 = vpack.c.b16 %v5674, %v5673
    %v5722 = vpack.c.b16 %v5676, %v5675
    %v5723 = vpack.c.b16 %v5678, %v5677
    %v5724 = vpack.c.b16 %v5680, %v5679
    %v5725 = vpack.c.b16 %v5682, %v5681
    %v5726 = vpack.c.b16 %v5684, %v5683
    %v5727 = vpack.c.b16 %v5686, %v5685
    %v5728 = vpack.c.b16 %v5688, %v5687
    %v5729 = vpack.c.b16 %v5690, %v5689
    %v5730 = vpack.c.b16 %v5692, %v5691
    %v5731 = vpack.c.b16 %v5694, %v5693
    %v5732 = vpack.c.b16 %v5696, %v5695
    %v5733 = vpack.c.b16 %v5698, %v5697
    %v5734 = vpack.c.b16 %v5700, %v5699
    %v5735 = vpack.c.b16 %v5702, %v5701
    %v5736 = vpack.c.b16 %v5704, %v5703
    %5769 = vmatprep.subr.bf16.mxu0 0
    %5770 = vmatpush1.bf16.msra.mxu0 %v5705
    %5771 = vmatprep.subr.bf16.mxu0 0
    %5772 = vmatpush1.bf16.msra.mxu0 %v5706
    %5773 = vmatprep.subr.bf16.mxu0 0
    %5774 = vmatpush1.bf16.msra.mxu0 %v5707
    %5775 = vmatprep.subr.bf16.mxu0 0
    %5776 = vmatpush1.bf16.msra.mxu0 %v5708
    %5777 = vmatprep.subr.bf16.mxu0 0
    %5778 = vmatpush1.bf16.msra.mxu0 %v5709
    %5779 = vmatprep.subr.bf16.mxu0 0
    %5780 = vmatpush1.bf16.msra.mxu0 %v5710
    %5781 = vmatprep.subr.bf16.mxu0 0
    %5782 = vmatpush1.bf16.msra.mxu0 %v5711
    %5783 = vmatprep.subr.bf16.mxu0 0
    %5784 = vmatpush1.bf16.msra.mxu0 %v5712
    %5785 = vmatprep.subr.bf16.mxu0 0
    %5786 = vmatpush1.bf16.msra.mxu0 %v5713
    %5787 = vmatprep.subr.bf16.mxu0 0
    %5788 = vmatpush1.bf16.msra.mxu0 %v5714
    %5789 = vmatprep.subr.bf16.mxu0 0
    %5790 = vmatpush1.bf16.msra.mxu0 %v5715
    %5791 = vmatprep.subr.bf16.mxu0 0
    %5792 = vmatpush1.bf16.msra.mxu0 %v5716
    %5793 = vmatprep.subr.bf16.mxu0 0
    %5794 = vmatpush1.bf16.msra.mxu0 %v5717
    %5795 = vmatprep.subr.bf16.mxu0 0
    %5796 = vmatpush1.bf16.msra.mxu0 %v5718
    %5797 = vmatprep.subr.bf16.mxu0 0
    %5798 = vmatpush1.bf16.msra.mxu0 %v5719
    %5799 = vmatprep.subr.bf16.mxu0 0
    %5800 = vmatpush1.bf16.msra.mxu0 %v5720
    %5801 = vmatprep.mubr.bf16.mxu0 %v5510
    %5802 = vmatmul.mubr.bf16.gmra.mrb[0].mxu0 %v5509
    %v5803 = vpop.f32.mrb[0].mxu0
    %v5804 = vadd.f32 0.0, %v5803
    %v5805 = vpop.f32.mrb[0].mxu0
    %v5806 = vpop.f32.mrb[0].mxu0
    %v5807 = vpop.f32.mrb[0].mxu0
    %5808 = vdwg.mxu0
    %5809 = vmatprep.subr.bf16.mxu0 0
    %5810 = vmatpush1.bf16.msra.mxu0 %v5721
    %5811 = vmatprep.subr.bf16.mxu0 0
    %5812 = vmatpush1.bf16.msra.mxu0 %v5722
    %5813 = vmatprep.subr.bf16.mxu0 0
    %5814 = vmatpush1.bf16.msra.mxu0 %v5723
    %5815 = vmatprep.subr.bf16.mxu0 0
    %5816 = vmatpush1.bf16.msra.mxu0 %v5724
    %5817 = vmatprep.subr.bf16.mxu0 0
    %5818 = vmatpush1.bf16.msra.mxu0 %v5725
    %5819 = vmatprep.subr.bf16.mxu0 0
    %5820 = vmatpush1.bf16.msra.mxu0 %v5726
    %5821 = vmatprep.subr.bf16.mxu0 0
    %5822 = vmatpush1.bf16.msra.mxu0 %v5727
    %5823 = vmatprep.subr.bf16.mxu0 0
    %5824 = vmatpush1.bf16.msra.mxu0 %v5728
    %5825 = vmatprep.subr.bf16.mxu0 0
    %5826 = vmatpush1.bf16.msra.mxu0 %v5729
    %5827 = vmatprep.subr.bf16.mxu0 0
    %5828 = vmatpush1.bf16.msra.mxu0 %v5730
    %5829 = vmatprep.subr.bf16.mxu0 0
    %5830 = vmatpush1.bf16.msra.mxu0 %v5731
    %5831 = vmatprep.subr.bf16.mxu0 0
    %5832 = vmatpush1.bf16.msra.mxu0 %v5732
    %5833 = vmatprep.subr.bf16.mxu0 0
    %5834 = vmatpush1.bf16.msra.mxu0 %v5733
    %5835 = vmatprep.subr.bf16.mxu0 0
    %5836 = vmatpush1.bf16.msra.mxu0 %v5734
    %5837 = vmatprep.subr.bf16.mxu0 0
    %5838 = vmatpush1.bf16.msra.mxu0 %v5735
    %5839 = vmatprep.subr.bf16.mxu0 0
    %5840 = vmatpush1.bf16.msra.mxu0 %v5736
    %5841 = vmatprep.mubr.bf16.mxu0 %v5512
    %5842 = vmatmul.mubr.bf16.gmra.mrb[0].mxu0 %v5511
    %v5843 = vpop.f32.mrb[0].mxu0
    %v5844 = vadd.f32 %v5804, %v5843
    %v5845 = vpop.f32.mrb[0].mxu0
    %v5846 = vpop.f32.mrb[0].mxu0
    %v5847 = vpop.f32.mrb[0].mxu0
    %5848 = vdwg.mxu0
    %v5977 = vunpack.c.l.b16 %v5381
    %v5978 = vunpack.c.l.b16 %v5382
    %v5979 = vunpack.c.l.b16 %v5383
    %v5980 = vunpack.c.l.b16 %v5384
    %v5981 = vunpack.c.l.b16 %v5385
    %v5982 = vunpack.c.l.b16 %v5386
    %v5983 = vunpack.c.l.b16 %v5387
    %v5984 = vunpack.c.l.b16 %v5388
    %v5985 = vunpack.c.l.b16 %v5389
    %v5986 = vunpack.c.l.b16 %v5390
    %v5987 = vunpack.c.l.b16 %v5391
    %v5988 = vunpack.c.l.b16 %v5392
    %v5989 = vunpack.c.l.b16 %v5393
    %v5990 = vunpack.c.l.b16 %v5394
    %v5991 = vunpack.c.l.b16 %v5395
    %v5992 = vunpack.c.l.b16 %v5396
    %v5993 = vunpack.c.l.b16 %v5397
    %v5994 = vunpack.c.l.b16 %v5398
    %v5995 = vunpack.c.l.b16 %v5399
    %v5996 = vunpack.c.l.b16 %v5400
    %v5997 = vunpack.c.l.b16 %v5401
    %v5998 = vunpack.c.l.b16 %v5402
    %v5999 = vunpack.c.l.b16 %v5403
    %v6000 = vunpack.c.l.b16 %v5404
    %v6001 = vunpack.c.l.b16 %v5405
    %v6002 = vunpack.c.l.b16 %v5406
    %v6003 = vunpack.c.l.b16 %v5407
    %v6004 = vunpack.c.l.b16 %v5408
    %v6005 = vunpack.c.l.b16 %v5409
    %v6006 = vunpack.c.l.b16 %v5410
    %v6007 = vunpack.c.l.b16 %v5411
    %v6008 = vunpack.c.l.b16 %v5412
    %v6009 = vunpack.c.l.b16 %v5413
    %v6010 = vunpack.c.l.b16 %v5414
    %v6011 = vunpack.c.l.b16 %v5415
    %v6012 = vunpack.c.l.b16 %v5416
    %v6013 = vunpack.c.l.b16 %v5417
    %v6014 = vunpack.c.l.b16 %v5418
    %v6015 = vunpack.c.l.b16 %v5419
    %v6016 = vunpack.c.l.b16 %v5420
    %v6017 = vunpack.c.l.b16 %v5421
    %v6018 = vunpack.c.l.b16 %v5422
    %v6019 = vunpack.c.l.b16 %v5423
    %v6020 = vunpack.c.l.b16 %v5424
    %v6021 = vunpack.c.l.b16 %v5425
    %v6022 = vunpack.c.l.b16 %v5426
    %v6023 = vunpack.c.l.b16 %v5427
    %v6024 = vunpack.c.l.b16 %v5428
    %v6025 = vunpack.c.l.b16 %v5429
    %v6026 = vunpack.c.l.b16 %v5430
    %v6027 = vunpack.c.l.b16 %v5431
    %v6028 = vunpack.c.l.b16 %v5432
    %v6029 = vunpack.c.l.b16 %v5433
    %v6030 = vunpack.c.l.b16 %v5434
    %v6031 = vunpack.c.l.b16 %v5435
    %v6032 = vunpack.c.l.b16 %v5436
    %v6033 = vunpack.c.l.b16 %v5437
    %v6034 = vunpack.c.l.b16 %v5438
    %v6035 = vunpack.c.l.b16 %v5439
    %v6036 = vunpack.c.l.b16 %v5440
    %v6037 = vunpack.c.l.b16 %v5441
    %v6038 = vunpack.c.l.b16 %v5442
    %v6039 = vunpack.c.l.b16 %v5443
    %v6040 = vunpack.c.l.b16 %v5444
    %v6041 = vunpack.c.l.b16 %v5445
    %v6042 = vunpack.c.l.b16 %v5446
    %v6043 = vunpack.c.l.b16 %v5447
    %v6044 = vunpack.c.l.b16 %v5448
    %v6045 = vunpack.c.l.b16 %v5449
    %v6046 = vunpack.c.l.b16 %v5450
    %v6047 = vunpack.c.l.b16 %v5451
    %v6048 = vunpack.c.l.b16 %v5452
    %v6049 = vunpack.c.l.b16 %v5453
    %v6050 = vunpack.c.l.b16 %v5454
    %v6051 = vunpack.c.l.b16 %v5455
    %v6052 = vunpack.c.l.b16 %v5456
    %v6053 = vunpack.c.l.b16 %v5457
    %v6054 = vunpack.c.l.b16 %v5458
    %v6055 = vunpack.c.l.b16 %v5459
    %v6056 = vunpack.c.l.b16 %v5460
    %v6057 = vunpack.c.l.b16 %v5461
    %v6058 = vunpack.c.l.b16 %v5462
    %v6059 = vunpack.c.l.b16 %v5463
    %v6060 = vunpack.c.l.b16 %v5464
    %v6061 = vunpack.c.l.b16 %v5465
    %v6062 = vunpack.c.l.b16 %v5466
    %v6063 = vunpack.c.l.b16 %v5467
    %v6064 = vunpack.c.l.b16 %v5468
    %v6065 = vunpack.c.l.b16 %v5469
    %v6066 = vunpack.c.l.b16 %v5470
    %v6067 = vunpack.c.l.b16 %v5471
    %v6068 = vunpack.c.l.b16 %v5472
    %v6069 = vunpack.c.l.b16 %v5473
    %v6070 = vunpack.c.l.b16 %v5474
    %v6071 = vunpack.c.l.b16 %v5475
    %v6072 = vunpack.c.l.b16 %v5476
    %v6073 = vunpack.c.l.b16 %v5477
    %v6074 = vunpack.c.l.b16 %v5478
    %v6075 = vunpack.c.l.b16 %v5479
    %v6076 = vunpack.c.l.b16 %v5480
    %v6077 = vunpack.c.l.b16 %v5481
    %v6078 = vunpack.c.l.b16 %v5482
    %v6079 = vunpack.c.l.b16 %v5483
    %v6080 = vunpack.c.l.b16 %v5484
    %v6081 = vunpack.c.l.b16 %v5485
    %v6082 = vunpack.c.l.b16 %v5486
    %v6083 = vunpack.c.l.b16 %v5487
    %v6084 = vunpack.c.l.b16 %v5488
    %v6085 = vunpack.c.l.b16 %v5489
    %v6086 = vunpack.c.l.b16 %v5490
    %v6087 = vunpack.c.l.b16 %v5491
    %v6088 = vunpack.c.l.b16 %v5492
    %v6089 = vunpack.c.l.b16 %v5493
    %v6090 = vunpack.c.l.b16 %v5494
    %v6091 = vunpack.c.l.b16 %v5495
    %v6092 = vunpack.c.l.b16 %v5496
    %v6093 = vunpack.c.l.b16 %v5497
    %v6094 = vunpack.c.l.b16 %v5498
    %v6095 = vunpack.c.l.b16 %v5499
    %v6096 = vunpack.c.l.b16 %v5500
    %v6097 = vunpack.c.l.b16 %v5501
    %v6098 = vunpack.c.l.b16 %v5502
    %v6099 = vunpack.c.l.b16 %v5503
    %v6100 = vunpack.c.l.b16 %v5504
    %v6101 = vunpack.c.l.b16 %v5505
    %v6102 = vunpack.c.l.b16 %v5506
    %v6103 = vunpack.c.l.b16 %v5507
    %v6104 = vunpack.c.l.b16 %v5508
    %v6105 = vpack.c.b16 %v5978, %v5977
    %v6106 = vpack.c.b16 %v5980, %v5979
    %v6107 = vpack.c.b16 %v5982, %v5981
    %v6108 = vpack.c.b16 %v5984, %v5983
    %v6109 = vpack.c.b16 %v5986, %v5985
    %v6110 = vpack.c.b16 %v5988, %v5987
    %v6111 = vpack.c.b16 %v5990, %v5989
    %v6112 = vpack.c.b16 %v5992, %v5991
    %v6113 = vpack.c.b16 %v5994, %v5993
    %v6114 = vpack.c.b16 %v5996, %v5995
    %v6115 = vpack.c.b16 %v5998, %v5997
    %v6116 = vpack.c.b16 %v6000, %v5999
    %v6117 = vpack.c.b16 %v6002, %v6001
    %v6118 = vpack.c.b16 %v6004, %v6003
    %v6119 = vpack.c.b16 %v6006, %v6005
    %v6120 = vpack.c.b16 %v6008, %v6007
    %v6121 = vpack.c.b16 %v6010, %v6009
    %v6122 = vpack.c.b16 %v6012, %v6011
    %v6123 = vpack.c.b16 %v6014, %v6013
    %v6124 = vpack.c.b16 %v6016, %v6015
    %v6125 = vpack.c.b16 %v6018, %v6017
    %v6126 = vpack.c.b16 %v6020, %v6019
    %v6127 = vpack.c.b16 %v6022, %v6021
    %v6128 = vpack.c.b16 %v6024, %v6023
    %v6129 = vpack.c.b16 %v6026, %v6025
    %v6130 = vpack.c.b16 %v6028, %v6027
    %v6131 = vpack.c.b16 %v6030, %v6029
    %v6132 = vpack.c.b16 %v6032, %v6031
    %v6133 = vpack.c.b16 %v6034, %v6033
    %v6134 = vpack.c.b16 %v6036, %v6035
    %v6135 = vpack.c.b16 %v6038, %v6037
    %v6136 = vpack.c.b16 %v6040, %v6039
    %v6137 = vpack.c.b16 %v6042, %v6041
    %v6138 = vpack.c.b16 %v6044, %v6043
    %v6139 = vpack.c.b16 %v6046, %v6045
    %v6140 = vpack.c.b16 %v6048, %v6047
    %v6141 = vpack.c.b16 %v6050, %v6049
    %v6142 = vpack.c.b16 %v6052, %v6051
    %v6143 = vpack.c.b16 %v6054, %v6053
    %v6144 = vpack.c.b16 %v6056, %v6055
    %v6145 = vpack.c.b16 %v6058, %v6057
    %v6146 = vpack.c.b16 %v6060, %v6059
    %v6147 = vpack.c.b16 %v6062, %v6061
    %v6148 = vpack.c.b16 %v6064, %v6063
    %v6149 = vpack.c.b16 %v6066, %v6065
    %v6150 = vpack.c.b16 %v6068, %v6067
    %v6151 = vpack.c.b16 %v6070, %v6069
    %v6152 = vpack.c.b16 %v6072, %v6071
    %v6153 = vpack.c.b16 %v6074, %v6073
    %v6154 = vpack.c.b16 %v6076, %v6075
    %v6155 = vpack.c.b16 %v6078, %v6077
    %v6156 = vpack.c.b16 %v6080, %v6079
    %v6157 = vpack.c.b16 %v6082, %v6081
    %v6158 = vpack.c.b16 %v6084, %v6083
    %v6159 = vpack.c.b16 %v6086, %v6085
    %v6160 = vpack.c.b16 %v6088, %v6087
    %v6161 = vpack.c.b16 %v6090, %v6089
    %v6162 = vpack.c.b16 %v6092, %v6091
    %v6163 = vpack.c.b16 %v6094, %v6093
    %v6164 = vpack.c.b16 %v6096, %v6095
    %v6165 = vpack.c.b16 %v6098, %v6097
    %v6166 = vpack.c.b16 %v6100, %v6099
    %v6167 = vpack.c.b16 %v6102, %v6101
    %v6168 = vpack.c.b16 %v6104, %v6103
    %6233 = vmatprep.subr.bf16.mxu0 0
    %6234 = vmatpush1.bf16.msra.mxu0 %v6105
    %6235 = vmatprep.subr.bf16.mxu0 0
    %6236 = vmatpush1.bf16.msra.mxu0 %v6106
    %6237 = vmatprep.subr.bf16.mxu0 0
    %6238 = vmatpush1.bf16.msra.mxu0 %v6107
    %6239 = vmatprep.subr.bf16.mxu0 0
    %6240 = vmatpush1.bf16.msra.mxu0 %v6108
    %6241 = vmatprep.subr.bf16.mxu0 0
    %6242 = vmatpush1.bf16.msra.mxu0 %v6109
    %6243 = vmatprep.subr.bf16.mxu0 0
    %6244 = vmatpush1.bf16.msra.mxu0 %v6110
    %6245 = vmatprep.subr.bf16.mxu0 0
    %6246 = vmatpush1.bf16.msra.mxu0 %v6111
    %6247 = vmatprep.subr.bf16.mxu0 0
    %6248 = vmatpush1.bf16.msra.mxu0 %v6112
    %6249 = vmatprep.subr.bf16.mxu0 0
    %6250 = vmatpush1.bf16.msra.mxu0 %v6113
    %6251 = vmatprep.subr.bf16.mxu0 0
    %6252 = vmatpush1.bf16.msra.mxu0 %v6114
    %6253 = vmatprep.subr.bf16.mxu0 0
    %6254 = vmatpush1.bf16.msra.mxu0 %v6115
    %6255 = vmatprep.subr.bf16.mxu0 0
    %6256 = vmatpush1.bf16.msra.mxu0 %v6116
    %6257 = vmatprep.subr.bf16.mxu0 0
    %6258 = vmatpush1.bf16.msra.mxu0 %v6117
    %6259 = vmatprep.subr.bf16.mxu0 0
    %6260 = vmatpush1.bf16.msra.mxu0 %v6118
    %6261 = vmatprep.subr.bf16.mxu0 0
    %6262 = vmatpush1.bf16.msra.mxu0 %v6119
    %6263 = vmatprep.subr.bf16.mxu0 0
    %6264 = vmatpush1.bf16.msra.mxu0 %v6120
    %6265 = vmatprep.mubr.bf16.mxu0 %v5374
    %6266 = vmatmul.mubr.bf16.gmra.mrb[0].mxu0 %v5373
    %v6267 = vpop.f32.mrb[0].mxu0
    %v6268 = vadd.f32 %v5844, %v6267
    %v6269 = vpop.f32.mrb[0].mxu0
    %v6270 = vpop.f32.mrb[0].mxu0
    %v6271 = vpop.f32.mrb[0].mxu0
    %6272 = vdwg.mxu0
    %6273 = vmatprep.subr.bf16.mxu0 0
    %6274 = vmatpush1.bf16.msra.mxu0 %v6121
    %6275 = vmatprep.subr.bf16.mxu0 0
    %6276 = vmatpush1.bf16.msra.mxu0 %v6122
    %6277 = vmatprep.subr.bf16.mxu0 0
    %6278 = vmatpush1.bf16.msra.mxu0 %v6123
    %6279 = vmatprep.subr.bf16.mxu0 0
    %6280 = vmatpush1.bf16.msra.mxu0 %v6124
    %6281 = vmatprep.subr.bf16.mxu0 0
    %6282 = vmatpush1.bf16.msra.mxu0 %v6125
    %6283 = vmatprep.subr.bf16.mxu0 0
    %6284 = vmatpush1.bf16.msra.mxu0 %v6126
    %6285 = vmatprep.subr.bf16.mxu0 0
    %6286 = vmatpush1.bf16.msra.mxu0 %v6127
    %6287 = vmatprep.subr.bf16.mxu0 0
    %6288 = vmatpush1.bf16.msra.mxu0 %v6128
    %6289 = vmatprep.subr.bf16.mxu0 0
    %6290 = vmatpush1.bf16.msra.mxu0 %v6129
    %6291 = vmatprep.subr.bf16.mxu0 0
    %6292 = vmatpush1.bf16.msra.mxu0 %v6130
    %6293 = vmatprep.subr.bf16.mxu0 0
    %6294 = vmatpush1.bf16.msra.mxu0 %v6131
    %6295 = vmatprep.subr.bf16.mxu0 0
    %6296 = vmatpush1.bf16.msra.mxu0 %v6132
    %6297 = vmatprep.subr.bf16.mxu0 0
    %6298 = vmatpush1.bf16.msra.mxu0 %v6133
    %6299 = vmatprep.subr.bf16.mxu0 0
    %6300 = vmatpush1.bf16.msra.mxu0 %v6134
    %6301 = vmatprep.subr.bf16.mxu0 0
    %6302 = vmatpush1.bf16.msra.mxu0 %v6135
    %6303 = vmatprep.subr.bf16.mxu0 0
    %6304 = vmatpush1.bf16.msra.mxu0 %v6136
    %6305 = vmatprep.mubr.bf16.mxu0 %v5376
    %6306 = vmatmul.mubr.bf16.gmra.mrb[0].mxu0 %v5375
    %v6307 = vpop.f32.mrb[0].mxu0
    %v6308 = vadd.f32 %v6268, %v6307
    %v6309 = vpop.f32.mrb[0].mxu0
    %v6310 = vpop.f32.mrb[0].mxu0
    %v6311 = vpop.f32.mrb[0].mxu0
    %6312 = vdwg.mxu0
    %6313 = vmatprep.subr.bf16.mxu0 0
    %6314 = vmatpush1.bf16.msra.mxu0 %v6137
    %6315 = vmatprep.subr.bf16.mxu0 0
    %6316 = vmatpush1.bf16.msra.mxu0 %v6138
    %6317 = vmatprep.subr.bf16.mxu0 0
    %6318 = vmatpush1.bf16.msra.mxu0 %v6139
    %6319 = vmatprep.subr.bf16.mxu0 0
    %6320 = vmatpush1.bf16.msra.mxu0 %v6140
    %6321 = vmatprep.subr.bf16.mxu0 0
    %6322 = vmatpush1.bf16.msra.mxu0 %v6141
    %6323 = vmatprep.subr.bf16.mxu0 0
    %6324 = vmatpush1.bf16.msra.mxu0 %v6142
    %6325 = vmatprep.subr.bf16.mxu0 0
    %6326 = vmatpush1.bf16.msra.mxu0 %v6143
    %6327 = vmatprep.subr.bf16.mxu0 0
    %6328 = vmatpush1.bf16.msra.mxu0 %v6144
    %6329 = vmatprep.subr.bf16.mxu0 0
    %6330 = vmatpush1.bf16.msra.mxu0 %v6145
    %6331 = vmatprep.subr.bf16.mxu0 0
    %6332 = vmatpush1.bf16.msra.mxu0 %v6146
    %6333 = vmatprep.subr.bf16.mxu0 0
    %6334 = vmatpush1.bf16.msra.mxu0 %v6147
    %6335 = vmatprep.subr.bf16.mxu0 0
    %6336 = vmatpush1.bf16.msra.mxu0 %v6148
    %6337 = vmatprep.subr.bf16.mxu0 0
    %6338 = vmatpush1.bf16.msra.mxu0 %v6149
    %6339 = vmatprep.subr.bf16.mxu0 0
    %6340 = vmatpush1.bf16.msra.mxu0 %v6150
    %6341 = vmatprep.subr.bf16.mxu0 0
    %6342 = vmatpush1.bf16.msra.mxu0 %v6151
    %6343 = vmatprep.subr.bf16.mxu0 0
    %6344 = vmatpush1.bf16.msra.mxu0 %v6152
    %6345 = vmatprep.mubr.bf16.mxu0 %v5378
    %6346 = vmatmul.mubr.bf16.gmra.mrb[0].mxu0 %v5377
    %v6347 = vpop.f32.mrb[0].mxu0
    %v6348 = vadd.f32 %v6308, %v6347
    %v6349 = vpop.f32.mrb[0].mxu0
    %v6350 = vpop.f32.mrb[0].mxu0
    %v6351 = vpop.f32.mrb[0].mxu0
    %6352 = vdwg.mxu0
    %6353 = vmatprep.subr.bf16.mxu0 0
    %6354 = vmatpush1.bf16.msra.mxu0 %v6153
    %6355 = vmatprep.subr.bf16.mxu0 0
    %6356 = vmatpush1.bf16.msra.mxu0 %v6154
    %6357 = vmatprep.subr.bf16.mxu0 0
    %6358 = vmatpush1.bf16.msra.mxu0 %v6155
    %6359 = vmatprep.subr.bf16.mxu0 0
    %6360 = vmatpush1.bf16.msra.mxu0 %v6156
    %6361 = vmatprep.subr.bf16.mxu0 0
    %6362 = vmatpush1.bf16.msra.mxu0 %v6157
    %6363 = vmatprep.subr.bf16.mxu0 0
    %6364 = vmatpush1.bf16.msra.mxu0 %v6158
    %6365 = vmatprep.subr.bf16.mxu0 0
    %6366 = vmatpush1.bf16.msra.mxu0 %v6159
    %6367 = vmatprep.subr.bf16.mxu0 0
    %6368 = vmatpush1.bf16.msra.mxu0 %v6160
    %6369 = vmatprep.subr.bf16.mxu0 0
    %6370 = vmatpush1.bf16.msra.mxu0 %v6161
    %6371 = vmatprep.subr.bf16.mxu0 0
    %6372 = vmatpush1.bf16.msra.mxu0 %v6162
    %6373 = vmatprep.subr.bf16.mxu0 0
    %6374 = vmatpush1.bf16.msra.mxu0 %v6163
    %6375 = vmatprep.subr.bf16.mxu0 0
    %6376 = vmatpush1.bf16.msra.mxu0 %v6164
    %6377 = vmatprep.subr.bf16.mxu0 0
    %6378 = vmatpush1.bf16.msra.mxu0 %v6165
    %6379 = vmatprep.subr.bf16.mxu0 0
    %6380 = vmatpush1.bf16.msra.mxu0 %v6166
    %6381 = vmatprep.subr.bf16.mxu0 0
    %6382 = vmatpush1.bf16.msra.mxu0 %v6167
    %6383 = vmatprep.subr.bf16.mxu0 0
    %6384 = vmatpush1.bf16.msra.mxu0 %v6168
    %6385 = vmatprep.mubr.bf16.mxu0 %v5380
    %6386 = vmatmul.mubr.bf16.gmra.mrb[0].mxu0 %v5379
    %v6387 = vpop.f32.mrb[0].mxu0
    %v6388 = vadd.f32 %v6348, %v6387
    %v6389 = vpop.f32.mrb[0].mxu0
    %v6390 = vpop.f32.mrb[0].mxu0
    %v6391 = vpop.f32.mrb[0].mxu0
    %6392 = vdwg.mxu0
    %v6393 = vld [vmem:[#allocation20] sm:$0x1]
    %v6395 = vlaneseq
    %v6396 = vshrl.u32 %v6395, 7
    %v6397 = vsub.s32 0, %v6396
    %v6398 = vrot.slane %v6393, %v6397
    %v6400 = vadd.f32 %v6388, %v6398
    %6401 = vst [vmem:[#allocation22] sm:$0x3] %v6400
    // Predicated region
    $region114: #{classifier_forward.1} parent=1 // pred_check
      _
    $region115: #{classifier_forward.1} parent=1 // pred_check_branch
      %6403 = sbr.rel (0) target = $region117
    $region116: #{classifier_forward.1} parent=1 // pred_region
      %s6405 = ssub.s32 32, 32
      %6406 = vsyncadd [#allocation4], %s6405
      %s6408 = sshll.u32 [#allocation22], 4
      %s6409 = int_to_ptr.vmem [resolvable:$true] %s6408
      %6411 = dma.vmem_to_hbm [thread:$0]  %s6409, 32, %s16, [#allocation4]
    $region117: #{classifier_forward.1} parent=1 // pred_fallthru
      _
    // Predicated region
    $region118: #{classifier_forward.1} parent=1 // pred_check
      _
    $region119: #{classifier_forward.1} parent=1 // pred_check_branch
      %6413 = sbr.rel (0) target = $region121
    $region120: #{classifier_forward.1} parent=1 // pred_region
      %6414 = dma.done [#allocation4], 32
    $region121: #{classifier_forward.1} parent=1 // pred_fallthru
      _
    %6415 = vsyncpa [#allocation3], 1
    %6416 = vsyncpa [#allocation6], 1
    %6417 = vsyncpa [#allocation9], 1
    %6418 = vsyncpa [#allocation12], 1
    %6419 = vsyncpa [#allocation15], 1
    %6420 = vsyncpa [#allocation18], 1
    %6421 = vsyncpa [#allocation21], 1
    %6422 = vsyncpa [#allocation4], 1

</llo_original>
